<compile_context>
chip_gen: v7x
topology: tpu7x:2x2x1
jax: 0.10.0
libtpu: 0.0.40
codegen_flags: <defaults>
</compile_context>

<pallas_src>
import functools

import jax
import jax.numpy as jnp
from jax.experimental import pallas as pl
from jax.experimental.pallas import tpu as pltpu

PATCH = 14
IMAGENET_MEAN = jnp.array([0.485, 0.456, 0.406], dtype=jnp.float32)
IMAGENET_STD = jnp.array([0.229, 0.224, 0.225], dtype=jnp.float32)


# ----------------------------- in-kernel helpers -----------------------------

def _ln_rows(x, g, b, eps):
    # LayerNorm over the last dim, f32 statistics (matches torch.nn.LayerNorm, biased var)
    mean = jnp.mean(x, axis=-1, keepdims=True)
    var = jnp.mean(jnp.square(x - mean), axis=-1, keepdims=True)
    return (x - mean) * jax.lax.rsqrt(var + eps) * g + b


# ----------------------------- Pallas kernels -----------------------------

def _patch_embed_kernel(x_ref, w_ref, b_ref, o_ref):
    # single-step matmul + bias (whole operand set fits in VMEM; no accumulator needed)
    o_ref[...] = (jnp.dot(x_ref[...], w_ref[...], preferred_element_type=jnp.float32)
                  + b_ref[...]).astype(o_ref.dtype)


def _vit_stack_kernel(x_ref,
                      ln1g_ref, ln1b_ref,
                      qkvw_ref, qkvb_ref,
                      projw_ref, projb_ref,
                      ls1_ref,
                      ln2g_ref, ln2b_ref,
                      fc1w_ref, fc1b_ref,
                      fc2w_ref, fc2b_ref,
                      ls2_ref,
                      normw_ref, normb_ref,
                      o_ref,
                      tok_ref,
                      *, num_heads, eps, n_real):
    """Runs ViT block `l = program_id(1)` for batch element `b = program_id(0)`.

    Tokens stay resident in the tok_ref VMEM scratch across the depth axis; the final
    LayerNorm is applied in the epilogue of the last depth step.
    """
    l = pl.program_id(1)

    @pl.when(l == 0)
    def _():
        tok_ref[...] = x_ref[0]

    x = tok_ref[...]                                   # (N_pad, D) f32
    N_pad, D = x.shape
    d = D // num_heads
    scale = float(d) ** -0.5

    # ---- attention branch: LN1 -> qkv -> per-head softmax(QK^T)V -> proj -> +LS ----
    h = _ln_rows(x, ln1g_ref[0], ln1b_ref[0], eps)
    qkv = jnp.dot(h.astype(jnp.bfloat16), qkvw_ref[0],
                  preferred_element_type=jnp.float32) + qkvb_ref[0]        # (N_pad, 3D)
    q = qkv[:, :D].astype(jnp.bfloat16)                # cast once, 128-aligned lane slices
    k = qkv[:, D:2 * D].astype(jnp.bfloat16)
    v = qkv[:, 2 * D:].astype(jnp.bfloat16)

    # per-head lane masks (built once, bf16); only ONE matmul operand is ever masked
    lane = jax.lax.broadcasted_iota(jnp.int32, (1, D), 1)
    head_masks = [((lane >= hh * d) & (lane < (hh + 1) * d)).astype(jnp.bfloat16)
                  for hh in range(num_heads)]
    # padded key columns get a large negative score bias (exactly excludes pad tokens)
    col = jax.lax.broadcasted_iota(jnp.int32, (1, N_pad), 1)
    key_bias = jnp.where(col < n_real, 0.0, -1e30).astype(jnp.float32)

    o_acc = jnp.zeros((N_pad, D), jnp.float32)
    for hm in head_masks:                              # static unroll (num_heads small)
        # scores: contract last dims of q and masked k (no explicit k.T materialized)
        s = jax.lax.dot_general(q, k * hm, (((1,), (1,)), ((), ())),
                                preferred_element_type=jnp.float32) * scale + key_bias
        smax = jnp.max(s, axis=-1, keepdims=True)
        p = jnp.exp(s - smax)
        p = p * pl.reciprocal(jnp.sum(p, axis=-1, keepdims=True), approx=True)
        o_acc = o_acc + jnp.dot(p.astype(jnp.bfloat16), v * hm,
                                preferred_element_type=jnp.float32)        # (N_pad, D)

    attn = jnp.dot(o_acc.astype(jnp.bfloat16), projw_ref[0],
                   preferred_element_type=jnp.float32) + projb_ref[0]
    x = x + attn * ls1_ref[0]

    # ---- MLP branch: LN2 -> fc1 + exact GELU -> fc2 -> +LS ----
    h = _ln_rows(x, ln2g_ref[0], ln2b_ref[0], eps)
    h = jnp.dot(h.astype(jnp.bfloat16), fc1w_ref[0],
                preferred_element_type=jnp.float32) + fc1b_ref[0]
    h = h * 0.5 * (1.0 + jax.lax.erf(h * 0.7071067811865476))              # exact GELU
    h = jnp.dot(h.astype(jnp.bfloat16), fc2w_ref[0],
                preferred_element_type=jnp.float32) + fc2b_ref[0]
    x = x + h * ls2_ref[0]

    tok_ref[...] = x                                   # carry to next depth step

    @pl.when(l == pl.num_programs(1) - 1)
    def _():
        # final LayerNorm fused into the last depth step
        o_ref[0] = _ln_rows(x, normw_ref[...], normb_ref[...], eps)


# ----------------------------- Pallas wrappers -----------------------------

def patch_embed(cols, w, b):
    """Single-step (M,K)@(K,N)+bias — the whole operand set is < 200 KB of VMEM."""
    M, K = cols.shape
    N = w.shape[1]
    full = lambda shape: pl.BlockSpec(shape, lambda i: (0,) * len(shape))
    return pl.pallas_call(
        _patch_embed_kernel,
        out_shape=jax.ShapeDtypeStruct((M, N), jnp.float32),
        grid=(1,),
        in_specs=[full((M, K)), full((K, N)), full((1, N))],
        out_specs=full((M, N)),
    )(cols, w, b.reshape(1, N))


def vit_stack(xt, params, *, n_real, eps=1e-6):
    """All depth blocks + final LN in one pallas_call.

    grid=(B, depth): B is "parallel" (v7x gets both TCs busy; serial-but-cheap on
    v5e/v6e), depth is "arbitrary" with the token block VMEM-resident across it.
    """
    B, N_pad, D = xt.shape
    blk = params["blocks"]
    depth = blk["qkv_w"].shape[0]
    hidden = blk["fc1_w"].shape[2]
    H3 = 3 * D
    kern = functools.partial(_vit_stack_kernel, num_heads=params["num_heads"],
                             eps=eps, n_real=n_real)

    tok_spec = pl.BlockSpec((1, N_pad, D), lambda b, l: (b, 0, 0))
    wspec = lambda shape: pl.BlockSpec((1,) + shape, lambda b, l: (l, 0, 0))
    norm_spec = pl.BlockSpec((1, D), lambda b, l: (0, 0))

    return pl.pallas_call(
        kern,
        out_shape=jax.ShapeDtypeStruct((B, N_pad, D), jnp.float32),
        grid=(B, depth),
        in_specs=[tok_spec,
                  wspec((1, D)), wspec((1, D)),             # ln1 gamma / beta
                  wspec((D, H3)), wspec((1, H3)),           # qkv
                  wspec((D, D)), wspec((1, D)),             # proj
                  wspec((1, D)),                            # ls1
                  wspec((1, D)), wspec((1, D)),             # ln2 gamma / beta
                  wspec((D, hidden)), wspec((1, hidden)),   # fc1
                  wspec((hidden, D)), wspec((1, D)),        # fc2
                  wspec((1, D)),                            # ls2
                  norm_spec, norm_spec],                    # final LN gamma / beta
        out_specs=tok_spec,
        scratch_shapes=[pltpu.VMEM((N_pad, D), jnp.float32)],
        compiler_params=pltpu.CompilerParams(
            dimension_semantics=("parallel", "arbitrary")),
    )(xt,
      blk["norm1_w"], blk["norm1_b"],
      blk["qkv_w"], blk["qkv_b"],
      blk["proj_w"], blk["proj_b"], blk["ls1"],
      blk["norm2_w"], blk["norm2_b"],
      blk["fc1_w"], blk["fc1_b"],
      blk["fc2_w"], blk["fc2_b"], blk["ls2"],
      params["norm_w"].reshape(1, D), params["norm_b"].reshape(1, D))


# ----------------------------- parameters -----------------------------

def init_params(key, in_channels=3, embed_dim=128, depth=2, num_heads=4,
                mlp_ratio=4, num_register_tokens=4, num_patches=4):
    ks = iter(jax.random.split(key, 16))
    s = 0.02
    D = embed_dim
    hidden = mlp_ratio * D
    k_raw = in_channels * PATCH * PATCH

    nrm = lambda shape: jax.random.normal(next(ks), shape, jnp.float32) * s

    patch_w = nrm((k_raw, D))
    patch_b = jnp.zeros((D,), jnp.float32)
    # Fold ImageNet normalization into the patch-embed weights: (x-mean)/std @ W + b
    #   == x @ (W/std) + (b - sum_r W_r * mean_c/std_c)
    inv_std = jnp.repeat(1.0 / IMAGENET_STD, PATCH * PATCH)
    mean_over_std = jnp.repeat(IMAGENET_MEAN / IMAGENET_STD, PATCH * PATCH)
    w_fold = patch_w * inv_std[:, None]
    b_fold = patch_b - jnp.sum(patch_w * mean_over_std[:, None], axis=0)
    k_pad = pl.cdiv(k_raw, 128) * 128                         # lane-align the K dim
    w_fold = jnp.pad(w_fold, ((0, k_pad - k_raw), (0, 0)))    # zero rows -> exact

    # per-block weights stacked along a leading depth axis (streamed by the grid)
    blocks = {
        "norm1_w": jnp.ones((depth, 1, D), jnp.float32),
        "norm1_b": jnp.zeros((depth, 1, D), jnp.float32),
        "qkv_w": nrm((depth, D, 3 * D)).astype(jnp.bfloat16),
        "qkv_b": jnp.zeros((depth, 1, 3 * D), jnp.float32),
        "proj_w": nrm((depth, D, D)).astype(jnp.bfloat16),
        "proj_b": jnp.zeros((depth, 1, D), jnp.float32),
        "ls1": jnp.full((depth, 1, D), 1e-5, jnp.float32),
        "norm2_w": jnp.ones((depth, 1, D), jnp.float32),
        "norm2_b": jnp.zeros((depth, 1, D), jnp.float32),
        "fc1_w": nrm((depth, D, hidden)).astype(jnp.bfloat16),
        "fc1_b": jnp.zeros((depth, 1, hidden), jnp.float32),
        "fc2_w": nrm((depth, hidden, D)).astype(jnp.bfloat16),
        "fc2_b": jnp.zeros((depth, 1, D), jnp.float32),
        "ls2": jnp.full((depth, 1, D), 1e-5, jnp.float32),
    }

    return {
        "patch_w": w_fold.astype(jnp.bfloat16),
        "patch_b": b_fold,
        "patch_k_pad": int(k_pad),
        "cls_token": nrm((1, 1, D)),
        "register_tokens": nrm((1, num_register_tokens, D)),
        "pos_embed": nrm((1, 1 + num_patches, D)),
        "norm_w": jnp.ones((D,), jnp.float32),
        "norm_b": jnp.zeros((D,), jnp.float32),
        "blocks": blocks,
        "num_heads": num_heads,
        "num_register_tokens": num_register_tokens,
        "embed_dim": D,
        "depth": depth,
    }


# ----------------------------- forward -----------------------------

def dinov2_patches_forward(x, params):
    """DinoV2Patches.forward: center-crop -> (folded) imagenet norm + patch embed ->
    ViT blocks + final LN (one fused kernel) -> patch tokens as (B, D, H//14, W//14)."""
    B, C, H, W = x.shape
    Hc, Wc = H - H % PATCH, W - W % PATCH
    top, left = (H - Hc) // 2, (W - Wc) // 2
    x = x[:, :, top:top + Hc, left:left + Wc]
    gh, gw = Hc // PATCH, Wc // PATCH
    D = params["embed_dim"]
    n_reg = params["num_register_tokens"]

    # Patch embedding: im2col (XLA glue) -> zero-pad K to multiple of 128 -> one-step matmul.
    # ImageNet mean/std is already folded into patch_w / patch_b.
    cols = (x.reshape(B, C, gh, PATCH, gw, PATCH)
             .transpose(0, 2, 4, 1, 3, 5)
             .reshape(B * gh * gw, C * PATCH * PATCH))
    cols = jnp.pad(cols, ((0, 0), (0, params["patch_k_pad"] - cols.shape[1])))
    tok = patch_embed(cols.astype(jnp.bfloat16), params["patch_w"], params["patch_b"])
    tok = tok.reshape(B, gh * gw, D)

    cls = jnp.broadcast_to(params["cls_token"], (B, 1, D))
    xt = jnp.concatenate([cls, tok], axis=1) + params["pos_embed"]
    reg = jnp.broadcast_to(params["register_tokens"], (B, n_reg, D))
    xt = jnp.concatenate([xt[:, :1], reg, xt[:, 1:]], axis=1)      # (B, 1+reg+P, D)

    # Pad token count to a sublane multiple; padded keys are masked inside the kernel.
    n_real = xt.shape[1]
    n_pad = pl.cdiv(n_real, 8) * 8
    xt = jnp.pad(xt, ((0, 0), (0, n_pad - n_real), (0, 0)))

    out = vit_stack(xt, params, n_real=n_real)                     # (B, n_pad, D) f32

    # Patch tokens only; NCHW permute is tiny XLA glue at these sizes.
    patch = out[:, 1 + n_reg:n_real, :]                            # (B, gh*gw, D)
    return patch.transpose(0, 2, 1).reshape(B, D, gh, gw)


# ----------------------------- main -----------------------------

if __name__ == "__main__":
    key = jax.random.PRNGKey(0)
    k_img, k_par = jax.random.split(key)

    # small image: 30x32 -> cropped to 28x28 -> 2x2 grid of 14x14 patches
    B, C, H, W = 2, 3, 30, 32
    x = jax.random.uniform(k_img, (B, C, H, W), jnp.float32)

    gh, gw = (H - H % PATCH) // PATCH, (W - W % PATCH) // PATCH
    EMBED = 128   # lane-dense embed dim (D, 3D, hidden all multiples of 128)
    params = init_params(k_par, in_channels=C, embed_dim=EMBED, depth=2,
                         num_heads=4, num_register_tokens=4, num_patches=gh * gw)

    fwd = jax.jit(lambda img: dinov2_patches_forward(img, params))
    out = jax.block_until_ready(fwd(x))
    assert out.shape == (B, EMBED, gh, gw), out.shape
    assert jnp.all(jnp.isfinite(out))
    print("KERNEL_OK")
</pallas_src>

<mosaic_0001>
module attributes {stable_mosaic.version = 11 : i64} {
  func.func @_patch_embed_kernel(%arg0: i32, %arg1: memref<8x640xbf16, #tpu.memory_space<vmem>>, %arg2: memref<640x128xbf16, #tpu.memory_space<vmem>>, %arg3: memref<1x128xf32, #tpu.memory_space<vmem>>, %arg4: memref<8x128xf32, #tpu.memory_space<vmem>>) attributes {dimension_semantics = [#tpu.dimension_semantics<arbitrary>], iteration_bounds = array<i64: 1>, scalar_prefetch = 0 : i64, scratch_operands = 0 : i64, tpu.core_type = #tpu.core_type<tc>, window_params = [{pipeline_mode = #tpu.pipeline_mode<synchronous>, transform_indices = @transform_0, window_bounds = array<i64: 8, 640>}, {pipeline_mode = #tpu.pipeline_mode<synchronous>, transform_indices = @transform_1, window_bounds = array<i64: 640, 128>}, {pipeline_mode = #tpu.pipeline_mode<synchronous>, transform_indices = @transform_2, window_bounds = array<i64: 1, 128>}, {pipeline_mode = #tpu.pipeline_mode<synchronous>, transform_indices = @transform_3, window_bounds = array<i64: 8, 128>}]} {
    %c0 = arith.constant 0 : index
    %c0_0 = arith.constant 0 : index
    %0 = vector.load %arg1[%c0, %c0_0] : memref<8x640xbf16, #tpu.memory_space<vmem>>, vector<8x640xbf16>
    %c0_1 = arith.constant 0 : index
    %c0_2 = arith.constant 0 : index
    %1 = vector.load %arg2[%c0_1, %c0_2] : memref<640x128xbf16, #tpu.memory_space<vmem>>, vector<640x128xbf16>
    %cst = arith.constant dense<0.000000e+00> : vector<8x128xf32>
    %2 = tpu.matmul %0, %1, %cst {dimension_numbers = #tpu.dot_dimension_numbers<[1], [0], [0], [1], [0, 0, 1, 1], [], []>} : vector<8x640xbf16>, vector<640x128xbf16>, vector<8x128xf32> -> vector<8x128xf32>
    %c0_3 = arith.constant 0 : index
    %c0_4 = arith.constant 0 : index
    %3 = vector.load %arg3[%c0_3, %c0_4] : memref<1x128xf32, #tpu.memory_space<vmem>>, vector<1x128xf32>
    %4 = vector.broadcast %3 : vector<1x128xf32> to vector<8x128xf32>
    %5 = arith.addf %2, %4 : vector<8x128xf32>
    %c0_5 = arith.constant 0 : index
    %c0_6 = arith.constant 0 : index
    %6 = vector.load %arg4[%c0_5, %c0_6] : memref<8x128xf32, #tpu.memory_space<vmem>>, vector<8x128xf32>
    tpu.vector_store %arg4[%c0_5, %c0_6], %5 {strides = array<i32>} : memref<8x128xf32, #tpu.memory_space<vmem>>, vector<8x128xf32>,
    return
  }
  func.func @transform_0(%arg0: i32) -> (i32, i32) {
    %c0_i32 = arith.constant 0 : i32
    %c0_i32_0 = arith.constant 0 : i32
    %c0_i32_1 = arith.constant 0 : i32
    return %c0_i32, %c0_i32_0 : i32, i32
  }
  func.func @transform_1(%arg0: i32) -> (i32, i32) {
    %c0_i32 = arith.constant 0 : i32
    %c0_i32_0 = arith.constant 0 : i32
    %c0_i32_1 = arith.constant 0 : i32
    return %c0_i32, %c0_i32_0 : i32, i32
  }
  func.func @transform_2(%arg0: i32) -> (i32, i32) {
    %c0_i32 = arith.constant 0 : i32
    %c0_i32_0 = arith.constant 0 : i32
    %c0_i32_1 = arith.constant 0 : i32
    return %c0_i32, %c0_i32_0 : i32, i32
  }
  func.func @transform_3(%arg0: i32) -> (i32, i32) {
    %c0_i32 = arith.constant 0 : i32
    %c0_i32_0 = arith.constant 0 : i32
    %c0_i32_1 = arith.constant 0 : i32
    return %c0_i32, %c0_i32_0 : i32, i32
  }
}

module attributes {stable_mosaic.version = 11 : i64} {
  func.func @_vit_stack_kernel(%arg0: i32, %arg1: i32, %arg2: memref<1x16x128xf32, #tpu.memory_space<vmem>>, %arg3: memref<1x1x128xf32, #tpu.memory_space<vmem>>, %arg4: memref<1x1x128xf32, #tpu.memory_space<vmem>>, %arg5: memref<1x128x384xbf16, #tpu.memory_space<vmem>>, %arg6: memref<1x1x384xf32, #tpu.memory_space<vmem>>, %arg7: memref<1x128x128xbf16, #tpu.memory_space<vmem>>, %arg8: memref<1x1x128xf32, #tpu.memory_space<vmem>>, %arg9: memref<1x1x128xf32, #tpu.memory_space<vmem>>, %arg10: memref<1x1x128xf32, #tpu.memory_space<vmem>>, %arg11: memref<1x1x128xf32, #tpu.memory_space<vmem>>, %arg12: memref<1x128x512xbf16, #tpu.memory_space<vmem>>, %arg13: memref<1x1x512xf32, #tpu.memory_space<vmem>>, %arg14: memref<1x512x128xbf16, #tpu.memory_space<vmem>>, %arg15: memref<1x1x128xf32, #tpu.memory_space<vmem>>, %arg16: memref<1x1x128xf32, #tpu.memory_space<vmem>>, %arg17: memref<1x128xf32, #tpu.memory_space<vmem>>, %arg18: memref<1x128xf32, #tpu.memory_space<vmem>>, %arg19: memref<1x16x128xf32, #tpu.memory_space<vmem>>, %arg20: memref<16x128xf32, #tpu.memory_space<vmem>>) attributes {dimension_semantics = [#tpu.dimension_semantics<parallel>, #tpu.dimension_semantics<arbitrary>], iteration_bounds = array<i64: 2, 2>, scalar_prefetch = 0 : i64, scratch_operands = 1 : i64, tpu.core_type = #tpu.core_type<tc>, window_params = [{transform_indices = @transform_0, window_bounds = array<i64: 1, 16, 128>}, {transform_indices = @transform_1, window_bounds = array<i64: 1, 1, 128>}, {transform_indices = @transform_2, window_bounds = array<i64: 1, 1, 128>}, {transform_indices = @transform_3, window_bounds = array<i64: 1, 128, 384>}, {transform_indices = @transform_4, window_bounds = array<i64: 1, 1, 384>}, {transform_indices = @transform_5, window_bounds = array<i64: 1, 128, 128>}, {transform_indices = @transform_6, window_bounds = array<i64: 1, 1, 128>}, {transform_indices = @transform_7, window_bounds = array<i64: 1, 1, 128>}, {transform_indices = @transform_8, window_bounds = array<i64: 1, 1, 128>}, {transform_indices = @transform_9, window_bounds = array<i64: 1, 1, 128>}, {transform_indices = @transform_10, window_bounds = array<i64: 1, 128, 512>}, {transform_indices = @transform_11, window_bounds = array<i64: 1, 1, 512>}, {transform_indices = @transform_12, window_bounds = array<i64: 1, 512, 128>}, {transform_indices = @transform_13, window_bounds = array<i64: 1, 1, 128>}, {transform_indices = @transform_14, window_bounds = array<i64: 1, 1, 128>}, {pipeline_mode = #tpu.pipeline_mode<synchronous>, transform_indices = @transform_15, window_bounds = array<i64: 1, 128>}, {pipeline_mode = #tpu.pipeline_mode<synchronous>, transform_indices = @transform_16, window_bounds = array<i64: 1, 128>}, {transform_indices = @transform_17, window_bounds = array<i64: 1, 16, 128>}]} {
    %c0_i32 = arith.constant 0 : i32
    %0 = arith.cmpi eq, %arg1, %c0_i32 : i32
    %1 = arith.extui %0 : i1 to i32
    %c0_i32_0 = arith.constant 0 : i32
    %2 = arith.cmpi ne, %1, %c0_i32_0 : i32
    scf.if %2 {
      %c0_90 = arith.constant 0 : index
      %c0_91 = arith.constant 0 : index
      %c0_92 = arith.constant 0 : index
      %244 = vector.load %arg2[%c0_90, %c0_91, %c0_92] : memref<1x16x128xf32, #tpu.memory_space<vmem>>, vector<1x16x128xf32>
      %245 = vector.shape_cast %244 : vector<1x16x128xf32> to vector<16x128xf32>
      %c0_93 = arith.constant 0 : index
      %c0_94 = arith.constant 0 : index
      %246 = vector.load %arg20[%c0_93, %c0_94] : memref<16x128xf32, #tpu.memory_space<vmem>>, vector<16x128xf32>
      tpu.vector_store %arg20[%c0_93, %c0_94], %245 {strides = array<i32>} : memref<16x128xf32, #tpu.memory_space<vmem>>, vector<16x128xf32>,
    } else {
    }
    %c0 = arith.constant 0 : index
    %c0_1 = arith.constant 0 : index
    %3 = vector.load %arg20[%c0, %c0_1] : memref<16x128xf32, #tpu.memory_space<vmem>>, vector<16x128xf32>
    %c0_2 = arith.constant 0 : index
    %c0_3 = arith.constant 0 : index
    %c0_4 = arith.constant 0 : index
    %4 = vector.load %arg3[%c0_2, %c0_3, %c0_4] : memref<1x1x128xf32, #tpu.memory_space<vmem>>, vector<1x1x128xf32>
    %5 = vector.shape_cast %4 : vector<1x1x128xf32> to vector<1x128xf32>
    %c0_5 = arith.constant 0 : index
    %c0_6 = arith.constant 0 : index
    %c0_7 = arith.constant 0 : index
    %6 = vector.load %arg4[%c0_5, %c0_6, %c0_7] : memref<1x1x128xf32, #tpu.memory_space<vmem>>, vector<1x1x128xf32>
    %7 = vector.shape_cast %6 : vector<1x1x128xf32> to vector<1x128xf32>
    %cst = arith.constant dense<0.000000e+00> : vector<16xf32>
    %8 = vector.multi_reduction <add>, %3, %cst [1] : vector<16x128xf32> to vector<16xf32>
    %9 = vector.shape_cast %8 : vector<16xf32> to vector<16x1xf32>
    %cst_8 = arith.constant 1.280000e+02 : f32
    %10 = vector.broadcast %cst_8 : f32 to vector<16x1xf32>
    %11 = arith.divf %9, %10 : vector<16x1xf32>
    %12 = vector.broadcast %11 : vector<16x1xf32> to vector<16x128xf32>
    %13 = arith.subf %3, %12 : vector<16x128xf32>
    %14 = arith.mulf %13, %13 : vector<16x128xf32>
    %cst_9 = arith.constant dense<0.000000e+00> : vector<16xf32>
    %15 = vector.multi_reduction <add>, %14, %cst_9 [1] : vector<16x128xf32> to vector<16xf32>
    %16 = vector.shape_cast %15 : vector<16xf32> to vector<16x1xf32>
    %cst_10 = arith.constant 1.280000e+02 : f32
    %17 = vector.broadcast %cst_10 : f32 to vector<16x1xf32>
    %18 = arith.divf %16, %17 : vector<16x1xf32>
    %19 = vector.broadcast %11 : vector<16x1xf32> to vector<16x128xf32>
    %20 = arith.subf %3, %19 : vector<16x128xf32>
    %cst_11 = arith.constant 9.99999997E-7 : f32
    %21 = vector.broadcast %cst_11 : f32 to vector<16x1xf32>
    %22 = arith.addf %18, %21 : vector<16x1xf32>
    %23 = math.rsqrt %22 : vector<16x1xf32>
    %24 = vector.broadcast %23 : vector<16x1xf32> to vector<16x128xf32>
    %25 = arith.mulf %20, %24 : vector<16x128xf32>
    %26 = vector.broadcast %5 : vector<1x128xf32> to vector<16x128xf32>
    %27 = arith.mulf %25, %26 : vector<16x128xf32>
    %28 = vector.broadcast %7 : vector<1x128xf32> to vector<16x128xf32>
    %29 = arith.addf %27, %28 : vector<16x128xf32>
    %30 = arith.truncf %29 : vector<16x128xf32> to vector<16x128xbf16>
    %c0_12 = arith.constant 0 : index
    %c0_13 = arith.constant 0 : index
    %c0_14 = arith.constant 0 : index
    %31 = vector.load %arg5[%c0_12, %c0_13, %c0_14] : memref<1x128x384xbf16, #tpu.memory_space<vmem>>, vector<1x128x384xbf16>
    %32 = vector.shape_cast %31 : vector<1x128x384xbf16> to vector<128x384xbf16>
    %cst_15 = arith.constant dense<0.000000e+00> : vector<16x384xf32>
    %33 = tpu.matmul %30, %32, %cst_15 {dimension_numbers = #tpu.dot_dimension_numbers<[1], [0], [0], [1], [0, 0, 1, 1], [], []>} : vector<16x128xbf16>, vector<128x384xbf16>, vector<16x384xf32> -> vector<16x384xf32>
    %c0_16 = arith.constant 0 : index
    %c0_17 = arith.constant 0 : index
    %c0_18 = arith.constant 0 : index
    %34 = vector.load %arg6[%c0_16, %c0_17, %c0_18] : memref<1x1x384xf32, #tpu.memory_space<vmem>>, vector<1x1x384xf32>
    %35 = vector.shape_cast %34 : vector<1x1x384xf32> to vector<1x384xf32>
    %36 = vector.broadcast %35 : vector<1x384xf32> to vector<16x384xf32>
    %37 = arith.addf %33, %36 : vector<16x384xf32>
    %38 = vector.extract_strided_slice %37 {offsets = [0, 0], sizes = [16, 128], strides = [1, 1]} : vector<16x384xf32> to vector<16x128xf32>
    %39 = arith.truncf %38 : vector<16x128xf32> to vector<16x128xbf16>
    %40 = vector.extract_strided_slice %37 {offsets = [0, 128], sizes = [16, 128], strides = [1, 1]} : vector<16x384xf32> to vector<16x128xf32>
    %41 = arith.truncf %40 : vector<16x128xf32> to vector<16x128xbf16>
    %42 = vector.extract_strided_slice %37 {offsets = [0, 256], sizes = [16, 128], strides = [1, 1]} : vector<16x384xf32> to vector<16x128xf32>
    %43 = arith.truncf %42 : vector<16x128xf32> to vector<16x128xbf16>
    %44 = tpu.iota {dimensions = array<i32: 1>} : vector<1x128xi32>
    %c0_i32_19 = arith.constant 0 : i32
    %45 = vector.broadcast %c0_i32_19 : i32 to vector<1x128xi32>
    %46 = arith.cmpi sge, %44, %45 : vector<1x128xi32>
    %c32_i32 = arith.constant 32 : i32
    %47 = vector.broadcast %c32_i32 : i32 to vector<1x128xi32>
    %48 = arith.cmpi slt, %44, %47 : vector<1x128xi32>
    %49 = arith.andi %46, %48 : vector<1x128xi1>
    %50 = arith.extui %49 : vector<1x128xi1> to vector<1x128xi32>
    %51 = arith.sitofp %50 : vector<1x128xi32> to vector<1x128xf32>
    %52 = arith.truncf %51 : vector<1x128xf32> to vector<1x128xbf16>
    %c32_i32_20 = arith.constant 32 : i32
    %53 = vector.broadcast %c32_i32_20 : i32 to vector<1x128xi32>
    %54 = arith.cmpi sge, %44, %53 : vector<1x128xi32>
    %c64_i32 = arith.constant 64 : i32
    %55 = vector.broadcast %c64_i32 : i32 to vector<1x128xi32>
    %56 = arith.cmpi slt, %44, %55 : vector<1x128xi32>
    %57 = arith.andi %54, %56 : vector<1x128xi1>
    %58 = arith.extui %57 : vector<1x128xi1> to vector<1x128xi32>
    %59 = arith.sitofp %58 : vector<1x128xi32> to vector<1x128xf32>
    %60 = arith.truncf %59 : vector<1x128xf32> to vector<1x128xbf16>
    %c64_i32_21 = arith.constant 64 : i32
    %61 = vector.broadcast %c64_i32_21 : i32 to vector<1x128xi32>
    %62 = arith.cmpi sge, %44, %61 : vector<1x128xi32>
    %c96_i32 = arith.constant 96 : i32
    %63 = vector.broadcast %c96_i32 : i32 to vector<1x128xi32>
    %64 = arith.cmpi slt, %44, %63 : vector<1x128xi32>
    %65 = arith.andi %62, %64 : vector<1x128xi1>
    %66 = arith.extui %65 : vector<1x128xi1> to vector<1x128xi32>
    %67 = arith.sitofp %66 : vector<1x128xi32> to vector<1x128xf32>
    %68 = arith.truncf %67 : vector<1x128xf32> to vector<1x128xbf16>
    %c96_i32_22 = arith.constant 96 : i32
    %69 = vector.broadcast %c96_i32_22 : i32 to vector<1x128xi32>
    %70 = arith.cmpi sge, %44, %69 : vector<1x128xi32>
    %c128_i32 = arith.constant 128 : i32
    %71 = vector.broadcast %c128_i32 : i32 to vector<1x128xi32>
    %72 = arith.cmpi slt, %44, %71 : vector<1x128xi32>
    %73 = arith.andi %70, %72 : vector<1x128xi1>
    %74 = arith.extui %73 : vector<1x128xi1> to vector<1x128xi32>
    %75 = arith.sitofp %74 : vector<1x128xi32> to vector<1x128xf32>
    %76 = arith.truncf %75 : vector<1x128xf32> to vector<1x128xbf16>
    %77 = tpu.iota {dimensions = array<i32: 1>} : vector<1x16xi32>
    %c9_i32 = arith.constant 9 : i32
    %78 = vector.broadcast %c9_i32 : i32 to vector<1x16xi32>
    %79 = arith.cmpi slt, %77, %78 : vector<1x16xi32>
    %cst_23 = arith.constant 0.000000e+00 : f32
    %cst_24 = arith.constant -1.000000e+30 : f32
    %80 = vector.broadcast %cst_23 : f32 to vector<1x16xf32>
    %81 = vector.broadcast %cst_24 : f32 to vector<1x16xf32>
    %82 = arith.select %79, %80, %81 : vector<1x16xi1>, vector<1x16xf32>
    %cst_25 = arith.constant 0.000000e+00 : f32
    %83 = vector.broadcast %cst_25 : f32 to vector<16x128xf32>
    %84 = vector.broadcast %52 : vector<1x128xbf16> to vector<16x128xbf16>
    %85 = arith.mulf %41, %84 : vector<16x128xbf16>
    %cst_26 = arith.constant dense<0.000000e+00> : vector<16x16xf32>
    %86 = tpu.matmul %39, %85, %cst_26 {dimension_numbers = #tpu.dot_dimension_numbers<[1], [1], [0], [0], [0, 0, 1, 0], [], []>} : vector<16x128xbf16>, vector<16x128xbf16>, vector<16x16xf32> -> vector<16x16xf32>
    %cst_27 = arith.constant 0.176776692 : f32
    %87 = vector.broadcast %cst_27 : f32 to vector<16x16xf32>
    %88 = arith.mulf %86, %87 : vector<16x16xf32>
    %89 = vector.broadcast %82 : vector<1x16xf32> to vector<16x16xf32>
    %90 = arith.addf %88, %89 : vector<16x16xf32>
    %cst_28 = arith.constant dense<0xFF800000> : vector<16xf32>
    %91 = vector.multi_reduction <maximumf>, %90, %cst_28 [1] : vector<16x16xf32> to vector<16xf32>
    %92 = vector.shape_cast %91 : vector<16xf32> to vector<16x1xf32>
    %93 = vector.broadcast %92 : vector<16x1xf32> to vector<16x16xf32>
    %94 = arith.subf %90, %93 : vector<16x16xf32>
    %95 = math.exp %94 : vector<16x16xf32>
    %cst_29 = arith.constant dense<0.000000e+00> : vector<16xf32>
    %96 = vector.multi_reduction <add>, %95, %cst_29 [1] : vector<16x16xf32> to vector<16xf32>
    %97 = vector.shape_cast %96 : vector<16xf32> to vector<16x1xf32>
    %98 = tpu.reciprocal %97 {approx = true} : vector<16x1xf32> -> vector<16x1xf32>
    %99 = vector.broadcast %98 : vector<16x1xf32> to vector<16x16xf32>
    %100 = arith.mulf %95, %99 : vector<16x16xf32>
    %101 = arith.truncf %100 : vector<16x16xf32> to vector<16x16xbf16>
    %102 = vector.broadcast %52 : vector<1x128xbf16> to vector<16x128xbf16>
    %103 = arith.mulf %43, %102 : vector<16x128xbf16>
    %cst_30 = arith.constant dense<0.000000e+00> : vector<16x128xf32>
    %104 = tpu.matmul %101, %103, %cst_30 {dimension_numbers = #tpu.dot_dimension_numbers<[1], [0], [0], [1], [0, 0, 1, 1], [], []>} : vector<16x16xbf16>, vector<16x128xbf16>, vector<16x128xf32> -> vector<16x128xf32>
    %105 = arith.addf %83, %104 : vector<16x128xf32>
    %106 = vector.broadcast %60 : vector<1x128xbf16> to vector<16x128xbf16>
    %107 = arith.mulf %41, %106 : vector<16x128xbf16>
    %cst_31 = arith.constant dense<0.000000e+00> : vector<16x16xf32>
    %108 = tpu.matmul %39, %107, %cst_31 {dimension_numbers = #tpu.dot_dimension_numbers<[1], [1], [0], [0], [0, 0, 1, 0], [], []>} : vector<16x128xbf16>, vector<16x128xbf16>, vector<16x16xf32> -> vector<16x16xf32>
    %cst_32 = arith.constant 0.176776692 : f32
    %109 = vector.broadcast %cst_32 : f32 to vector<16x16xf32>
    %110 = arith.mulf %108, %109 : vector<16x16xf32>
    %111 = vector.broadcast %82 : vector<1x16xf32> to vector<16x16xf32>
    %112 = arith.addf %110, %111 : vector<16x16xf32>
    %cst_33 = arith.constant dense<0xFF800000> : vector<16xf32>
    %113 = vector.multi_reduction <maximumf>, %112, %cst_33 [1] : vector<16x16xf32> to vector<16xf32>
    %114 = vector.shape_cast %113 : vector<16xf32> to vector<16x1xf32>
    %115 = vector.broadcast %114 : vector<16x1xf32> to vector<16x16xf32>
    %116 = arith.subf %112, %115 : vector<16x16xf32>
    %117 = math.exp %116 : vector<16x16xf32>
    %cst_34 = arith.constant dense<0.000000e+00> : vector<16xf32>
    %118 = vector.multi_reduction <add>, %117, %cst_34 [1] : vector<16x16xf32> to vector<16xf32>
    %119 = vector.shape_cast %118 : vector<16xf32> to vector<16x1xf32>
    %120 = tpu.reciprocal %119 {approx = true} : vector<16x1xf32> -> vector<16x1xf32>
    %121 = vector.broadcast %120 : vector<16x1xf32> to vector<16x16xf32>
    %122 = arith.mulf %117, %121 : vector<16x16xf32>
    %123 = arith.truncf %122 : vector<16x16xf32> to vector<16x16xbf16>
    %124 = vector.broadcast %60 : vector<1x128xbf16> to vector<16x128xbf16>
    %125 = arith.mulf %43, %124 : vector<16x128xbf16>
    %cst_35 = arith.constant dense<0.000000e+00> : vector<16x128xf32>
    %126 = tpu.matmul %123, %125, %cst_35 {dimension_numbers = #tpu.dot_dimension_numbers<[1], [0], [0], [1], [0, 0, 1, 1], [], []>} : vector<16x16xbf16>, vector<16x128xbf16>, vector<16x128xf32> -> vector<16x128xf32>
    %127 = arith.addf %105, %126 : vector<16x128xf32>
    %128 = vector.broadcast %68 : vector<1x128xbf16> to vector<16x128xbf16>
    %129 = arith.mulf %41, %128 : vector<16x128xbf16>
    %cst_36 = arith.constant dense<0.000000e+00> : vector<16x16xf32>
    %130 = tpu.matmul %39, %129, %cst_36 {dimension_numbers = #tpu.dot_dimension_numbers<[1], [1], [0], [0], [0, 0, 1, 0], [], []>} : vector<16x128xbf16>, vector<16x128xbf16>, vector<16x16xf32> -> vector<16x16xf32>
    %cst_37 = arith.constant 0.176776692 : f32
    %131 = vector.broadcast %cst_37 : f32 to vector<16x16xf32>
    %132 = arith.mulf %130, %131 : vector<16x16xf32>
    %133 = vector.broadcast %82 : vector<1x16xf32> to vector<16x16xf32>
    %134 = arith.addf %132, %133 : vector<16x16xf32>
    %cst_38 = arith.constant dense<0xFF800000> : vector<16xf32>
    %135 = vector.multi_reduction <maximumf>, %134, %cst_38 [1] : vector<16x16xf32> to vector<16xf32>
    %136 = vector.shape_cast %135 : vector<16xf32> to vector<16x1xf32>
    %137 = vector.broadcast %136 : vector<16x1xf32> to vector<16x16xf32>
    %138 = arith.subf %134, %137 : vector<16x16xf32>
    %139 = math.exp %138 : vector<16x16xf32>
    %cst_39 = arith.constant dense<0.000000e+00> : vector<16xf32>
    %140 = vector.multi_reduction <add>, %139, %cst_39 [1] : vector<16x16xf32> to vector<16xf32>
    %141 = vector.shape_cast %140 : vector<16xf32> to vector<16x1xf32>
    %142 = tpu.reciprocal %141 {approx = true} : vector<16x1xf32> -> vector<16x1xf32>
    %143 = vector.broadcast %142 : vector<16x1xf32> to vector<16x16xf32>
    %144 = arith.mulf %139, %143 : vector<16x16xf32>
    %145 = arith.truncf %144 : vector<16x16xf32> to vector<16x16xbf16>
    %146 = vector.broadcast %68 : vector<1x128xbf16> to vector<16x128xbf16>
    %147 = arith.mulf %43, %146 : vector<16x128xbf16>
    %cst_40 = arith.constant dense<0.000000e+00> : vector<16x128xf32>
    %148 = tpu.matmul %145, %147, %cst_40 {dimension_numbers = #tpu.dot_dimension_numbers<[1], [0], [0], [1], [0, 0, 1, 1], [], []>} : vector<16x16xbf16>, vector<16x128xbf16>, vector<16x128xf32> -> vector<16x128xf32>
    %149 = arith.addf %127, %148 : vector<16x128xf32>
    %150 = vector.broadcast %76 : vector<1x128xbf16> to vector<16x128xbf16>
    %151 = arith.mulf %41, %150 : vector<16x128xbf16>
    %cst_41 = arith.constant dense<0.000000e+00> : vector<16x16xf32>
    %152 = tpu.matmul %39, %151, %cst_41 {dimension_numbers = #tpu.dot_dimension_numbers<[1], [1], [0], [0], [0, 0, 1, 0], [], []>} : vector<16x128xbf16>, vector<16x128xbf16>, vector<16x16xf32> -> vector<16x16xf32>
    %cst_42 = arith.constant 0.176776692 : f32
    %153 = vector.broadcast %cst_42 : f32 to vector<16x16xf32>
    %154 = arith.mulf %152, %153 : vector<16x16xf32>
    %155 = vector.broadcast %82 : vector<1x16xf32> to vector<16x16xf32>
    %156 = arith.addf %154, %155 : vector<16x16xf32>
    %cst_43 = arith.constant dense<0xFF800000> : vector<16xf32>
    %157 = vector.multi_reduction <maximumf>, %156, %cst_43 [1] : vector<16x16xf32> to vector<16xf32>
    %158 = vector.shape_cast %157 : vector<16xf32> to vector<16x1xf32>
    %159 = vector.broadcast %158 : vector<16x1xf32> to vector<16x16xf32>
    %160 = arith.subf %156, %159 : vector<16x16xf32>
    %161 = math.exp %160 : vector<16x16xf32>
    %cst_44 = arith.constant dense<0.000000e+00> : vector<16xf32>
    %162 = vector.multi_reduction <add>, %161, %cst_44 [1] : vector<16x16xf32> to vector<16xf32>
    %163 = vector.shape_cast %162 : vector<16xf32> to vector<16x1xf32>
    %164 = tpu.reciprocal %163 {approx = true} : vector<16x1xf32> -> vector<16x1xf32>
    %165 = vector.broadcast %164 : vector<16x1xf32> to vector<16x16xf32>
    %166 = arith.mulf %161, %165 : vector<16x16xf32>
    %167 = arith.truncf %166 : vector<16x16xf32> to vector<16x16xbf16>
    %168 = vector.broadcast %76 : vector<1x128xbf16> to vector<16x128xbf16>
    %169 = arith.mulf %43, %168 : vector<16x128xbf16>
    %cst_45 = arith.constant dense<0.000000e+00> : vector<16x128xf32>
    %170 = tpu.matmul %167, %169, %cst_45 {dimension_numbers = #tpu.dot_dimension_numbers<[1], [0], [0], [1], [0, 0, 1, 1], [], []>} : vector<16x16xbf16>, vector<16x128xbf16>, vector<16x128xf32> -> vector<16x128xf32>
    %171 = arith.addf %149, %170 : vector<16x128xf32>
    %172 = arith.truncf %171 : vector<16x128xf32> to vector<16x128xbf16>
    %c0_46 = arith.constant 0 : index
    %c0_47 = arith.constant 0 : index
    %c0_48 = arith.constant 0 : index
    %173 = vector.load %arg7[%c0_46, %c0_47, %c0_48] : memref<1x128x128xbf16, #tpu.memory_space<vmem>>, vector<1x128x128xbf16>
    %174 = vector.shape_cast %173 : vector<1x128x128xbf16> to vector<128x128xbf16>
    %cst_49 = arith.constant dense<0.000000e+00> : vector<16x128xf32>
    %175 = tpu.matmul %172, %174, %cst_49 {dimension_numbers = #tpu.dot_dimension_numbers<[1], [0], [0], [1], [0, 0, 1, 1], [], []>} : vector<16x128xbf16>, vector<128x128xbf16>, vector<16x128xf32> -> vector<16x128xf32>
    %c0_50 = arith.constant 0 : index
    %c0_51 = arith.constant 0 : index
    %c0_52 = arith.constant 0 : index
    %176 = vector.load %arg8[%c0_50, %c0_51, %c0_52] : memref<1x1x128xf32, #tpu.memory_space<vmem>>, vector<1x1x128xf32>
    %177 = vector.shape_cast %176 : vector<1x1x128xf32> to vector<1x128xf32>
    %178 = vector.broadcast %177 : vector<1x128xf32> to vector<16x128xf32>
    %179 = arith.addf %175, %178 : vector<16x128xf32>
    %c0_53 = arith.constant 0 : index
    %c0_54 = arith.constant 0 : index
    %c0_55 = arith.constant 0 : index
    %180 = vector.load %arg9[%c0_53, %c0_54, %c0_55] : memref<1x1x128xf32, #tpu.memory_space<vmem>>, vector<1x1x128xf32>
    %181 = vector.shape_cast %180 : vector<1x1x128xf32> to vector<1x128xf32>
    %182 = vector.broadcast %181 : vector<1x128xf32> to vector<16x128xf32>
    %183 = arith.mulf %179, %182 : vector<16x128xf32>
    %184 = arith.addf %3, %183 : vector<16x128xf32>
    %c0_56 = arith.constant 0 : index
    %c0_57 = arith.constant 0 : index
    %c0_58 = arith.constant 0 : index
    %185 = vector.load %arg10[%c0_56, %c0_57, %c0_58] : memref<1x1x128xf32, #tpu.memory_space<vmem>>, vector<1x1x128xf32>
    %186 = vector.shape_cast %185 : vector<1x1x128xf32> to vector<1x128xf32>
    %c0_59 = arith.constant 0 : index
    %c0_60 = arith.constant 0 : index
    %c0_61 = arith.constant 0 : index
    %187 = vector.load %arg11[%c0_59, %c0_60, %c0_61] : memref<1x1x128xf32, #tpu.memory_space<vmem>>, vector<1x1x128xf32>
    %188 = vector.shape_cast %187 : vector<1x1x128xf32> to vector<1x128xf32>
    %cst_62 = arith.constant dense<0.000000e+00> : vector<16xf32>
    %189 = vector.multi_reduction <add>, %184, %cst_62 [1] : vector<16x128xf32> to vector<16xf32>
    %190 = vector.shape_cast %189 : vector<16xf32> to vector<16x1xf32>
    %cst_63 = arith.constant 1.280000e+02 : f32
    %191 = vector.broadcast %cst_63 : f32 to vector<16x1xf32>
    %192 = arith.divf %190, %191 : vector<16x1xf32>
    %193 = vector.broadcast %192 : vector<16x1xf32> to vector<16x128xf32>
    %194 = arith.subf %184, %193 : vector<16x128xf32>
    %195 = arith.mulf %194, %194 : vector<16x128xf32>
    %cst_64 = arith.constant dense<0.000000e+00> : vector<16xf32>
    %196 = vector.multi_reduction <add>, %195, %cst_64 [1] : vector<16x128xf32> to vector<16xf32>
    %197 = vector.shape_cast %196 : vector<16xf32> to vector<16x1xf32>
    %cst_65 = arith.constant 1.280000e+02 : f32
    %198 = vector.broadcast %cst_65 : f32 to vector<16x1xf32>
    %199 = arith.divf %197, %198 : vector<16x1xf32>
    %200 = vector.broadcast %192 : vector<16x1xf32> to vector<16x128xf32>
    %201 = arith.subf %184, %200 : vector<16x128xf32>
    %cst_66 = arith.constant 9.99999997E-7 : f32
    %202 = vector.broadcast %cst_66 : f32 to vector<16x1xf32>
    %203 = arith.addf %199, %202 : vector<16x1xf32>
    %204 = math.rsqrt %203 : vector<16x1xf32>
    %205 = vector.broadcast %204 : vector<16x1xf32> to vector<16x128xf32>
    %206 = arith.mulf %201, %205 : vector<16x128xf32>
    %207 = vector.broadcast %186 : vector<1x128xf32> to vector<16x128xf32>
    %208 = arith.mulf %206, %207 : vector<16x128xf32>
    %209 = vector.broadcast %188 : vector<1x128xf32> to vector<16x128xf32>
    %210 = arith.addf %208, %209 : vector<16x128xf32>
    %211 = arith.truncf %210 : vector<16x128xf32> to vector<16x128xbf16>
    %c0_67 = arith.constant 0 : index
    %c0_68 = arith.constant 0 : index
    %c0_69 = arith.constant 0 : index
    %212 = vector.load %arg12[%c0_67, %c0_68, %c0_69] : memref<1x128x512xbf16, #tpu.memory_space<vmem>>, vector<1x128x512xbf16>
    %213 = vector.shape_cast %212 : vector<1x128x512xbf16> to vector<128x512xbf16>
    %cst_70 = arith.constant dense<0.000000e+00> : vector<16x512xf32>
    %214 = tpu.matmul %211, %213, %cst_70 {dimension_numbers = #tpu.dot_dimension_numbers<[1], [0], [0], [1], [0, 0, 1, 1], [], []>} : vector<16x128xbf16>, vector<128x512xbf16>, vector<16x512xf32> -> vector<16x512xf32>
    %c0_71 = arith.constant 0 : index
    %c0_72 = arith.constant 0 : index
    %c0_73 = arith.constant 0 : index
    %215 = vector.load %arg13[%c0_71, %c0_72, %c0_73] : memref<1x1x512xf32, #tpu.memory_space<vmem>>, vector<1x1x512xf32>
    %216 = vector.shape_cast %215 : vector<1x1x512xf32> to vector<1x512xf32>
    %217 = vector.broadcast %216 : vector<1x512xf32> to vector<16x512xf32>
    %218 = arith.addf %214, %217 : vector<16x512xf32>
    %cst_74 = arith.constant 5.000000e-01 : f32
    %219 = vector.broadcast %cst_74 : f32 to vector<16x512xf32>
    %220 = arith.mulf %218, %219 : vector<16x512xf32>
    %cst_75 = arith.constant 0.707106769 : f32
    %221 = vector.broadcast %cst_75 : f32 to vector<16x512xf32>
    %222 = arith.mulf %218, %221 : vector<16x512xf32>
    %223 = math.erf %222 : vector<16x512xf32>
    %cst_76 = arith.constant 1.000000e+00 : f32
    %224 = vector.broadcast %cst_76 : f32 to vector<16x512xf32>
    %225 = arith.addf %224, %223 : vector<16x512xf32>
    %226 = arith.mulf %220, %225 : vector<16x512xf32>
    %227 = arith.truncf %226 : vector<16x512xf32> to vector<16x512xbf16>
    %c0_77 = arith.constant 0 : index
    %c0_78 = arith.constant 0 : index
    %c0_79 = arith.constant 0 : index
    %228 = vector.load %arg14[%c0_77, %c0_78, %c0_79] : memref<1x512x128xbf16, #tpu.memory_space<vmem>>, vector<1x512x128xbf16>
    %229 = vector.shape_cast %228 : vector<1x512x128xbf16> to vector<512x128xbf16>
    %cst_80 = arith.constant dense<0.000000e+00> : vector<16x128xf32>
    %230 = tpu.matmul %227, %229, %cst_80 {dimension_numbers = #tpu.dot_dimension_numbers<[1], [0], [0], [1], [0, 0, 1, 1], [], []>} : vector<16x512xbf16>, vector<512x128xbf16>, vector<16x128xf32> -> vector<16x128xf32>
    %c0_81 = arith.constant 0 : index
    %c0_82 = arith.constant 0 : index
    %c0_83 = arith.constant 0 : index
    %231 = vector.load %arg15[%c0_81, %c0_82, %c0_83] : memref<1x1x128xf32, #tpu.memory_space<vmem>>, vector<1x1x128xf32>
    %232 = vector.shape_cast %231 : vector<1x1x128xf32> to vector<1x128xf32>
    %233 = vector.broadcast %232 : vector<1x128xf32> to vector<16x128xf32>
    %234 = arith.addf %230, %233 : vector<16x128xf32>
    %c0_84 = arith.constant 0 : index
    %c0_85 = arith.constant 0 : index
    %c0_86 = arith.constant 0 : index
    %235 = vector.load %arg16[%c0_84, %c0_85, %c0_86] : memref<1x1x128xf32, #tpu.memory_space<vmem>>, vector<1x1x128xf32>
    %236 = vector.shape_cast %235 : vector<1x1x128xf32> to vector<1x128xf32>
    %237 = vector.broadcast %236 : vector<1x128xf32> to vector<16x128xf32>
    %238 = arith.mulf %234, %237 : vector<16x128xf32>
    %239 = arith.addf %184, %238 : vector<16x128xf32>
    %c0_87 = arith.constant 0 : index
    %c0_88 = arith.constant 0 : index
    %240 = vector.load %arg20[%c0_87, %c0_88] : memref<16x128xf32, #tpu.memory_space<vmem>>, vector<16x128xf32>
    tpu.vector_store %arg20[%c0_87, %c0_88], %239 {strides = array<i32>} : memref<16x128xf32, #tpu.memory_space<vmem>>, vector<16x128xf32>,
    %c1_i32 = arith.constant 1 : i32
    %241 = arith.cmpi eq, %arg1, %c1_i32 : i32
    %242 = arith.extui %241 : i1 to i32
    %c0_i32_89 = arith.constant 0 : i32
    %243 = arith.cmpi ne, %242, %c0_i32_89 : i32
    scf.if %243 {
      %c0_90 = arith.constant 0 : index
      %c0_91 = arith.constant 0 : index
      %244 = vector.load %arg17[%c0_90, %c0_91] : memref<1x128xf32, #tpu.memory_space<vmem>>, vector<1x128xf32>
      %c0_92 = arith.constant 0 : index
      %c0_93 = arith.constant 0 : index
      %245 = vector.load %arg18[%c0_92, %c0_93] : memref<1x128xf32, #tpu.memory_space<vmem>>, vector<1x128xf32>
      %cst_94 = arith.constant dense<0.000000e+00> : vector<16xf32>
      %246 = vector.multi_reduction <add>, %239, %cst_94 [1] : vector<16x128xf32> to vector<16xf32>
      %247 = vector.shape_cast %246 : vector<16xf32> to vector<16x1xf32>
      %cst_95 = arith.constant 1.280000e+02 : f32
      %248 = vector.broadcast %cst_95 : f32 to vector<16x1xf32>
      %249 = arith.divf %247, %248 : vector<16x1xf32>
      %250 = vector.broadcast %249 : vector<16x1xf32> to vector<16x128xf32>
      %251 = arith.subf %239, %250 : vector<16x128xf32>
      %252 = arith.mulf %251, %251 : vector<16x128xf32>
      %cst_96 = arith.constant dense<0.000000e+00> : vector<16xf32>
      %253 = vector.multi_reduction <add>, %252, %cst_96 [1] : vector<16x128xf32> to vector<16xf32>
      %254 = vector.shape_cast %253 : vector<16xf32> to vector<16x1xf32>
      %cst_97 = arith.constant 1.280000e+02 : f32
      %255 = vector.broadcast %cst_97 : f32 to vector<16x1xf32>
      %256 = arith.divf %254, %255 : vector<16x1xf32>
      %257 = vector.broadcast %249 : vector<16x1xf32> to vector<16x128xf32>
      %258 = arith.subf %239, %257 : vector<16x128xf32>
      %cst_98 = arith.constant 9.99999997E-7 : f32
      %259 = vector.broadcast %cst_98 : f32 to vector<16x1xf32>
      %260 = arith.addf %256, %259 : vector<16x1xf32>
      %261 = math.rsqrt %260 : vector<16x1xf32>
      %262 = vector.broadcast %261 : vector<16x1xf32> to vector<16x128xf32>
      %263 = arith.mulf %258, %262 : vector<16x128xf32>
      %264 = vector.broadcast %244 : vector<1x128xf32> to vector<16x128xf32>
      %265 = arith.mulf %263, %264 : vector<16x128xf32>
      %266 = vector.broadcast %245 : vector<1x128xf32> to vector<16x128xf32>
      %267 = arith.addf %265, %266 : vector<16x128xf32>
      %c0_99 = arith.constant 0 : index
      %c0_100 = arith.constant 0 : index
      %c0_101 = arith.constant 0 : index
      %268 = vector.load %arg19[%c0_99, %c0_100, %c0_101] : memref<1x16x128xf32, #tpu.memory_space<vmem>>, vector<1x16x128xf32>
      %269 = vector.shape_cast %268 : vector<1x16x128xf32> to vector<16x128xf32>
      %270 = vector.shape_cast %267 : vector<16x128xf32> to vector<1x16x128xf32>
      tpu.vector_store %arg19[%c0_99, %c0_100, %c0_101], %270 {strides = array<i32>} : memref<1x16x128xf32, #tpu.memory_space<vmem>>, vector<1x16x128xf32>,
    } else {
    }
    return
  }
  func.func @transform_0(%arg0: i32, %arg1: i32) -> (i32, i32, i32) {
    %c0_i32 = arith.constant 0 : i32
    %c0_i32_0 = arith.constant 0 : i32
    %c0_i32_1 = arith.constant 0 : i32
    return %arg0, %c0_i32, %c0_i32_0 : i32, i32, i32
  }
  func.func @transform_1(%arg0: i32, %arg1: i32) -> (i32, i32, i32) {
    %c0_i32 = arith.constant 0 : i32
    %c0_i32_0 = arith.constant 0 : i32
    %c0_i32_1 = arith.constant 0 : i32
    return %arg1, %c0_i32, %c0_i32_0 : i32, i32, i32
  }
  func.func @transform_2(%arg0: i32, %arg1: i32) -> (i32, i32, i32) {
    %c0_i32 = arith.constant 0 : i32
    %c0_i32_0 = arith.constant 0 : i32
    %c0_i32_1 = arith.constant 0 : i32
    return %arg1, %c0_i32, %c0_i32_0 : i32, i32, i32
  }
  func.func @transform_3(%arg0: i32, %arg1: i32) -> (i32, i32, i32) {
    %c0_i32 = arith.constant 0 : i32
    %c0_i32_0 = arith.constant 0 : i32
    %c0_i32_1 = arith.constant 0 : i32
    return %arg1, %c0_i32, %c0_i32_0 : i32, i32, i32
  }
  func.func @transform_4(%arg0: i32, %arg1: i32) -> (i32, i32, i32) {
    %c0_i32 = arith.constant 0 : i32
    %c0_i32_0 = arith.constant 0 : i32
    %c0_i32_1 = arith.constant 0 : i32
    return %arg1, %c0_i32, %c0_i32_0 : i32, i32, i32
  }
  func.func @transform_5(%arg0: i32, %arg1: i32) -> (i32, i32, i32) {
    %c0_i32 = arith.constant 0 : i32
    %c0_i32_0 = arith.constant 0 : i32
    %c0_i32_1 = arith.constant 0 : i32
    return %arg1, %c0_i32, %c0_i32_0 : i32, i32, i32
  }
  func.func @transform_6(%arg0: i32, %arg1: i32) -> (i32, i32, i32) {
    %c0_i32 = arith.constant 0 : i32
    %c0_i32_0 = arith.constant 0 : i32
    %c0_i32_1 = arith.constant 0 : i32
    return %arg1, %c0_i32, %c0_i32_0 : i32, i32, i32
  }
  func.func @transform_7(%arg0: i32, %arg1: i32) -> (i32, i32, i32) {
    %c0_i32 = arith.constant 0 : i32
    %c0_i32_0 = arith.constant 0 : i32
    %c0_i32_1 = arith.constant 0 : i32
    return %arg1, %c0_i32, %c0_i32_0 : i32, i32, i32
  }
  func.func @transform_8(%arg0: i32, %arg1: i32) -> (i32, i32, i32) {
    %c0_i32 = arith.constant 0 : i32
    %c0_i32_0 = arith.constant 0 : i32
    %c0_i32_1 = arith.constant 0 : i32
    return %arg1, %c0_i32, %c0_i32_0 : i32, i32, i32
  }
  func.func @transform_9(%arg0: i32, %arg1: i32) -> (i32, i32, i32) {
    %c0_i32 = arith.constant 0 : i32
    %c0_i32_0 = arith.constant 0 : i32
    %c0_i32_1 = arith.constant 0 : i32
    return %arg1, %c0_i32, %c0_i32_0 : i32, i32, i32
  }
  func.func @transform_10(%arg0: i32, %arg1: i32) -> (i32, i32, i32) {
    %c0_i32 = arith.constant 0 : i32
    %c0_i32_0 = arith.constant 0 : i32
    %c0_i32_1 = arith.constant 0 : i32
    return %arg1, %c0_i32, %c0_i32_0 : i32, i32, i32
  }
  func.func @transform_11(%arg0: i32, %arg1: i32) -> (i32, i32, i32) {
    %c0_i32 = arith.constant 0 : i32
    %c0_i32_0 = arith.constant 0 : i32
    %c0_i32_1 = arith.constant 0 : i32
    return %arg1, %c0_i32, %c0_i32_0 : i32, i32, i32
  }
  func.func @transform_12(%arg0: i32, %arg1: i32) -> (i32, i32, i32) {
    %c0_i32 = arith.constant 0 : i32
    %c0_i32_0 = arith.constant 0 : i32
    %c0_i32_1 = arith.constant 0 : i32
    return %arg1, %c0_i32, %c0_i32_0 : i32, i32, i32
  }
  func.func @transform_13(%arg0: i32, %arg1: i32) -> (i32, i32, i32) {
    %c0_i32 = arith.constant 0 : i32
    %c0_i32_0 = arith.constant 0 : i32
    %c0_i32_1 = arith.constant 0 : i32
    return %arg1, %c0_i32, %c0_i32_0 : i32, i32, i32
  }
  func.func @transform_14(%arg0: i32, %arg1: i32) -> (i32, i32, i32) {
    %c0_i32 = arith.constant 0 : i32
    %c0_i32_0 = arith.constant 0 : i32
    %c0_i32_1 = arith.constant 0 : i32
    return %arg1, %c0_i32, %c0_i32_0 : i32, i32, i32
  }
  func.func @transform_15(%arg0: i32, %arg1: i32) -> (i32, i32) {
    %c0_i32 = arith.constant 0 : i32
    %c0_i32_0 = arith.constant 0 : i32
    %c0_i32_1 = arith.constant 0 : i32
    return %c0_i32, %c0_i32_0 : i32, i32
  }
  func.func @transform_16(%arg0: i32, %arg1: i32) -> (i32, i32) {
    %c0_i32 = arith.constant 0 : i32
    %c0_i32_0 = arith.constant 0 : i32
    %c0_i32_1 = arith.constant 0 : i32
    return %c0_i32, %c0_i32_0 : i32, i32
  }
  func.func @transform_17(%arg0: i32, %arg1: i32) -> (i32, i32, i32) {
    %c0_i32 = arith.constant 0 : i32
    %c0_i32_0 = arith.constant 0 : i32
    %c0_i32_1 = arith.constant 0 : i32
    return %arg0, %c0_i32, %c0_i32_0 : i32, i32, i32
  }
}

</mosaic_0001>

<llo_original>
// kernel: _lambda_.2
$region0: #{_lambda_.2}
  #allocation0 [shape = 'u32[]', space=smem, size = 0x4, offset = 0x4, fixed_abs, tag = 'smem constant byte address 0x4 - core index']
  #allocation1 [shape = 'u32[144,128]{1,0:T(1,128)}', space=vmem, size = 0x12000, scoped, tag = 'internal scratch']
  %s0 = inlined_call_operand.vmem [shape: bf16[8,640], index: 0, kind: input, shape index: {}]
  %s1 = inlined_call_operand.vmem [shape: bf16[640,128], index: 1, kind: input, shape index: {}]
  %s2 = inlined_call_operand.vmem [shape: f32[1,128], index: 2, kind: input, shape index: {}]
  %s3 = inlined_call_operand.vmem [shape: f32[8,128], index: 3, kind: output, shape index: {}]
  %s4 = sld [smem:[#allocation0]]
  $region22: #{_lambda_.2} parent=0
    _
  %s6 = ssub.s32 1, %s4
  %s7 = scalar_select 0, %s6, %s4
  // Predicated region
  $region2: #{_lambda_.2} parent=0 // pred_check
    _
  $region3: #{_lambda_.2} parent=0 // pred_check_branch
    %9 = sbr.rel (0) target = $region5
  $region4: #{_lambda_.2} parent=0 // pred_region
    _
  $region5: #{_lambda_.2} parent=0 // pred_fallthru
    _
  // Predicated region
  $region6: #{_lambda_.2} parent=0 // pred_check
    _
  $region7: #{_lambda_.2} parent=0 // pred_check_branch
    %11 = sbr.rel (0) target = $region9
  $region8: #{_lambda_.2} parent=0 // pred_region
    _
  $region9: #{_lambda_.2} parent=0 // pred_fallthru
    _
  // Predicated region
  $region10: #{_lambda_.2} parent=0 // pred_check
    _
  $region11: #{_lambda_.2} parent=0 // pred_check_branch
    %13 = sbr.rel (0) target = $region13
  $region12: #{_lambda_.2} parent=0 // pred_region
    _
  $region13: #{_lambda_.2} parent=0 // pred_fallthru
    _
  %v15 = vld [vmem:[%s0] sm:$0xff]
  %v16 = vld [vmem:[%s0 + $0x8] sm:$0xff]
  %v17 = vld [vmem:[%s0 + $0x10] sm:$0xf]
  %v18 = vld [vmem:[%s1] sm:$0xf]
  %v19 = vld [vmem:[%s1 + $0x4] sm:$0xf]
  %v20 = vld [vmem:[%s1 + $0x8] sm:$0xf]
  %v21 = vld [vmem:[%s1 + $0xc] sm:$0xf]
  %v22 = vld [vmem:[%s1 + $0x10] sm:$0xf]
  %v23 = vld [vmem:[%s1 + $0x14] sm:$0xf]
  %v24 = vld [vmem:[%s1 + $0x18] sm:$0xf]
  %v25 = vld [vmem:[%s1 + $0x1c] sm:$0xf]
  %v26 = vld [vmem:[%s1 + $0x20] sm:$0xf]
  %v27 = vld [vmem:[%s1 + $0x24] sm:$0xf]
  %v28 = vld [vmem:[%s1 + $0x28] sm:$0xf]
  %v29 = vld [vmem:[%s1 + $0x2c] sm:$0xf]
  %v30 = vld [vmem:[%s1 + $0x30] sm:$0xf]
  %v31 = vld [vmem:[%s1 + $0x34] sm:$0xf]
  %v32 = vld [vmem:[%s1 + $0x38] sm:$0xf]
  %v33 = vld [vmem:[%s1 + $0x3c] sm:$0xf]
  %v34 = vld [vmem:[%s1 + $0x40] sm:$0xf]
  %v35 = vld [vmem:[%s1 + $0x44] sm:$0xf]
  %v36 = vld [vmem:[%s1 + $0x48] sm:$0xf]
  %v37 = vld [vmem:[%s1 + $0x4c] sm:$0xf]
  %v38 = vld [vmem:[%s1 + $0x50] sm:$0xf]
  %v39 = vld [vmem:[%s1 + $0x54] sm:$0xf]
  %v40 = vld [vmem:[%s1 + $0x58] sm:$0xf]
  %v41 = vld [vmem:[%s1 + $0x5c] sm:$0xf]
  %v42 = vld [vmem:[%s1 + $0x60] sm:$0xf]
  %v43 = vld [vmem:[%s1 + $0x64] sm:$0xf]
  %v44 = vld [vmem:[%s1 + $0x68] sm:$0xf]
  %v45 = vld [vmem:[%s1 + $0x6c] sm:$0xf]
  %v46 = vld [vmem:[%s1 + $0x70] sm:$0xf]
  %v47 = vld [vmem:[%s1 + $0x74] sm:$0xf]
  %v48 = vld [vmem:[%s1 + $0x78] sm:$0xf]
  %v49 = vld [vmem:[%s1 + $0x7c] sm:$0xf]
  %v50 = vld [vmem:[%s1 + $0x80] sm:$0xf]
  %v51 = vld [vmem:[%s1 + $0x84] sm:$0xf]
  %v52 = vld [vmem:[%s1 + $0x88] sm:$0xf]
  %v53 = vld [vmem:[%s1 + $0x8c] sm:$0xf]
  %v54 = vld [vmem:[%s1 + $0x90] sm:$0xf]
  %v55 = vld [vmem:[%s1 + $0x94] sm:$0xf]
  %v56 = vld [vmem:[%s1 + $0x98] sm:$0xf]
  %v57 = vld [vmem:[%s1 + $0x9c] sm:$0xf]
  %v58 = vld [vmem:[%s1 + $0xa0] sm:$0xf]
  %v59 = vld [vmem:[%s1 + $0xa4] sm:$0xf]
  %v60 = vld [vmem:[%s1 + $0xa8] sm:$0xf]
  %v61 = vld [vmem:[%s1 + $0xac] sm:$0xf]
  %v62 = vld [vmem:[%s1 + $0xb0] sm:$0xf]
  %v63 = vld [vmem:[%s1 + $0xb4] sm:$0xf]
  %v64 = vld [vmem:[%s1 + $0xb8] sm:$0xf]
  %v65 = vld [vmem:[%s1 + $0xbc] sm:$0xf]
  %v66 = vld [vmem:[%s1 + $0xc0] sm:$0xf]
  %v67 = vld [vmem:[%s1 + $0xc4] sm:$0xf]
  %v68 = vld [vmem:[%s1 + $0xc8] sm:$0xf]
  %v69 = vld [vmem:[%s1 + $0xcc] sm:$0xf]
  %v70 = vld [vmem:[%s1 + $0xd0] sm:$0xf]
  %v71 = vld [vmem:[%s1 + $0xd4] sm:$0xf]
  %v72 = vld [vmem:[%s1 + $0xd8] sm:$0xf]
  %v73 = vld [vmem:[%s1 + $0xdc] sm:$0xf]
  %v74 = vld [vmem:[%s1 + $0xe0] sm:$0xf]
  %v75 = vld [vmem:[%s1 + $0xe4] sm:$0xf]
  %v76 = vld [vmem:[%s1 + $0xe8] sm:$0xf]
  %v77 = vld [vmem:[%s1 + $0xec] sm:$0xf]
  %v78 = vld [vmem:[%s1 + $0xf0] sm:$0xf]
  %v79 = vld [vmem:[%s1 + $0xf4] sm:$0xf]
  %v80 = vld [vmem:[%s1 + $0xf8] sm:$0xf]
  %v81 = vld [vmem:[%s1 + $0xfc] sm:$0xf]
  %v82 = vld [vmem:[%s1 + $0x100] sm:$0xf]
  %v83 = vld [vmem:[%s1 + $0x104] sm:$0xf]
  %v84 = vld [vmem:[%s1 + $0x108] sm:$0xf]
  %v85 = vld [vmem:[%s1 + $0x10c] sm:$0xf]
  %v86 = vld [vmem:[%s1 + $0x110] sm:$0xf]
  %v87 = vld [vmem:[%s1 + $0x114] sm:$0xf]
  %v88 = vld [vmem:[%s1 + $0x118] sm:$0xf]
  %v89 = vld [vmem:[%s1 + $0x11c] sm:$0xf]
  %v90 = vld [vmem:[%s1 + $0x120] sm:$0xf]
  %v91 = vld [vmem:[%s1 + $0x124] sm:$0xf]
  %v92 = vld [vmem:[%s1 + $0x128] sm:$0xf]
  %v93 = vld [vmem:[%s1 + $0x12c] sm:$0xf]
  %v94 = vld [vmem:[%s1 + $0x130] sm:$0xf]
  %v95 = vld [vmem:[%s1 + $0x134] sm:$0xf]
  %v96 = vld [vmem:[%s1 + $0x138] sm:$0xf]
  %v97 = vld [vmem:[%s1 + $0x13c] sm:$0xf]
  %v98 = vld [vmem:[%s2] sm:$0x1]
  %v100 = vlaneseq
  %v101 = vshrl.u32 %v100, 7
  %v102 = vsub.s32 0, %v101
  %v103 = vrot.slane %v98, %v102
  %v108 = vunpack.c.l.b16 %v15
  %v109 = vunpack.c.h.b16 %v15
  %v110 = vunpack.c.l.b16 %v16
  %v111 = vunpack.c.h.b16 %v16
  %v112 = vunpack.c.l.b16 %v17
  %v113 = vpack.c.b16 %v108, %v108
  %v114 = vpack.c.b16 %v109, %v109
  %v115 = vpack.c.b16 %v110, %v110
  %v116 = vpack.c.b16 %v111, %v111
  %v117 = vpack.c.b16 %v112, %v112
  %v203 = vunpack.c.l.b16 %v18
  %v204 = vunpack.c.l.b16 %v19
  %v205 = vunpack.c.l.b16 %v20
  %v206 = vunpack.c.l.b16 %v21
  %v207 = vunpack.c.l.b16 %v22
  %v208 = vunpack.c.l.b16 %v23
  %v209 = vunpack.c.l.b16 %v24
  %v210 = vunpack.c.l.b16 %v25
  %v211 = vunpack.c.l.b16 %v26
  %v212 = vunpack.c.l.b16 %v27
  %v213 = vunpack.c.l.b16 %v28
  %v214 = vunpack.c.l.b16 %v29
  %v215 = vunpack.c.l.b16 %v30
  %v216 = vunpack.c.l.b16 %v31
  %v217 = vunpack.c.l.b16 %v32
  %v218 = vunpack.c.l.b16 %v33
  %v219 = vunpack.c.l.b16 %v34
  %v220 = vunpack.c.l.b16 %v35
  %v221 = vunpack.c.l.b16 %v36
  %v222 = vunpack.c.l.b16 %v37
  %v223 = vunpack.c.l.b16 %v38
  %v224 = vunpack.c.l.b16 %v39
  %v225 = vunpack.c.l.b16 %v40
  %v226 = vunpack.c.l.b16 %v41
  %v227 = vunpack.c.l.b16 %v42
  %v228 = vunpack.c.l.b16 %v43
  %v229 = vunpack.c.l.b16 %v44
  %v230 = vunpack.c.l.b16 %v45
  %v231 = vunpack.c.l.b16 %v46
  %v232 = vunpack.c.l.b16 %v47
  %v233 = vunpack.c.l.b16 %v48
  %v234 = vunpack.c.l.b16 %v49
  %v235 = vunpack.c.l.b16 %v50
  %v236 = vunpack.c.l.b16 %v51
  %v237 = vunpack.c.l.b16 %v52
  %v238 = vunpack.c.l.b16 %v53
  %v239 = vunpack.c.l.b16 %v54
  %v240 = vunpack.c.l.b16 %v55
  %v241 = vunpack.c.l.b16 %v56
  %v242 = vunpack.c.l.b16 %v57
  %v243 = vunpack.c.l.b16 %v58
  %v244 = vunpack.c.l.b16 %v59
  %v245 = vunpack.c.l.b16 %v60
  %v246 = vunpack.c.l.b16 %v61
  %v247 = vunpack.c.l.b16 %v62
  %v248 = vunpack.c.l.b16 %v63
  %v249 = vunpack.c.l.b16 %v64
  %v250 = vunpack.c.l.b16 %v65
  %v251 = vunpack.c.l.b16 %v66
  %v252 = vunpack.c.l.b16 %v67
  %v253 = vunpack.c.l.b16 %v68
  %v254 = vunpack.c.l.b16 %v69
  %v255 = vunpack.c.l.b16 %v70
  %v256 = vunpack.c.l.b16 %v71
  %v257 = vunpack.c.l.b16 %v72
  %v258 = vunpack.c.l.b16 %v73
  %v259 = vunpack.c.l.b16 %v74
  %v260 = vunpack.c.l.b16 %v75
  %v261 = vunpack.c.l.b16 %v76
  %v262 = vunpack.c.l.b16 %v77
  %v263 = vunpack.c.l.b16 %v78
  %v264 = vunpack.c.l.b16 %v79
  %v265 = vunpack.c.l.b16 %v80
  %v266 = vunpack.c.l.b16 %v81
  %v267 = vunpack.c.l.b16 %v82
  %v268 = vunpack.c.l.b16 %v83
  %v269 = vunpack.c.l.b16 %v84
  %v270 = vunpack.c.l.b16 %v85
  %v271 = vunpack.c.l.b16 %v86
  %v272 = vunpack.c.l.b16 %v87
  %v273 = vunpack.c.l.b16 %v88
  %v274 = vunpack.c.l.b16 %v89
  %v275 = vunpack.c.l.b16 %v90
  %v276 = vunpack.c.l.b16 %v91
  %v277 = vunpack.c.l.b16 %v92
  %v278 = vunpack.c.l.b16 %v93
  %v279 = vunpack.c.l.b16 %v94
  %v280 = vunpack.c.l.b16 %v95
  %v281 = vunpack.c.l.b16 %v96
  %v282 = vunpack.c.l.b16 %v97
  %v283 = vpack.c.b16 %v204, %v203
  %v284 = vpack.c.b16 %v206, %v205
  %v285 = vpack.c.b16 %v208, %v207
  %v286 = vpack.c.b16 %v210, %v209
  %v287 = vpack.c.b16 %v212, %v211
  %v288 = vpack.c.b16 %v214, %v213
  %v289 = vpack.c.b16 %v216, %v215
  %v290 = vpack.c.b16 %v218, %v217
  %v291 = vpack.c.b16 %v220, %v219
  %v292 = vpack.c.b16 %v222, %v221
  %v293 = vpack.c.b16 %v224, %v223
  %v294 = vpack.c.b16 %v226, %v225
  %v295 = vpack.c.b16 %v228, %v227
  %v296 = vpack.c.b16 %v230, %v229
  %v297 = vpack.c.b16 %v232, %v231
  %v298 = vpack.c.b16 %v234, %v233
  %v299 = vpack.c.b16 %v236, %v235
  %v300 = vpack.c.b16 %v238, %v237
  %v301 = vpack.c.b16 %v240, %v239
  %v302 = vpack.c.b16 %v242, %v241
  %v303 = vpack.c.b16 %v244, %v243
  %v304 = vpack.c.b16 %v246, %v245
  %v305 = vpack.c.b16 %v248, %v247
  %v306 = vpack.c.b16 %v250, %v249
  %v307 = vpack.c.b16 %v252, %v251
  %v308 = vpack.c.b16 %v254, %v253
  %v309 = vpack.c.b16 %v256, %v255
  %v310 = vpack.c.b16 %v258, %v257
  %v311 = vpack.c.b16 %v260, %v259
  %v312 = vpack.c.b16 %v262, %v261
  %v313 = vpack.c.b16 %v264, %v263
  %v314 = vpack.c.b16 %v266, %v265
  %v315 = vpack.c.b16 %v268, %v267
  %v316 = vpack.c.b16 %v270, %v269
  %v317 = vpack.c.b16 %v272, %v271
  %v318 = vpack.c.b16 %v274, %v273
  %v319 = vpack.c.b16 %v276, %v275
  %v320 = vpack.c.b16 %v278, %v277
  %v321 = vpack.c.b16 %v280, %v279
  %v322 = vpack.c.b16 %v282, %v281
  %363 = vmatprep.subr.bf16.mxu0 0
  %364 = vmatpush1.bf16.msra.mxu0 %v283
  %365 = vmatprep.subr.bf16.mxu0 0
  %366 = vmatpush1.bf16.msra.mxu0 %v284
  %367 = vmatprep.subr.bf16.mxu0 0
  %368 = vmatpush1.bf16.msra.mxu0 %v285
  %369 = vmatprep.subr.bf16.mxu0 0
  %370 = vmatpush1.bf16.msra.mxu0 %v286
  %371 = vmatprep.subr.bf16.mxu0 0
  %372 = vmatpush1.bf16.msra.mxu0 %v287
  %373 = vmatprep.subr.bf16.mxu0 0
  %374 = vmatpush1.bf16.msra.mxu0 %v288
  %375 = vmatprep.subr.bf16.mxu0 0
  %376 = vmatpush1.bf16.msra.mxu0 %v289
  %377 = vmatprep.subr.bf16.mxu0 0
  %378 = vmatpush1.bf16.msra.mxu0 %v290
  %379 = vmatprep.subr.bf16.mxu0 0
  %380 = vmatpush1.bf16.msra.mxu0 %v291
  %381 = vmatprep.subr.bf16.mxu0 0
  %382 = vmatpush1.bf16.msra.mxu0 %v292
  %383 = vmatprep.subr.bf16.mxu0 0
  %384 = vmatpush1.bf16.msra.mxu0 %v293
  %385 = vmatprep.subr.bf16.mxu0 0
  %386 = vmatpush1.bf16.msra.mxu0 %v294
  %387 = vmatprep.subr.bf16.mxu0 0
  %388 = vmatpush1.bf16.msra.mxu0 %v295
  %389 = vmatprep.subr.bf16.mxu0 0
  %390 = vmatpush1.bf16.msra.mxu0 %v296
  %391 = vmatprep.subr.bf16.mxu0 0
  %392 = vmatpush1.bf16.msra.mxu0 %v297
  %393 = vmatprep.subr.bf16.mxu0 0
  %394 = vmatpush1.bf16.msra.mxu0 %v298
  %395 = vmatprep.mubr.bf16.mxu0 %v114
  %396 = vmatmul.mubr.bf16.gmra.mrb[0].mxu0 %v113
  %v397 = vpop.f32.mrb[0].mxu0
  %v398 = vadd.f32 %v103, %v397
  %v399 = vpop.f32.mrb[0].mxu0
  %v400 = vpop.f32.mrb[0].mxu0
  %v401 = vpop.f32.mrb[0].mxu0
  %402 = vdwg.mxu0
  %403 = vmatprep.subr.bf16.mxu0 0
  %404 = vmatpush1.bf16.msra.mxu0 %v299
  %405 = vmatprep.subr.bf16.mxu0 0
  %406 = vmatpush1.bf16.msra.mxu0 %v300
  %407 = vmatprep.subr.bf16.mxu0 0
  %408 = vmatpush1.bf16.msra.mxu0 %v301
  %409 = vmatprep.subr.bf16.mxu0 0
  %410 = vmatpush1.bf16.msra.mxu0 %v302
  %411 = vmatprep.subr.bf16.mxu0 0
  %412 = vmatpush1.bf16.msra.mxu0 %v303
  %413 = vmatprep.subr.bf16.mxu0 0
  %414 = vmatpush1.bf16.msra.mxu0 %v304
  %415 = vmatprep.subr.bf16.mxu0 0
  %416 = vmatpush1.bf16.msra.mxu0 %v305
  %417 = vmatprep.subr.bf16.mxu0 0
  %418 = vmatpush1.bf16.msra.mxu0 %v306
  %419 = vmatprep.subr.bf16.mxu0 0
  %420 = vmatpush1.bf16.msra.mxu0 %v307
  %421 = vmatprep.subr.bf16.mxu0 0
  %422 = vmatpush1.bf16.msra.mxu0 %v308
  %423 = vmatprep.subr.bf16.mxu0 0
  %424 = vmatpush1.bf16.msra.mxu0 %v309
  %425 = vmatprep.subr.bf16.mxu0 0
  %426 = vmatpush1.bf16.msra.mxu0 %v310
  %427 = vmatprep.subr.bf16.mxu0 0
  %428 = vmatpush1.bf16.msra.mxu0 %v311
  %429 = vmatprep.subr.bf16.mxu0 0
  %430 = vmatpush1.bf16.msra.mxu0 %v312
  %431 = vmatprep.subr.bf16.mxu0 0
  %432 = vmatpush1.bf16.msra.mxu0 %v313
  %433 = vmatprep.subr.bf16.mxu0 0
  %434 = vmatpush1.bf16.msra.mxu0 %v314
  %435 = vmatprep.mubr.bf16.mxu0 %v116
  %436 = vmatmul.mubr.bf16.gmra.mrb[0].mxu0 %v115
  %v437 = vpop.f32.mrb[0].mxu0
  %v438 = vadd.f32 %v398, %v437
  %v439 = vpop.f32.mrb[0].mxu0
  %v440 = vpop.f32.mrb[0].mxu0
  %v441 = vpop.f32.mrb[0].mxu0
  %442 = vdwg.mxu0
  %443 = vmatprep.subr.bf16.mxu0 0
  %444 = vmatpush1.bf16.msra.mxu0 %v315
  %445 = vmatprep.subr.bf16.mxu0 0
  %446 = vmatpush1.bf16.msra.mxu0 %v316
  %447 = vmatprep.subr.bf16.mxu0 0
  %448 = vmatpush1.bf16.msra.mxu0 %v317
  %449 = vmatprep.subr.bf16.mxu0 0
  %450 = vmatpush1.bf16.msra.mxu0 %v318
  %451 = vmatprep.subr.bf16.mxu0 0
  %452 = vmatpush1.bf16.msra.mxu0 %v319
  %453 = vmatprep.subr.bf16.mxu0 0
  %454 = vmatpush1.bf16.msra.mxu0 %v320
  %455 = vmatprep.subr.bf16.mxu0 0
  %456 = vmatpush1.bf16.msra.mxu0 %v321
  %457 = vmatprep.subr.bf16.mxu0 0
  %458 = vmatpush1.bf16.msra.mxu0 %v322
  %459 = vmatprep.subr.bf16.mxu0 0
  %460 = vmatpush1.bf16.msra.mxu0 0
  %461 = vmatprep.subr.bf16.mxu0 0
  %462 = vmatpush1.bf16.msra.mxu0 0
  %463 = vmatprep.subr.bf16.mxu0 0
  %464 = vmatpush1.bf16.msra.mxu0 0
  %465 = vmatprep.subr.bf16.mxu0 0
  %466 = vmatpush1.bf16.msra.mxu0 0
  %467 = vmatprep.subr.bf16.mxu0 0
  %468 = vmatpush1.bf16.msra.mxu0 0
  %469 = vmatprep.subr.bf16.mxu0 0
  %470 = vmatpush1.bf16.msra.mxu0 0
  %471 = vmatprep.subr.bf16.mxu0 0
  %472 = vmatpush1.bf16.msra.mxu0 0
  %473 = vmatprep.subr.bf16.mxu0 0
  %474 = vmatpush1.bf16.msra.mxu0 0
  %475 = vmatprep.mubr.bf16.mxu0 0
  %476 = vmatmul.mubr.bf16.gmra.mrb[0].mxu0 %v117
  %v477 = vpop.f32.mrb[0].mxu0
  %v478 = vadd.f32 %v438, %v477
  %v479 = vpop.f32.mrb[0].mxu0
  %v480 = vpop.f32.mrb[0].mxu0
  %v481 = vpop.f32.mrb[0].mxu0
  %482 = vdwg.mxu0
  %483 = vst [vmem:[%s3] sm:$0xff] %v478
  // Predicated region
  $region14: #{_lambda_.2} parent=0 // pred_check
    _
  $region15: #{_lambda_.2} parent=0 // pred_check_branch
    %485 = sbr.rel (0) target = $region17
  $region16: #{_lambda_.2} parent=0 // pred_region
    _
  $region17: #{_lambda_.2} parent=0 // pred_fallthru
    _
  // Predicated region
  $region18: #{_lambda_.2} parent=0 // pred_check
    _
  $region19: #{_lambda_.2} parent=0 // pred_check_branch
    %487 = sbr.rel (0) target = $region21
  $region20: #{_lambda_.2} parent=0 // pred_region
    _
  $region21: #{_lambda_.2} parent=0 // pred_fallthru
    _

// kernel: _lambda_.3
$region0: #{_lambda_.3}
  #allocation0 [shape = 'u32[]', space=smem, size = 0x4, offset = 0x4, fixed_abs, tag = 'smem constant byte address 0x4 - core index']
  #allocation1 [shape = 'u32[144,128]{1,0:T(1,128)}', space=vmem, size = 0x12000, scoped, tag = 'internal scratch']
  #allocation2 [shape = 'f32[16,128]{1,0:T(8,128)}', space=vmem, size = 0x2000, scoped, tag = 'scratch operand']
  %s0 = inlined_call_operand.vmem [shape: f32[2,16,128], index: 0, kind: input, shape index: {}]
  %s1 = inlined_call_operand.vmem [shape: f32[2,1,128], index: 1, kind: input, shape index: {}, may-alias: {1,8}]
  %s2 = inlined_call_operand.vmem [shape: f32[2,1,128], index: 2, kind: input, shape index: {}, may-alias: {2,6,9,13}]
  %s3 = inlined_call_operand.vmem [shape: bf16[2,128,384], index: 3, kind: input, shape index: {}]
  %s4 = inlined_call_operand.vmem [shape: f32[2,1,384], index: 4, kind: input, shape index: {}]
  %s5 = inlined_call_operand.vmem [shape: bf16[2,128,128], index: 5, kind: input, shape index: {}]
  %s6 = inlined_call_operand.vmem [shape: f32[2,1,128], index: 6, kind: input, shape index: {}, may-alias: {2,6,9,13}]
  %s7 = inlined_call_operand.vmem [shape: f32[2,1,128], index: 7, kind: input, shape index: {}, may-alias: {7,14}]
  %s8 = inlined_call_operand.vmem [shape: f32[2,1,128], index: 8, kind: input, shape index: {}, may-alias: {1,8}]
  %s9 = inlined_call_operand.vmem [shape: f32[2,1,128], index: 9, kind: input, shape index: {}, may-alias: {2,6,9,13}]
  %s10 = inlined_call_operand.vmem [shape: bf16[2,128,512], index: 10, kind: input, shape index: {}]
  %s11 = inlined_call_operand.vmem [shape: f32[2,1,512], index: 11, kind: input, shape index: {}]
  %s12 = inlined_call_operand.vmem [shape: bf16[2,512,128], index: 12, kind: input, shape index: {}]
  %s13 = inlined_call_operand.vmem [shape: f32[2,1,128], index: 13, kind: input, shape index: {}, may-alias: {2,6,9,13}]
  %s14 = inlined_call_operand.vmem [shape: f32[2,1,128], index: 14, kind: input, shape index: {}, may-alias: {7,14}]
  %s15 = inlined_call_operand.vmem [shape: f32[1,128], index: 15, kind: input, shape index: {}]
  %s16 = inlined_call_operand.vmem [shape: f32[1,128], index: 16, kind: input, shape index: {}]
  %s17 = inlined_call_operand.vmem [shape: f32[2,16,128], index: 17, kind: output, shape index: {}]
  %s18 = sld [smem:[#allocation0]]
  $region109: #{_lambda_.3} parent=0
    _
  %s20 = ssub.s32 1, %s18
  %s21 = scalar_select 0, %s20, %s18
  loop: start=0, step=1, limit=6
  $region2: #{_lambda_.3} parent=0 // loop_pre_header
    _
  $region3: #{_lambda_.3} parent=0 // loop_header
    %s23 = sphi 0, %s27
    %p24 = scmp.ge.s32.totalorder %s23, 6
    %s30 = sphi 0, %s42
    %s31 = sphi 0, %s38
    %s32 = sphi 0, %s30
    %s33 = sphi 0, %s31
    %s34 = sphi 0, %s32
    %s35 = sphi 0, %s33
    %s45 = sphi 0, %s47
    %s48 = sphi 0, %s45
    %s49 = sphi 0, %s48
    %s65 = sphi 0, %s49
    %s71 = sphi 0, %s73
    %s74 = sphi 0, %s71
    %s75 = sphi 0, %s74
    %s91 = sphi 0, %s75
    %s97 = sphi 0, %s99
    %s100 = sphi 0, %s97
    %s101 = sphi 0, %s100
    %s117 = sphi 0, %s101
    %s123 = sphi 0, %s125
    %s126 = sphi 0, %s123
    %s127 = sphi 0, %s126
    %s143 = sphi 0, %s127
    %s149 = sphi 0, %s151
    %s152 = sphi 0, %s149
    %s153 = sphi 0, %s152
    %s169 = sphi 0, %s153
    %s175 = sphi 0, %s177
    %s178 = sphi 0, %s175
    %s179 = sphi 0, %s178
    %s195 = sphi 0, %s179
    %s201 = sphi 0, %s203
    %s204 = sphi 0, %s201
    %s205 = sphi 0, %s204
    %s221 = sphi 0, %s205
    %s227 = sphi 0, %s229
    %s230 = sphi 0, %s227
    %s231 = sphi 0, %s230
    %s247 = sphi 0, %s231
    %s253 = sphi 0, %s255
    %s256 = sphi 0, %s253
    %s257 = sphi 0, %s256
    %s273 = sphi 0, %s257
    %s279 = sphi 0, %s281
    %s282 = sphi 0, %s279
    %s283 = sphi 0, %s282
    %s299 = sphi 0, %s283
    %s305 = sphi 0, %s307
    %s308 = sphi 0, %s305
    %s309 = sphi 0, %s308
    %s325 = sphi 0, %s309
    %s331 = sphi 0, %s333
    %s334 = sphi 0, %s331
    %s335 = sphi 0, %s334
    %s351 = sphi 0, %s335
    %s357 = sphi 0, %s359
    %s360 = sphi 0, %s357
    %s361 = sphi 0, %s360
    %s377 = sphi 0, %s361
    %s383 = sphi 0, %s385
    %s386 = sphi 0, %s383
    %s387 = sphi 0, %s386
    %s403 = sphi 0, %s387
    %s409 = sphi 0, %s411
    %s412 = sphi 0, %s409
    %s413 = sphi 0, %s412
    %s429 = sphi 0, %s413
    %s433 = sphi 0, %s433
    %s435 = sphi 0, %s433
    %s436 = sphi 0, %s435
    %s450 = sphi 0, %s436
    %s454 = sphi 0, %s454
    %s456 = sphi 0, %s454
    %s457 = sphi 0, %s456
    %s471 = sphi 0, %s457
    %s477 = sphi 0, %s479
    %s480 = sphi 0, %s477
    %s481 = sphi 0, %s480
    %s497 = sphi 0, %s481
  $region4: #{_lambda_.3} parent=0 // loop_header_branch
    %26 = sbr.rel (%p24) target = $region8
  $region5: #{_lambda_.3} parent=0 // loop_body
    %s28 = ssub.s32 %s23, 1
    %s29 = ssub.s32 %s23, 2
    %s36 = sadd.s32 1, %s31
    %p37 = scmp.ge.s32.totalorder %s36, 2
    %s38 = scalar_select %p37, 0, %s36
    %s39 = sadd.s32 1, %s30
    %s40 = scalar_select %p37, %s39, %s30
    %p41 = scmp.ge.s32.totalorder %s40, 2
    %s42 = scalar_select %p41, 0, %s40
    %s43 = ssub.s32 %s30, %s42
    %p44 = scmp.eq.s32.totalorder %s43, 0
    %s46 = sadd.s32 %s45, 1
    %s47 = scalar_select %p44, %s45, %s46
    %p50 = pneg %p44
    %p51 = scmp.eq.s32.totalorder %s23, 3
    %p52 = por %p50, %p51
    %p53 = scmp.ne.s32.totalorder %s45, %s48
    %p54 = scmp.eq.s32.totalorder %s23, 0
    %p55 = por %p53, %p54
    %p56 = scmp.ne.s32.totalorder %s45, %s48
    %p57 = scmp.eq.s32.totalorder %s28, 3
    %p58 = por %p56, %p57
    %p59 = scmp.ne.s32.totalorder %s48, %s49
    %p60 = scmp.eq.s32.totalorder %s28, 0
    %p61 = por %p59, %p60
    %p62 = scmp.ne.s32.totalorder %s48, %s49
    %p63 = scmp.eq.s32.totalorder %s29, 3
    %p64 = por %p62, %p63
    %p66 = scmp.ne.s32.totalorder %s49, %s65
    %p67 = scmp.eq.s32.totalorder %s29, 0
    %p68 = por %p66, %p67
    %s69 = ssub.s32 %s31, %s38
    %p70 = scmp.eq.s32.totalorder %s69, 0
    %s72 = sadd.s32 %s71, 1
    %s73 = scalar_select %p70, %s71, %s72
    %p76 = pneg %p70
    %p77 = scmp.eq.s32.totalorder %s23, 3
    %p78 = por %p76, %p77
    %p79 = scmp.ne.s32.totalorder %s71, %s74
    %p80 = scmp.eq.s32.totalorder %s23, 0
    %p81 = por %p79, %p80
    %p82 = scmp.ne.s32.totalorder %s71, %s74
    %p83 = scmp.eq.s32.totalorder %s28, 3
    %p84 = por %p82, %p83
    %p85 = scmp.ne.s32.totalorder %s74, %s75
    %p86 = scmp.eq.s32.totalorder %s28, 0
    %p87 = por %p85, %p86
    %p88 = scmp.ne.s32.totalorder %s74, %s75
    %p89 = scmp.eq.s32.totalorder %s29, 3
    %p90 = por %p88, %p89
    %p92 = scmp.ne.s32.totalorder %s75, %s91
    %p93 = scmp.eq.s32.totalorder %s29, 0
    %p94 = por %p92, %p93
    %s95 = ssub.s32 %s31, %s38
    %p96 = scmp.eq.s32.totalorder %s95, 0
    %s98 = sadd.s32 %s97, 1
    %s99 = scalar_select %p96, %s97, %s98
    %p102 = pneg %p96
    %p103 = scmp.eq.s32.totalorder %s23, 3
    %p104 = por %p102, %p103
    %p105 = scmp.ne.s32.totalorder %s97, %s100
    %p106 = scmp.eq.s32.totalorder %s23, 0
    %p107 = por %p105, %p106
    %p108 = scmp.ne.s32.totalorder %s97, %s100
    %p109 = scmp.eq.s32.totalorder %s28, 3
    %p110 = por %p108, %p109
    %p111 = scmp.ne.s32.totalorder %s100, %s101
    %p112 = scmp.eq.s32.totalorder %s28, 0
    %p113 = por %p111, %p112
    %p114 = scmp.ne.s32.totalorder %s100, %s101
    %p115 = scmp.eq.s32.totalorder %s29, 3
    %p116 = por %p114, %p115
    %p118 = scmp.ne.s32.totalorder %s101, %s117
    %p119 = scmp.eq.s32.totalorder %s29, 0
    %p120 = por %p118, %p119
    %s121 = ssub.s32 %s31, %s38
    %p122 = scmp.eq.s32.totalorder %s121, 0
    %s124 = sadd.s32 %s123, 1
    %s125 = scalar_select %p122, %s123, %s124
    %p128 = pneg %p122
    %p129 = scmp.eq.s32.totalorder %s23, 3
    %p130 = por %p128, %p129
    %p131 = scmp.ne.s32.totalorder %s123, %s126
    %p132 = scmp.eq.s32.totalorder %s23, 0
    %p133 = por %p131, %p132
    %p134 = scmp.ne.s32.totalorder %s123, %s126
    %p135 = scmp.eq.s32.totalorder %s28, 3
    %p136 = por %p134, %p135
    %p137 = scmp.ne.s32.totalorder %s126, %s127
    %p138 = scmp.eq.s32.totalorder %s28, 0
    %p139 = por %p137, %p138
    %p140 = scmp.ne.s32.totalorder %s126, %s127
    %p141 = scmp.eq.s32.totalorder %s29, 3
    %p142 = por %p140, %p141
    %p144 = scmp.ne.s32.totalorder %s127, %s143
    %p145 = scmp.eq.s32.totalorder %s29, 0
    %p146 = por %p144, %p145
    %s147 = ssub.s32 %s31, %s38
    %p148 = scmp.eq.s32.totalorder %s147, 0
    %s150 = sadd.s32 %s149, 1
    %s151 = scalar_select %p148, %s149, %s150
    %p154 = pneg %p148
    %p155 = scmp.eq.s32.totalorder %s23, 3
    %p156 = por %p154, %p155
    %p157 = scmp.ne.s32.totalorder %s149, %s152
    %p158 = scmp.eq.s32.totalorder %s23, 0
    %p159 = por %p157, %p158
    %p160 = scmp.ne.s32.totalorder %s149, %s152
    %p161 = scmp.eq.s32.totalorder %s28, 3
    %p162 = por %p160, %p161
    %p163 = scmp.ne.s32.totalorder %s152, %s153
    %p164 = scmp.eq.s32.totalorder %s28, 0
    %p165 = por %p163, %p164
    %p166 = scmp.ne.s32.totalorder %s152, %s153
    %p167 = scmp.eq.s32.totalorder %s29, 3
    %p168 = por %p166, %p167
    %p170 = scmp.ne.s32.totalorder %s153, %s169
    %p171 = scmp.eq.s32.totalorder %s29, 0
    %p172 = por %p170, %p171
    %s173 = ssub.s32 %s31, %s38
    %p174 = scmp.eq.s32.totalorder %s173, 0
    %s176 = sadd.s32 %s175, 1
    %s177 = scalar_select %p174, %s175, %s176
    %p180 = pneg %p174
    %p181 = scmp.eq.s32.totalorder %s23, 3
    %p182 = por %p180, %p181
    %p183 = scmp.ne.s32.totalorder %s175, %s178
    %p184 = scmp.eq.s32.totalorder %s23, 0
    %p185 = por %p183, %p184
    %p186 = scmp.ne.s32.totalorder %s175, %s178
    %p187 = scmp.eq.s32.totalorder %s28, 3
    %p188 = por %p186, %p187
    %p189 = scmp.ne.s32.totalorder %s178, %s179
    %p190 = scmp.eq.s32.totalorder %s28, 0
    %p191 = por %p189, %p190
    %p192 = scmp.ne.s32.totalorder %s178, %s179
    %p193 = scmp.eq.s32.totalorder %s29, 3
    %p194 = por %p192, %p193
    %p196 = scmp.ne.s32.totalorder %s179, %s195
    %p197 = scmp.eq.s32.totalorder %s29, 0
    %p198 = por %p196, %p197
    %s199 = ssub.s32 %s31, %s38
    %p200 = scmp.eq.s32.totalorder %s199, 0
    %s202 = sadd.s32 %s201, 1
    %s203 = scalar_select %p200, %s201, %s202
    %p206 = pneg %p200
    %p207 = scmp.eq.s32.totalorder %s23, 3
    %p208 = por %p206, %p207
    %p209 = scmp.ne.s32.totalorder %s201, %s204
    %p210 = scmp.eq.s32.totalorder %s23, 0
    %p211 = por %p209, %p210
    %p212 = scmp.ne.s32.totalorder %s201, %s204
    %p213 = scmp.eq.s32.totalorder %s28, 3
    %p214 = por %p212, %p213
    %p215 = scmp.ne.s32.totalorder %s204, %s205
    %p216 = scmp.eq.s32.totalorder %s28, 0
    %p217 = por %p215, %p216
    %p218 = scmp.ne.s32.totalorder %s204, %s205
    %p219 = scmp.eq.s32.totalorder %s29, 3
    %p220 = por %p218, %p219
    %p222 = scmp.ne.s32.totalorder %s205, %s221
    %p223 = scmp.eq.s32.totalorder %s29, 0
    %p224 = por %p222, %p223
    %s225 = ssub.s32 %s31, %s38
    %p226 = scmp.eq.s32.totalorder %s225, 0
    %s228 = sadd.s32 %s227, 1
    %s229 = scalar_select %p226, %s227, %s228
    %p232 = pneg %p226
    %p233 = scmp.eq.s32.totalorder %s23, 3
    %p234 = por %p232, %p233
    %p235 = scmp.ne.s32.totalorder %s227, %s230
    %p236 = scmp.eq.s32.totalorder %s23, 0
    %p237 = por %p235, %p236
    %p238 = scmp.ne.s32.totalorder %s227, %s230
    %p239 = scmp.eq.s32.totalorder %s28, 3
    %p240 = por %p238, %p239
    %p241 = scmp.ne.s32.totalorder %s230, %s231
    %p242 = scmp.eq.s32.totalorder %s28, 0
    %p243 = por %p241, %p242
    %p244 = scmp.ne.s32.totalorder %s230, %s231
    %p245 = scmp.eq.s32.totalorder %s29, 3
    %p246 = por %p244, %p245
    %p248 = scmp.ne.s32.totalorder %s231, %s247
    %p249 = scmp.eq.s32.totalorder %s29, 0
    %p250 = por %p248, %p249
    %s251 = ssub.s32 %s31, %s38
    %p252 = scmp.eq.s32.totalorder %s251, 0
    %s254 = sadd.s32 %s253, 1
    %s255 = scalar_select %p252, %s253, %s254
    %p258 = pneg %p252
    %p259 = scmp.eq.s32.totalorder %s23, 3
    %p260 = por %p258, %p259
    %p261 = scmp.ne.s32.totalorder %s253, %s256
    %p262 = scmp.eq.s32.totalorder %s23, 0
    %p263 = por %p261, %p262
    %p264 = scmp.ne.s32.totalorder %s253, %s256
    %p265 = scmp.eq.s32.totalorder %s28, 3
    %p266 = por %p264, %p265
    %p267 = scmp.ne.s32.totalorder %s256, %s257
    %p268 = scmp.eq.s32.totalorder %s28, 0
    %p269 = por %p267, %p268
    %p270 = scmp.ne.s32.totalorder %s256, %s257
    %p271 = scmp.eq.s32.totalorder %s29, 3
    %p272 = por %p270, %p271
    %p274 = scmp.ne.s32.totalorder %s257, %s273
    %p275 = scmp.eq.s32.totalorder %s29, 0
    %p276 = por %p274, %p275
    %s277 = ssub.s32 %s31, %s38
    %p278 = scmp.eq.s32.totalorder %s277, 0
    %s280 = sadd.s32 %s279, 1
    %s281 = scalar_select %p278, %s279, %s280
    %p284 = pneg %p278
    %p285 = scmp.eq.s32.totalorder %s23, 3
    %p286 = por %p284, %p285
    %p287 = scmp.ne.s32.totalorder %s279, %s282
    %p288 = scmp.eq.s32.totalorder %s23, 0
    %p289 = por %p287, %p288
    %p290 = scmp.ne.s32.totalorder %s279, %s282
    %p291 = scmp.eq.s32.totalorder %s28, 3
    %p292 = por %p290, %p291
    %p293 = scmp.ne.s32.totalorder %s282, %s283
    %p294 = scmp.eq.s32.totalorder %s28, 0
    %p295 = por %p293, %p294
    %p296 = scmp.ne.s32.totalorder %s282, %s283
    %p297 = scmp.eq.s32.totalorder %s29, 3
    %p298 = por %p296, %p297
    %p300 = scmp.ne.s32.totalorder %s283, %s299
    %p301 = scmp.eq.s32.totalorder %s29, 0
    %p302 = por %p300, %p301
    %s303 = ssub.s32 %s31, %s38
    %p304 = scmp.eq.s32.totalorder %s303, 0
    %s306 = sadd.s32 %s305, 1
    %s307 = scalar_select %p304, %s305, %s306
    %p310 = pneg %p304
    %p311 = scmp.eq.s32.totalorder %s23, 3
    %p312 = por %p310, %p311
    %p313 = scmp.ne.s32.totalorder %s305, %s308
    %p314 = scmp.eq.s32.totalorder %s23, 0
    %p315 = por %p313, %p314
    %p316 = scmp.ne.s32.totalorder %s305, %s308
    %p317 = scmp.eq.s32.totalorder %s28, 3
    %p318 = por %p316, %p317
    %p319 = scmp.ne.s32.totalorder %s308, %s309
    %p320 = scmp.eq.s32.totalorder %s28, 0
    %p321 = por %p319, %p320
    %p322 = scmp.ne.s32.totalorder %s308, %s309
    %p323 = scmp.eq.s32.totalorder %s29, 3
    %p324 = por %p322, %p323
    %p326 = scmp.ne.s32.totalorder %s309, %s325
    %p327 = scmp.eq.s32.totalorder %s29, 0
    %p328 = por %p326, %p327
    %s329 = ssub.s32 %s31, %s38
    %p330 = scmp.eq.s32.totalorder %s329, 0
    %s332 = sadd.s32 %s331, 1
    %s333 = scalar_select %p330, %s331, %s332
    %p336 = pneg %p330
    %p337 = scmp.eq.s32.totalorder %s23, 3
    %p338 = por %p336, %p337
    %p339 = scmp.ne.s32.totalorder %s331, %s334
    %p340 = scmp.eq.s32.totalorder %s23, 0
    %p341 = por %p339, %p340
    %p342 = scmp.ne.s32.totalorder %s331, %s334
    %p343 = scmp.eq.s32.totalorder %s28, 3
    %p344 = por %p342, %p343
    %p345 = scmp.ne.s32.totalorder %s334, %s335
    %p346 = scmp.eq.s32.totalorder %s28, 0
    %p347 = por %p345, %p346
    %p348 = scmp.ne.s32.totalorder %s334, %s335
    %p349 = scmp.eq.s32.totalorder %s29, 3
    %p350 = por %p348, %p349
    %p352 = scmp.ne.s32.totalorder %s335, %s351
    %p353 = scmp.eq.s32.totalorder %s29, 0
    %p354 = por %p352, %p353
    %s355 = ssub.s32 %s31, %s38
    %p356 = scmp.eq.s32.totalorder %s355, 0
    %s358 = sadd.s32 %s357, 1
    %s359 = scalar_select %p356, %s357, %s358
    %p362 = pneg %p356
    %p363 = scmp.eq.s32.totalorder %s23, 3
    %p364 = por %p362, %p363
    %p365 = scmp.ne.s32.totalorder %s357, %s360
    %p366 = scmp.eq.s32.totalorder %s23, 0
    %p367 = por %p365, %p366
    %p368 = scmp.ne.s32.totalorder %s357, %s360
    %p369 = scmp.eq.s32.totalorder %s28, 3
    %p370 = por %p368, %p369
    %p371 = scmp.ne.s32.totalorder %s360, %s361
    %p372 = scmp.eq.s32.totalorder %s28, 0
    %p373 = por %p371, %p372
    %p374 = scmp.ne.s32.totalorder %s360, %s361
    %p375 = scmp.eq.s32.totalorder %s29, 3
    %p376 = por %p374, %p375
    %p378 = scmp.ne.s32.totalorder %s361, %s377
    %p379 = scmp.eq.s32.totalorder %s29, 0
    %p380 = por %p378, %p379
    %s381 = ssub.s32 %s31, %s38
    %p382 = scmp.eq.s32.totalorder %s381, 0
    %s384 = sadd.s32 %s383, 1
    %s385 = scalar_select %p382, %s383, %s384
    %p388 = pneg %p382
    %p389 = scmp.eq.s32.totalorder %s23, 3
    %p390 = por %p388, %p389
    %p391 = scmp.ne.s32.totalorder %s383, %s386
    %p392 = scmp.eq.s32.totalorder %s23, 0
    %p393 = por %p391, %p392
    %p394 = scmp.ne.s32.totalorder %s383, %s386
    %p395 = scmp.eq.s32.totalorder %s28, 3
    %p396 = por %p394, %p395
    %p397 = scmp.ne.s32.totalorder %s386, %s387
    %p398 = scmp.eq.s32.totalorder %s28, 0
    %p399 = por %p397, %p398
    %p400 = scmp.ne.s32.totalorder %s386, %s387
    %p401 = scmp.eq.s32.totalorder %s29, 3
    %p402 = por %p400, %p401
    %p404 = scmp.ne.s32.totalorder %s387, %s403
    %p405 = scmp.eq.s32.totalorder %s29, 0
    %p406 = por %p404, %p405
    %s407 = ssub.s32 %s31, %s38
    %p408 = scmp.eq.s32.totalorder %s407, 0
    %s410 = sadd.s32 %s409, 1
    %s411 = scalar_select %p408, %s409, %s410
    %p414 = pneg %p408
    %p415 = scmp.eq.s32.totalorder %s23, 3
    %p416 = por %p414, %p415
    %p417 = scmp.ne.s32.totalorder %s409, %s412
    %p418 = scmp.eq.s32.totalorder %s23, 0
    %p419 = por %p417, %p418
    %p420 = scmp.ne.s32.totalorder %s409, %s412
    %p421 = scmp.eq.s32.totalorder %s28, 3
    %p422 = por %p420, %p421
    %p423 = scmp.ne.s32.totalorder %s412, %s413
    %p424 = scmp.eq.s32.totalorder %s28, 0
    %p425 = por %p423, %p424
    %p426 = scmp.ne.s32.totalorder %s412, %s413
    %p427 = scmp.eq.s32.totalorder %s29, 3
    %p428 = por %p426, %p427
    %p430 = scmp.ne.s32.totalorder %s413, %s429
    %p431 = scmp.eq.s32.totalorder %s29, 0
    %p432 = por %p430, %p431
    %s434 = sadd.s32 %s433, 1
    %p437 = scmp.eq.s32.totalorder %s23, 3
    %p438 = scmp.ne.s32.totalorder %s433, %s435
    %p439 = scmp.eq.s32.totalorder %s23, 0
    %p440 = por %p438, %p439
    %p441 = scmp.ne.s32.totalorder %s433, %s435
    %p442 = scmp.eq.s32.totalorder %s28, 3
    %p443 = por %p441, %p442
    %p444 = scmp.ne.s32.totalorder %s435, %s436
    %p445 = scmp.eq.s32.totalorder %s28, 0
    %p446 = por %p444, %p445
    %p447 = scmp.ne.s32.totalorder %s435, %s436
    %p448 = scmp.eq.s32.totalorder %s29, 3
    %p449 = por %p447, %p448
    %p451 = scmp.ne.s32.totalorder %s436, %s450
    %p452 = scmp.eq.s32.totalorder %s29, 0
    %p453 = por %p451, %p452
    %s455 = sadd.s32 %s454, 1
    %p458 = scmp.eq.s32.totalorder %s23, 3
    %p459 = scmp.ne.s32.totalorder %s454, %s456
    %p460 = scmp.eq.s32.totalorder %s23, 0
    %p461 = por %p459, %p460
    %p462 = scmp.ne.s32.totalorder %s454, %s456
    %p463 = scmp.eq.s32.totalorder %s28, 3
    %p464 = por %p462, %p463
    %p465 = scmp.ne.s32.totalorder %s456, %s457
    %p466 = scmp.eq.s32.totalorder %s28, 0
    %p467 = por %p465, %p466
    %p468 = scmp.ne.s32.totalorder %s456, %s457
    %p469 = scmp.eq.s32.totalorder %s29, 3
    %p470 = por %p468, %p469
    %p472 = scmp.ne.s32.totalorder %s457, %s471
    %p473 = scmp.eq.s32.totalorder %s29, 0
    %p474 = por %p472, %p473
    %s475 = ssub.s32 %s30, %s42
    %p476 = scmp.eq.s32.totalorder %s475, 0
    %s478 = sadd.s32 %s477, 1
    %s479 = scalar_select %p476, %s477, %s478
    %p482 = pneg %p476
    %p483 = scmp.eq.s32.totalorder %s23, 3
    %p484 = por %p482, %p483
    %p485 = scmp.ne.s32.totalorder %s477, %s480
    %p486 = scmp.eq.s32.totalorder %s23, 0
    %p487 = por %p485, %p486
    %p488 = scmp.ne.s32.totalorder %s477, %s480
    %p489 = scmp.eq.s32.totalorder %s28, 3
    %p490 = por %p488, %p489
    %p491 = scmp.ne.s32.totalorder %s480, %s481
    %p492 = scmp.eq.s32.totalorder %s28, 0
    %p493 = por %p491, %p492
    %p494 = scmp.ne.s32.totalorder %s480, %s481
    %p495 = scmp.eq.s32.totalorder %s29, 3
    %p496 = por %p494, %p495
    %p498 = scmp.ne.s32.totalorder %s481, %s497
    %p499 = scmp.eq.s32.totalorder %s29, 0
    %p500 = por %p498, %p499
    %p501 = scmp.le.s32.totalorder 1, %s23
    %p502 = scmp.lt.s32.totalorder %s23, 5
    %p503 = pnand %p501, %p502
    %p504 = pneg %p503
    // Predicated region
    $region9: #{_lambda_.3} parent=5 // pred_check
      _
    $region10: #{_lambda_.3} parent=5 // pred_check_branch
      %506 = sbr.rel (%p503) target = $region12
    $region11: #{_lambda_.3} parent=5 // pred_region
      %s507 = ssub.s32 %s23, 1
      // Predicated region
      $region13: #{_lambda_.3} parent=11 // pred_check
        %p508 = pneg %p446
      $region14: #{_lambda_.3} parent=11 // pred_check_branch
        %510 = sbr.rel (%p508) target = $region16
      $region15: #{_lambda_.3} parent=11 // pred_region
        _
      $region16: #{_lambda_.3} parent=11 // pred_fallthru
        _
      // Predicated region
      $region17: #{_lambda_.3} parent=11 // pred_check
        %p511 = pneg %p467
      $region18: #{_lambda_.3} parent=11 // pred_check_branch
        %513 = sbr.rel (%p511) target = $region20
      $region19: #{_lambda_.3} parent=11 // pred_region
        _
      $region20: #{_lambda_.3} parent=11 // pred_fallthru
        _
    $region12: #{_lambda_.3} parent=5 // pred_fallthru
      _
    %p514 = scmp.lt.s32.totalorder %s23, 4
    // Predicated region
    $region21: #{_lambda_.3} parent=5 // pred_check
      %p515 = pneg %p514
    $region22: #{_lambda_.3} parent=5 // pred_check_branch
      %517 = sbr.rel (%p515) target = $region24
    $region23: #{_lambda_.3} parent=5 // pred_region
      // Predicated region
      $region25: #{_lambda_.3} parent=23 // pred_check
        %p518 = pneg %p55
      $region26: #{_lambda_.3} parent=23 // pred_check_branch
        %520 = sbr.rel (%p518) target = $region28
      $region27: #{_lambda_.3} parent=23 // pred_region
        %p521 = scmp.lt.s32.totalorder %s30, 1
        %s522 = scalar_select %p521, %s30, 1
        %s523 = smul.addr %s522, 2
        %s524 = smul.addr %s523, 8
        %s525 = scalar_lea.vmem %s0, %s524
      $region28: #{_lambda_.3} parent=23 // pred_fallthru
        _
      // Predicated region
      $region29: #{_lambda_.3} parent=23 // pred_check
        %p526 = pneg %p81
      $region30: #{_lambda_.3} parent=23 // pred_check_branch
        %528 = sbr.rel (%p526) target = $region32
      $region31: #{_lambda_.3} parent=23 // pred_region
        %p529 = scmp.lt.s32.totalorder %s31, 1
        %s530 = scalar_select %p529, %s31, 1
        %s531 = scalar_lea.vmem %s1, %s530
      $region32: #{_lambda_.3} parent=23 // pred_fallthru
        _
      // Predicated region
      $region33: #{_lambda_.3} parent=23 // pred_check
        %p532 = pneg %p107
      $region34: #{_lambda_.3} parent=23 // pred_check_branch
        %534 = sbr.rel (%p532) target = $region36
      $region35: #{_lambda_.3} parent=23 // pred_region
        %p535 = scmp.lt.s32.totalorder %s31, 1
        %s536 = scalar_select %p535, %s31, 1
        %s537 = scalar_lea.vmem %s2, %s536
      $region36: #{_lambda_.3} parent=23 // pred_fallthru
        _
      // Predicated region
      $region37: #{_lambda_.3} parent=23 // pred_check
        %p538 = pneg %p133
      $region38: #{_lambda_.3} parent=23 // pred_check_branch
        %540 = sbr.rel (%p538) target = $region40
      $region39: #{_lambda_.3} parent=23 // pred_region
        %p541 = scmp.lt.s32.totalorder %s31, 1
        %s542 = scalar_select %p541, %s31, 1
        %s543 = smul.addr %s542, 48
        %s544 = smul.addr %s543, 4
        %s545 = scalar_lea.vmem %s3, %s544
      $region40: #{_lambda_.3} parent=23 // pred_fallthru
        _
      // Predicated region
      $region41: #{_lambda_.3} parent=23 // pred_check
        %p546 = pneg %p159
      $region42: #{_lambda_.3} parent=23 // pred_check_branch
        %548 = sbr.rel (%p546) target = $region44
      $region43: #{_lambda_.3} parent=23 // pred_region
        %p549 = scmp.lt.s32.totalorder %s31, 1
        %s550 = scalar_select %p549, %s31, 1
        %s551 = smul.addr %s550, 3
        %s552 = scalar_lea.vmem %s4, %s551
      $region44: #{_lambda_.3} parent=23 // pred_fallthru
        _
      // Predicated region
      $region45: #{_lambda_.3} parent=23 // pred_check
        %p553 = pneg %p185
      $region46: #{_lambda_.3} parent=23 // pred_check_branch
        %555 = sbr.rel (%p553) target = $region48
      $region47: #{_lambda_.3} parent=23 // pred_region
        %p556 = scmp.lt.s32.totalorder %s31, 1
        %s557 = scalar_select %p556, %s31, 1
        %s558 = smul.addr %s557, 16
        %s559 = smul.addr %s558, 4
        %s560 = scalar_lea.vmem %s5, %s559
      $region48: #{_lambda_.3} parent=23 // pred_fallthru
        _
      // Predicated region
      $region49: #{_lambda_.3} parent=23 // pred_check
        %p561 = pneg %p211
      $region50: #{_lambda_.3} parent=23 // pred_check_branch
        %563 = sbr.rel (%p561) target = $region52
      $region51: #{_lambda_.3} parent=23 // pred_region
        %p564 = scmp.lt.s32.totalorder %s31, 1
        %s565 = scalar_select %p564, %s31, 1
        %s566 = scalar_lea.vmem %s6, %s565
      $region52: #{_lambda_.3} parent=23 // pred_fallthru
        _
      // Predicated region
      $region53: #{_lambda_.3} parent=23 // pred_check
        %p567 = pneg %p237
      $region54: #{_lambda_.3} parent=23 // pred_check_branch
        %569 = sbr.rel (%p567) target = $region56
      $region55: #{_lambda_.3} parent=23 // pred_region
        %p570 = scmp.lt.s32.totalorder %s31, 1
        %s571 = scalar_select %p570, %s31, 1
        %s572 = scalar_lea.vmem %s7, %s571
      $region56: #{_lambda_.3} parent=23 // pred_fallthru
        _
      // Predicated region
      $region57: #{_lambda_.3} parent=23 // pred_check
        %p573 = pneg %p263
      $region58: #{_lambda_.3} parent=23 // pred_check_branch
        %575 = sbr.rel (%p573) target = $region60
      $region59: #{_lambda_.3} parent=23 // pred_region
        %p576 = scmp.lt.s32.totalorder %s31, 1
        %s577 = scalar_select %p576, %s31, 1
        %s578 = scalar_lea.vmem %s8, %s577
      $region60: #{_lambda_.3} parent=23 // pred_fallthru
        _
      // Predicated region
      $region61: #{_lambda_.3} parent=23 // pred_check
        %p579 = pneg %p289
      $region62: #{_lambda_.3} parent=23 // pred_check_branch
        %581 = sbr.rel (%p579) target = $region64
      $region63: #{_lambda_.3} parent=23 // pred_region
        %p582 = scmp.lt.s32.totalorder %s31, 1
        %s583 = scalar_select %p582, %s31, 1
        %s584 = scalar_lea.vmem %s9, %s583
      $region64: #{_lambda_.3} parent=23 // pred_fallthru
        _
      // Predicated region
      $region65: #{_lambda_.3} parent=23 // pred_check
        %p585 = pneg %p315
      $region66: #{_lambda_.3} parent=23 // pred_check_branch
        %587 = sbr.rel (%p585) target = $region68
      $region67: #{_lambda_.3} parent=23 // pred_region
        %p588 = scmp.lt.s32.totalorder %s31, 1
        %s589 = scalar_select %p588, %s31, 1
        %s590 = smul.addr %s589, 64
        %s591 = smul.addr %s590, 4
        %s592 = scalar_lea.vmem %s10, %s591
      $region68: #{_lambda_.3} parent=23 // pred_fallthru
        _
      // Predicated region
      $region69: #{_lambda_.3} parent=23 // pred_check
        %p593 = pneg %p341
      $region70: #{_lambda_.3} parent=23 // pred_check_branch
        %595 = sbr.rel (%p593) target = $region72
      $region71: #{_lambda_.3} parent=23 // pred_region
        %p596 = scmp.lt.s32.totalorder %s31, 1
        %s597 = scalar_select %p596, %s31, 1
        %s598 = smul.addr %s597, 4
        %s599 = scalar_lea.vmem %s11, %s598
      $region72: #{_lambda_.3} parent=23 // pred_fallthru
        _
      // Predicated region
      $region73: #{_lambda_.3} parent=23 // pred_check
        %p600 = pneg %p367
      $region74: #{_lambda_.3} parent=23 // pred_check_branch
        %602 = sbr.rel (%p600) target = $region76
      $region75: #{_lambda_.3} parent=23 // pred_region
        %p603 = scmp.lt.s32.totalorder %s31, 1
        %s604 = scalar_select %p603, %s31, 1
        %s605 = smul.addr %s604, 64
        %s606 = smul.addr %s605, 4
        %s607 = scalar_lea.vmem %s12, %s606
      $region76: #{_lambda_.3} parent=23 // pred_fallthru
        _
      // Predicated region
      $region77: #{_lambda_.3} parent=23 // pred_check
        %p608 = pneg %p393
      $region78: #{_lambda_.3} parent=23 // pred_check_branch
        %610 = sbr.rel (%p608) target = $region80
      $region79: #{_lambda_.3} parent=23 // pred_region
        %p611 = scmp.lt.s32.totalorder %s31, 1
        %s612 = scalar_select %p611, %s31, 1
        %s613 = scalar_lea.vmem %s13, %s612
      $region80: #{_lambda_.3} parent=23 // pred_fallthru
        _
      // Predicated region
      $region81: #{_lambda_.3} parent=23 // pred_check
        %p614 = pneg %p419
      $region82: #{_lambda_.3} parent=23 // pred_check_branch
        %616 = sbr.rel (%p614) target = $region84
      $region83: #{_lambda_.3} parent=23 // pred_region
        %p617 = scmp.lt.s32.totalorder %s31, 1
        %s618 = scalar_select %p617, %s31, 1
        %s619 = scalar_lea.vmem %s14, %s618
      $region84: #{_lambda_.3} parent=23 // pred_fallthru
        _
    $region24: #{_lambda_.3} parent=5 // pred_fallthru
      _
    %p620 = scmp.le.s32.totalorder 1, %s23
    %p621 = scmp.lt.s32.totalorder %s23, 5
    %p622 = pnand %p620, %p621
    %p623 = pneg %p622
    // Predicated region
    $region85: #{_lambda_.3} parent=5 // pred_check
      _
    $region86: #{_lambda_.3} parent=5 // pred_check_branch
      %625 = sbr.rel (%p622) target = $region88
    $region87: #{_lambda_.3} parent=5 // pred_region
      %s626 = ssub.s32 %s23, 1
      %p627 = scmp.lt.s32.totalorder %s32, 1
      %s628 = scalar_select %p627, %s32, 1
      %s629 = smul.addr %s628, 2
      %s630 = smul.addr %s629, 8
      %s631 = scalar_lea.vmem %s0, %s630
      %p632 = pneg %p61
      %p633 = pneg %p58
      %p634 = scmp.lt.s32.totalorder %s33, 1
      %s635 = scalar_select %p634, %s33, 1
      %s636 = scalar_lea.vmem %s1, %s635
      %p637 = pneg %p87
      %p638 = pneg %p84
      %p639 = scmp.lt.s32.totalorder %s33, 1
      %s640 = scalar_select %p639, %s33, 1
      %s641 = scalar_lea.vmem %s2, %s640
      %p642 = pneg %p113
      %p643 = pneg %p110
      %p644 = scmp.lt.s32.totalorder %s33, 1
      %s645 = scalar_select %p644, %s33, 1
      %s646 = smul.addr %s645, 48
      %s647 = smul.addr %s646, 4
      %s648 = scalar_lea.vmem %s3, %s647
      %p649 = pneg %p139
      %p650 = pneg %p136
      %p651 = scmp.lt.s32.totalorder %s33, 1
      %s652 = scalar_select %p651, %s33, 1
      %s653 = smul.addr %s652, 3
      %s654 = scalar_lea.vmem %s4, %s653
      %p655 = pneg %p165
      %p656 = pneg %p162
      %p657 = scmp.lt.s32.totalorder %s33, 1
      %s658 = scalar_select %p657, %s33, 1
      %s659 = smul.addr %s658, 16
      %s660 = smul.addr %s659, 4
      %s661 = scalar_lea.vmem %s5, %s660
      %p662 = pneg %p191
      %p663 = pneg %p188
      %p664 = scmp.lt.s32.totalorder %s33, 1
      %s665 = scalar_select %p664, %s33, 1
      %s666 = scalar_lea.vmem %s6, %s665
      %p667 = pneg %p217
      %p668 = pneg %p214
      %p669 = scmp.lt.s32.totalorder %s33, 1
      %s670 = scalar_select %p669, %s33, 1
      %s671 = scalar_lea.vmem %s7, %s670
      %p672 = pneg %p243
      %p673 = pneg %p240
      %p674 = scmp.lt.s32.totalorder %s33, 1
      %s675 = scalar_select %p674, %s33, 1
      %s676 = scalar_lea.vmem %s8, %s675
      %p677 = pneg %p269
      %p678 = pneg %p266
      %p679 = scmp.lt.s32.totalorder %s33, 1
      %s680 = scalar_select %p679, %s33, 1
      %s681 = scalar_lea.vmem %s9, %s680
      %p682 = pneg %p295
      %p683 = pneg %p292
      %p684 = scmp.lt.s32.totalorder %s33, 1
      %s685 = scalar_select %p684, %s33, 1
      %s686 = smul.addr %s685, 64
      %s687 = smul.addr %s686, 4
      %s688 = scalar_lea.vmem %s10, %s687
      %p689 = pneg %p321
      %p690 = pneg %p318
      %p691 = scmp.lt.s32.totalorder %s33, 1
      %s692 = scalar_select %p691, %s33, 1
      %s693 = smul.addr %s692, 4
      %s694 = scalar_lea.vmem %s11, %s693
      %p695 = pneg %p347
      %p696 = pneg %p344
      %p697 = scmp.lt.s32.totalorder %s33, 1
      %s698 = scalar_select %p697, %s33, 1
      %s699 = smul.addr %s698, 64
      %s700 = smul.addr %s699, 4
      %s701 = scalar_lea.vmem %s12, %s700
      %p702 = pneg %p373
      %p703 = pneg %p370
      %p704 = scmp.lt.s32.totalorder %s33, 1
      %s705 = scalar_select %p704, %s33, 1
      %s706 = scalar_lea.vmem %s13, %s705
      %p707 = pneg %p399
      %p708 = pneg %p396
      %p709 = scmp.lt.s32.totalorder %s33, 1
      %s710 = scalar_select %p709, %s33, 1
      %s711 = scalar_lea.vmem %s14, %s710
      %p712 = pneg %p425
      %p713 = pneg %p422
      %p714 = pneg %p446
      %p715 = pneg %p443
      %p716 = pneg %p467
      %p717 = pneg %p464
      %p718 = pneg %p493
      %p719 = pneg %p490
      %p720 = scmp.lt.s32.totalorder %s32, 1
      %s721 = scalar_select %p720, %s32, 1
      %s722 = smul.addr %s721, 2
      %s723 = smul.addr %s722, 8
      %s724 = scalar_lea.vmem %s17, %s723
      %p725 = scmp.lt.s32.totalorder %s32, 1
      %s726 = scalar_select %p725, %s32, 1
      %s727 = smul.addr %s726, 2
      %s728 = smul.addr %s727, 8
      %s729 = scalar_lea.vmem %s0, %s728
      %p730 = scmp.lt.s32.totalorder %s33, 1
      %s731 = scalar_select %p730, %s33, 1
      %s732 = scalar_lea.vmem %s1, %s731
      %p733 = scmp.lt.s32.totalorder %s33, 1
      %s734 = scalar_select %p733, %s33, 1
      %s735 = scalar_lea.vmem %s2, %s734
      %p736 = scmp.lt.s32.totalorder %s33, 1
      %s737 = scalar_select %p736, %s33, 1
      %s738 = smul.addr %s737, 48
      %s739 = smul.addr %s738, 4
      %s740 = scalar_lea.vmem %s3, %s739
      %p741 = scmp.lt.s32.totalorder %s33, 1
      %s742 = scalar_select %p741, %s33, 1
      %s743 = smul.addr %s742, 3
      %s744 = scalar_lea.vmem %s4, %s743
      %p745 = scmp.lt.s32.totalorder %s33, 1
      %s746 = scalar_select %p745, %s33, 1
      %s747 = smul.addr %s746, 16
      %s748 = smul.addr %s747, 4
      %s749 = scalar_lea.vmem %s5, %s748
      %p750 = scmp.lt.s32.totalorder %s33, 1
      %s751 = scalar_select %p750, %s33, 1
      %s752 = scalar_lea.vmem %s6, %s751
      %p753 = scmp.lt.s32.totalorder %s33, 1
      %s754 = scalar_select %p753, %s33, 1
      %s755 = scalar_lea.vmem %s7, %s754
      %p756 = scmp.lt.s32.totalorder %s33, 1
      %s757 = scalar_select %p756, %s33, 1
      %s758 = scalar_lea.vmem %s8, %s757
      %p759 = scmp.lt.s32.totalorder %s33, 1
      %s760 = scalar_select %p759, %s33, 1
      %s761 = scalar_lea.vmem %s9, %s760
      %p762 = scmp.lt.s32.totalorder %s33, 1
      %s763 = scalar_select %p762, %s33, 1
      %s764 = smul.addr %s763, 64
      %s765 = smul.addr %s764, 4
      %s766 = scalar_lea.vmem %s10, %s765
      %p767 = scmp.lt.s32.totalorder %s33, 1
      %s768 = scalar_select %p767, %s33, 1
      %s769 = smul.addr %s768, 4
      %s770 = scalar_lea.vmem %s11, %s769
      %p771 = scmp.lt.s32.totalorder %s33, 1
      %s772 = scalar_select %p771, %s33, 1
      %s773 = smul.addr %s772, 64
      %s774 = smul.addr %s773, 4
      %s775 = scalar_lea.vmem %s12, %s774
      %p776 = scmp.lt.s32.totalorder %s33, 1
      %s777 = scalar_select %p776, %s33, 1
      %s778 = scalar_lea.vmem %s13, %s777
      %p779 = scmp.lt.s32.totalorder %s33, 1
      %s780 = scalar_select %p779, %s33, 1
      %s781 = scalar_lea.vmem %s14, %s780
      %p782 = scmp.lt.s32.totalorder %s32, 1
      %s783 = scalar_select %p782, %s32, 1
      %s784 = smul.addr %s783, 2
      %s785 = smul.addr %s784, 8
      %s786 = scalar_lea.vmem %s17, %s785
      %p788 = scmp.eq.s32.totalorder %s33, 0
      // Predicated region
      $region89: #{_lambda_.3} parent=87 // pred_check
        %p789 = pneg %p788
      $region90: #{_lambda_.3} parent=87 // pred_check_branch
        %791 = sbr.rel (%p789) target = $region92
      $region91: #{_lambda_.3} parent=87 // pred_region
        %v792 = vld [vmem:[%s729] sm:$0xff]
        %v793 = vld [vmem:[%s729 + $0x8] sm:$0xff]
        %794 = vst [vmem:[#allocation2] sm:$0xff] %v792
        %795 = vst [vmem:[#allocation2 + $0x8] sm:$0xff] %v793
      $region92: #{_lambda_.3} parent=87 // pred_fallthru
        _
      %v796 = vld [vmem:[#allocation2] sm:$0xff]
      %v797 = vld [vmem:[#allocation2 + $0x8] sm:$0xff]
      %v798 = vld [vmem:[%s732] sm:$0x1]
      %v799 = vld [vmem:[%s735] sm:$0x1]
      %800 = vadd.xlane.f32.xlu0 %v796
      %v801 = vpop.xlane.xlu0 %800
      %802 = vadd.xlane.f32.xlu0 %v797
      %v803 = vpop.xlane.xlu0 %802
      %v804 = vrcp.pop 128.0
      %v805 = vmul.f32 %v801, %v804
      %v806 = vmul.f32 %v803, %v804
      %v807 = vsub.f32 %v796, %v805
      %v808 = vsub.f32 %v797, %v806
      %v809 = vmul.f32 %v807, %v807
      %v810 = vmul.f32 %v808, %v808
      %811 = vadd.xlane.f32.xlu0 %v809
      %v812 = vpop.xlane.xlu0 %811
      %813 = vadd.xlane.f32.xlu0 %v810
      %v814 = vpop.xlane.xlu0 %813
      %v815 = vmul.f32 %v812, %v804
      %v816 = vmul.f32 %v814, %v804
      %v817 = vadd.f32 %v815, 1e-06
      %v818 = vadd.f32 %v816, 1e-06
      %v819 = vrsqrt.pop %v817
      %v820 = vrsqrt.pop %v818
      %v821 = vmul.f32 %v807, %v819
      %v822 = vmul.f32 %v808, %v820
      %v824 = vlaneseq
      %v825 = vshrl.u32 %v824, 7
      %v826 = vsub.s32 0, %v825
      %v827 = vrot.slane %v798, %v826
      %v829 = vmul.f32 %v821, %v827
      %v830 = vmul.f32 %v822, %v827
      %v832 = vlaneseq
      %v833 = vshrl.u32 %v832, 7
      %v834 = vsub.s32 0, %v833
      %v835 = vrot.slane %v799, %v834
      %v837 = vadd.f32 %v829, %v835
      %v838 = vadd.f32 %v830, %v835
      %v839 = vpack.c.bf16 %v838, %v837
      %v840 = vld [vmem:[%s740] sm:$0xff]
      %v841 = vld [vmem:[%s740 + $0x8] sm:$0xf]
      %v842 = vld [vmem:[%s740 + $0xc] sm:$0xff]
      %v843 = vld [vmem:[%s740 + $0x14] sm:$0xf]
      %v844 = vld [vmem:[%s740 + $0x18] sm:$0xff]
      %v845 = vld [vmem:[%s740 + $0x20] sm:$0xf]
      %v846 = vld [vmem:[%s740 + $0x24] sm:$0xff]
      %v847 = vld [vmem:[%s740 + $0x2c] sm:$0xf]
      %v848 = vld [vmem:[%s740 + $0x30] sm:$0xff]
      %v849 = vld [vmem:[%s740 + $0x38] sm:$0xf]
      %v850 = vld [vmem:[%s740 + $0x3c] sm:$0xff]
      %v851 = vld [vmem:[%s740 + $0x44] sm:$0xf]
      %v852 = vld [vmem:[%s740 + $0x48] sm:$0xff]
      %v853 = vld [vmem:[%s740 + $0x50] sm:$0xf]
      %v854 = vld [vmem:[%s740 + $0x54] sm:$0xff]
      %v855 = vld [vmem:[%s740 + $0x5c] sm:$0xf]
      %v856 = vld [vmem:[%s740 + $0x60] sm:$0xff]
      %v857 = vld [vmem:[%s740 + $0x68] sm:$0xf]
      %v858 = vld [vmem:[%s740 + $0x6c] sm:$0xff]
      %v859 = vld [vmem:[%s740 + $0x74] sm:$0xf]
      %v860 = vld [vmem:[%s740 + $0x78] sm:$0xff]
      %v861 = vld [vmem:[%s740 + $0x80] sm:$0xf]
      %v862 = vld [vmem:[%s740 + $0x84] sm:$0xff]
      %v863 = vld [vmem:[%s740 + $0x8c] sm:$0xf]
      %v864 = vld [vmem:[%s740 + $0x90] sm:$0xff]
      %v865 = vld [vmem:[%s740 + $0x98] sm:$0xf]
      %v866 = vld [vmem:[%s740 + $0x9c] sm:$0xff]
      %v867 = vld [vmem:[%s740 + $0xa4] sm:$0xf]
      %v868 = vld [vmem:[%s740 + $0xa8] sm:$0xff]
      %v869 = vld [vmem:[%s740 + $0xb0] sm:$0xf]
      %v870 = vld [vmem:[%s740 + $0xb4] sm:$0xff]
      %v871 = vld [vmem:[%s740 + $0xbc] sm:$0xf]
      %v872 = vld [vmem:[%s744] sm:$0x7]
      %v874 = vlaneseq
      %v875 = vshrl.u32 %v874, 7
      %v876 = vsub.s32 0, %v875
      %v877 = vrot.slane %v872, %v876
      %v878 = vlaneseq
      %v879 = vshrl.u32 %v878, 7
      %v880 = vsub.s32 1, %v879
      %v881 = vrot.slane %v872, %v880
      %v882 = vlaneseq
      %v883 = vshrl.u32 %v882, 7
      %v884 = vsub.s32 2, %v883
      %v885 = vrot.slane %v872, %v884
      %v921 = vunpack.c.l.b16 %v840
      %v922 = vunpack.c.h.b16 %v840
      %v923 = vunpack.c.l.b16 %v841
      %v924 = vunpack.c.l.b16 %v842
      %v925 = vunpack.c.h.b16 %v842
      %v926 = vunpack.c.l.b16 %v843
      %v927 = vunpack.c.l.b16 %v844
      %v928 = vunpack.c.h.b16 %v844
      %v929 = vunpack.c.l.b16 %v845
      %v930 = vunpack.c.l.b16 %v846
      %v931 = vunpack.c.h.b16 %v846
      %v932 = vunpack.c.l.b16 %v847
      %v933 = vunpack.c.l.b16 %v848
      %v934 = vunpack.c.h.b16 %v848
      %v935 = vunpack.c.l.b16 %v849
      %v936 = vunpack.c.l.b16 %v850
      %v937 = vunpack.c.h.b16 %v850
      %v938 = vunpack.c.l.b16 %v851
      %v939 = vunpack.c.l.b16 %v852
      %v940 = vunpack.c.h.b16 %v852
      %v941 = vunpack.c.l.b16 %v853
      %v942 = vunpack.c.l.b16 %v854
      %v943 = vunpack.c.h.b16 %v854
      %v944 = vunpack.c.l.b16 %v855
      %v945 = vunpack.c.l.b16 %v856
      %v946 = vunpack.c.h.b16 %v856
      %v947 = vunpack.c.l.b16 %v857
      %v948 = vunpack.c.l.b16 %v858
      %v949 = vunpack.c.h.b16 %v858
      %v950 = vunpack.c.l.b16 %v859
      %v951 = vunpack.c.l.b16 %v860
      %v952 = vunpack.c.h.b16 %v860
      %v953 = vunpack.c.l.b16 %v861
      %v954 = vunpack.c.l.b16 %v862
      %v955 = vunpack.c.h.b16 %v862
      %v956 = vunpack.c.l.b16 %v863
      %v957 = vunpack.c.l.b16 %v864
      %v958 = vunpack.c.h.b16 %v864
      %v959 = vunpack.c.l.b16 %v865
      %v960 = vunpack.c.l.b16 %v866
      %v961 = vunpack.c.h.b16 %v866
      %v962 = vunpack.c.l.b16 %v867
      %v963 = vunpack.c.l.b16 %v868
      %v964 = vunpack.c.h.b16 %v868
      %v965 = vunpack.c.l.b16 %v869
      %v966 = vunpack.c.l.b16 %v870
      %v967 = vunpack.c.h.b16 %v870
      %v968 = vunpack.c.l.b16 %v871
      %v969 = vpack.c.b16 %v924, %v921
      %v970 = vpack.c.b16 %v925, %v922
      %v971 = vpack.c.b16 %v926, %v923
      %v972 = vpack.c.b16 %v930, %v927
      %v973 = vpack.c.b16 %v931, %v928
      %v974 = vpack.c.b16 %v932, %v929
      %v975 = vpack.c.b16 %v936, %v933
      %v976 = vpack.c.b16 %v937, %v934
      %v977 = vpack.c.b16 %v938, %v935
      %v978 = vpack.c.b16 %v942, %v939
      %v979 = vpack.c.b16 %v943, %v940
      %v980 = vpack.c.b16 %v944, %v941
      %v981 = vpack.c.b16 %v948, %v945
      %v982 = vpack.c.b16 %v949, %v946
      %v983 = vpack.c.b16 %v950, %v947
      %v984 = vpack.c.b16 %v954, %v951
      %v985 = vpack.c.b16 %v955, %v952
      %v986 = vpack.c.b16 %v956, %v953
      %v987 = vpack.c.b16 %v960, %v957
      %v988 = vpack.c.b16 %v961, %v958
      %v989 = vpack.c.b16 %v962, %v959
      %v990 = vpack.c.b16 %v966, %v963
      %v991 = vpack.c.b16 %v967, %v964
      %v992 = vpack.c.b16 %v968, %v965
      %1017 = vmatprep.subr.bf16.mxu0 %v970
      %1018 = vmatpush1.bf16.msra.mxu0 %v969
      %1019 = vmatprep.subr.bf16.mxu0 %v973
      %1020 = vmatpush1.bf16.msra.mxu0 %v972
      %1021 = vmatprep.subr.bf16.mxu0 %v976
      %1022 = vmatpush1.bf16.msra.mxu0 %v975
      %1023 = vmatprep.subr.bf16.mxu0 %v979
      %1024 = vmatpush1.bf16.msra.mxu0 %v978
      %1025 = vmatprep.subr.bf16.mxu0 %v982
      %1026 = vmatpush1.bf16.msra.mxu0 %v981
      %1027 = vmatprep.subr.bf16.mxu0 %v985
      %1028 = vmatpush1.bf16.msra.mxu0 %v984
      %1029 = vmatprep.subr.bf16.mxu0 %v988
      %1030 = vmatpush1.bf16.msra.mxu0 %v987
      %1031 = vmatprep.subr.bf16.mxu0 %v991
      %1032 = vmatpush1.bf16.msra.mxu0 %v990
      %1033 = vmatprep.subr.bf16.mxu0 0
      %1034 = vmatpush1.bf16.msra.mxu0 0
      %1035 = vmatprep.subr.bf16.mxu0 0
      %1036 = vmatpush1.bf16.msra.mxu0 0
      %1037 = vmatprep.subr.bf16.mxu0 0
      %1038 = vmatpush1.bf16.msra.mxu0 0
      %1039 = vmatprep.subr.bf16.mxu0 0
      %1040 = vmatpush1.bf16.msra.mxu0 0
      %1041 = vmatprep.subr.bf16.mxu0 0
      %1042 = vmatpush1.bf16.msra.mxu0 0
      %1043 = vmatprep.subr.bf16.mxu0 0
      %1044 = vmatpush1.bf16.msra.mxu0 0
      %1045 = vmatprep.subr.bf16.mxu0 0
      %1046 = vmatpush1.bf16.msra.mxu0 0
      %1047 = vmatprep.subr.bf16.mxu0 0
      %1048 = vmatpush1.bf16.msra.mxu0 0
      %1049 = vmatprep.mubr.bf16.mxu0 0
      %1050 = vmatmul.mubr.bf16.gmra.mrb[0].mxu0 %v839
      %v1051 = vpop.f32.mrb[0].mxu0
      %v1052 = vadd.f32 %v877, %v1051
      %v1053 = vpop.f32.mrb[0].mxu0
      %v1054 = vadd.f32 %v881, %v1053
      %v1055 = vpop.f32.mrb[0].mxu0
      %v1056 = vadd.f32 %v877, %v1055
      %v1057 = vpop.f32.mrb[0].mxu0
      %v1058 = vadd.f32 %v881, %v1057
      %1059 = vdwg.mxu0
      %1060 = vmatprep.subr.bf16.mxu0 0
      %1061 = vmatpush1.bf16.msra.mxu0 %v971
      %1062 = vmatprep.subr.bf16.mxu0 0
      %1063 = vmatpush1.bf16.msra.mxu0 %v974
      %1064 = vmatprep.subr.bf16.mxu0 0
      %1065 = vmatpush1.bf16.msra.mxu0 %v977
      %1066 = vmatprep.subr.bf16.mxu0 0
      %1067 = vmatpush1.bf16.msra.mxu0 %v980
      %1068 = vmatprep.subr.bf16.mxu0 0
      %1069 = vmatpush1.bf16.msra.mxu0 %v983
      %1070 = vmatprep.subr.bf16.mxu0 0
      %1071 = vmatpush1.bf16.msra.mxu0 %v986
      %1072 = vmatprep.subr.bf16.mxu0 0
      %1073 = vmatpush1.bf16.msra.mxu0 %v989
      %1074 = vmatprep.subr.bf16.mxu0 0
      %1075 = vmatpush1.bf16.msra.mxu0 %v992
      %1076 = vmatprep.subr.bf16.mxu0 0
      %1077 = vmatpush1.bf16.msra.mxu0 0
      %1078 = vmatprep.subr.bf16.mxu0 0
      %1079 = vmatpush1.bf16.msra.mxu0 0
      %1080 = vmatprep.subr.bf16.mxu0 0
      %1081 = vmatpush1.bf16.msra.mxu0 0
      %1082 = vmatprep.subr.bf16.mxu0 0
      %1083 = vmatpush1.bf16.msra.mxu0 0
      %1084 = vmatprep.subr.bf16.mxu0 0
      %1085 = vmatpush1.bf16.msra.mxu0 0
      %1086 = vmatprep.subr.bf16.mxu0 0
      %1087 = vmatpush1.bf16.msra.mxu0 0
      %1088 = vmatprep.subr.bf16.mxu0 0
      %1089 = vmatpush1.bf16.msra.mxu0 0
      %1090 = vmatprep.subr.bf16.mxu0 0
      %1091 = vmatpush1.bf16.msra.mxu0 0
      %1092 = vmatprep.mubr.bf16.mxu0 0
      %1093 = vmatmul.mubr.bf16.gmra.mrb[0].mxu0 %v839
      %v1094 = vpop.f32.mrb[0].mxu0
      %v1095 = vadd.f32 %v885, %v1094
      %v1096 = vpop.f32.mrb[0].mxu0
      %v1097 = vpop.f32.mrb[0].mxu0
      %v1098 = vadd.f32 %v885, %v1097
      %v1099 = vpop.f32.mrb[0].mxu0
      %1100 = vdwg.mxu0
      %v1101 = vpack.c.bf16 %v1056, %v1052
      %v1102 = vpack.c.bf16 %v1058, %v1054
      %v1103 = vpack.c.bf16 %v1098, %v1095
      %v1104 = vlaneseq
      %v1105 = vand.u32 %v1104, 127
      %vm1106 = vcmp.ge.s32.totalorder %v1105, 0
      %vm1107 = vcmp.lt.s32.totalorder %v1105, 32
      %vm1108 = vmand %vm1106, %vm1107
      %v1109 = vsel %vm1108, 1, 0
      %v1110 = vcvt.s32.f32 %v1109
      %v1111 = vpack.c.bf16 %v1110, %v1110
      %vm1112 = vcmp.ge.s32.totalorder %v1105, 32
      %vm1113 = vcmp.lt.s32.totalorder %v1105, 64
      %vm1114 = vmand %vm1112, %vm1113
      %v1115 = vsel %vm1114, 1, 0
      %v1116 = vcvt.s32.f32 %v1115
      %v1117 = vpack.c.bf16 %v1116, %v1116
      %vm1118 = vcmp.ge.s32.totalorder %v1105, 64
      %vm1119 = vcmp.lt.s32.totalorder %v1105, 96
      %vm1120 = vmand %vm1118, %vm1119
      %v1121 = vsel %vm1120, 1, 0
      %v1122 = vcvt.s32.f32 %v1121
      %v1123 = vpack.c.bf16 %v1122, %v1122
      %vm1124 = vcmp.ge.s32.totalorder %v1105, 96
      %vm1125 = vcmp.lt.s32.totalorder %v1105, 128
      %vm1126 = vmand %vm1124, %vm1125
      %v1127 = vsel %vm1126, 1, 0
      %v1128 = vcvt.s32.f32 %v1127
      %v1129 = vpack.c.bf16 %v1128, %v1128
      %vm1130 = vcmp.lt.s32.totalorder %v1105, 9
      %v1131 = vsel %vm1130, 0.0, -1e+30
      %v1132 = vmul.bf16 %v1102, %v1111
      %1133 = vmatprep.subr.bf16.mxu0 0
      %1134 = vmatpush1.bf16.xpose.msra.mxu0 %v1132
      %1135 = vmatprep.subr.bf16.mxu0 0
      %1136 = vmatpush1.bf16.xpose.msra.mxu0 0
      %1137 = vmatprep.subr.bf16.mxu0 0
      %1138 = vmatpush1.bf16.xpose.msra.mxu0 0
      %1139 = vmatprep.subr.bf16.mxu0 0
      %1140 = vmatpush1.bf16.xpose.msra.mxu0 0
      %1141 = vmatprep.subr.bf16.mxu0 0
      %1142 = vmatpush1.bf16.xpose.msra.mxu0 0
      %1143 = vmatprep.subr.bf16.mxu0 0
      %1144 = vmatpush1.bf16.xpose.msra.mxu0 0
      %1145 = vmatprep.subr.bf16.mxu0 0
      %1146 = vmatpush1.bf16.xpose.msra.mxu0 0
      %1147 = vmatprep.subr.bf16.mxu0 0
      %1148 = vmatpush1.bf16.xpose.msra.mxu0 0
      %1149 = vmatprep.subr.bf16.mxu0 0
      %1150 = vmatpush1.bf16.xpose.msra.mxu0 0
      %1151 = vmatprep.subr.bf16.mxu0 0
      %1152 = vmatpush1.bf16.xpose.msra.mxu0 0
      %1153 = vmatprep.subr.bf16.mxu0 0
      %1154 = vmatpush1.bf16.xpose.msra.mxu0 0
      %1155 = vmatprep.subr.bf16.mxu0 0
      %1156 = vmatpush1.bf16.xpose.msra.mxu0 0
      %1157 = vmatprep.subr.bf16.mxu0 0
      %1158 = vmatpush1.bf16.xpose.msra.mxu0 0
      %1159 = vmatprep.subr.bf16.mxu0 0
      %1160 = vmatpush1.bf16.xpose.msra.mxu0 0
      %1161 = vmatprep.subr.bf16.mxu0 0
      %1162 = vmatpush1.bf16.xpose.msra.mxu0 0
      %1163 = vmatprep.subr.bf16.mxu0 0
      %1164 = vmatpush1.bf16.xpose.msra.mxu0 0
      %1165 = vmatprep.mubr.bf16.mxu0 0
      %1166 = vmatmul.mubr.bf16.gmra.mrb[0].mxu0 %v1101
      %v1167 = vpop.f32.mrb[0].mxu0
      %v1168 = vadd.f32 0.0, %v1167
      %v1169 = vpop.f32.mrb[0].mxu0
      %v1170 = vpop.f32.mrb[0].mxu0
      %v1171 = vadd.f32 0.0, %v1170
      %v1172 = vpop.f32.mrb[0].mxu0
      %1173 = vdwg.mxu0
      %v1174 = vmul.f32 %v1168, 0.17677669
      %v1175 = vmul.f32 %v1171, 0.17677669
      %v1176 = vadd.f32 %v1174, %v1131
      %v1177 = vadd.f32 %v1175, %v1131
      %vm1178 = vcmask 130048
      %v1179 = vsel %vm1178, %v1176, -inf
      %1180 = vmax.xlane.f32.xlu0 %v1179
      %v1181 = vpop.xlane.xlu0 %1180
      %v1182 = vsel %vm1178, %v1177, -inf
      %1183 = vmax.xlane.f32.xlu0 %v1182
      %v1184 = vpop.xlane.xlu0 %1183
      %v1185 = vsub.f32 %v1176, %v1181
      %v1186 = vsub.f32 %v1177, %v1184
      %v1187 = vmul.f32 %v1185, 1.442695
      %v1188 = vpow.pop %v1187
      %v1189 = vmul.f32 %v1186, 1.442695
      %v1190 = vpow.pop %v1189
      %v1191 = vsel %vm1178, %v1188, 0.0
      %1192 = vadd.xlane.f32.xlu0 %v1191
      %v1193 = vpop.xlane.xlu0 %1192
      %v1194 = vsel %vm1178, %v1190, 0.0
      %1195 = vadd.xlane.f32.xlu0 %v1194
      %v1196 = vpop.xlane.xlu0 %1195
      %v1197 = vrcp.pop %v1193
      %v1198 = vrcp.pop %v1196
      %v1199 = vmul.f32 %v1188, %v1197
      %v1200 = vmul.f32 %v1190, %v1198
      %v1201 = vpack.c.bf16 %v1200, %v1199
      %v1202 = vmul.bf16 %v1103, %v1111
      %v1203 = vmul.bf16 %v1102, %v1117
      %1204 = vmatprep.subr.bf16.mxu0 0
      %1205 = vmatpush1.bf16.xpose.msra.mxu0 %v1203
      %1206 = vmatprep.subr.bf16.mxu0 0
      %1207 = vmatpush1.bf16.xpose.msra.mxu0 0
      %1208 = vmatprep.subr.bf16.mxu0 0
      %1209 = vmatpush1.bf16.xpose.msra.mxu0 0
      %1210 = vmatprep.subr.bf16.mxu0 0
      %1211 = vmatpush1.bf16.xpose.msra.mxu0 0
      %1212 = vmatprep.subr.bf16.mxu0 0
      %1213 = vmatpush1.bf16.xpose.msra.mxu0 0
      %1214 = vmatprep.subr.bf16.mxu0 0
      %1215 = vmatpush1.bf16.xpose.msra.mxu0 0
      %1216 = vmatprep.subr.bf16.mxu0 0
      %1217 = vmatpush1.bf16.xpose.msra.mxu0 0
      %1218 = vmatprep.subr.bf16.mxu0 0
      %1219 = vmatpush1.bf16.xpose.msra.mxu0 0
      %1220 = vmatprep.subr.bf16.mxu0 0
      %1221 = vmatpush1.bf16.xpose.msra.mxu0 0
      %1222 = vmatprep.subr.bf16.mxu0 0
      %1223 = vmatpush1.bf16.xpose.msra.mxu0 0
      %1224 = vmatprep.subr.bf16.mxu0 0
      %1225 = vmatpush1.bf16.xpose.msra.mxu0 0
      %1226 = vmatprep.subr.bf16.mxu0 0
      %1227 = vmatpush1.bf16.xpose.msra.mxu0 0
      %1228 = vmatprep.subr.bf16.mxu0 0
      %1229 = vmatpush1.bf16.xpose.msra.mxu0 0
      %1230 = vmatprep.subr.bf16.mxu0 0
      %1231 = vmatpush1.bf16.xpose.msra.mxu0 0
      %1232 = vmatprep.subr.bf16.mxu0 0
      %1233 = vmatpush1.bf16.xpose.msra.mxu0 0
      %1234 = vmatprep.subr.bf16.mxu0 0
      %1235 = vmatpush1.bf16.xpose.msra.mxu0 0
      %1236 = vmatprep.mubr.bf16.mxu0 0
      %1237 = vmatmul.mubr.bf16.gmra.mrb[0].mxu0 %v1101
      %v1238 = vpop.f32.mrb[0].mxu0
      %v1239 = vadd.f32 0.0, %v1238
      %v1240 = vpop.f32.mrb[0].mxu0
      %v1241 = vpop.f32.mrb[0].mxu0
      %v1242 = vadd.f32 0.0, %v1241
      %v1243 = vpop.f32.mrb[0].mxu0
      %1244 = vdwg.mxu0
      %v1245 = vmul.f32 %v1239, 0.17677669
      %v1246 = vmul.f32 %v1242, 0.17677669
      %v1247 = vadd.f32 %v1245, %v1131
      %v1248 = vadd.f32 %v1246, %v1131
      %v1249 = vsel %vm1178, %v1247, -inf
      %1250 = vmax.xlane.f32.xlu0 %v1249
      %v1251 = vpop.xlane.xlu0 %1250
      %v1252 = vsel %vm1178, %v1248, -inf
      %1253 = vmax.xlane.f32.xlu0 %v1252
      %v1254 = vpop.xlane.xlu0 %1253
      %v1255 = vsub.f32 %v1247, %v1251
      %v1256 = vsub.f32 %v1248, %v1254
      %v1257 = vmul.f32 %v1255, 1.442695
      %v1258 = vpow.pop %v1257
      %v1259 = vmul.f32 %v1256, 1.442695
      %v1260 = vpow.pop %v1259
      %v1261 = vsel %vm1178, %v1258, 0.0
      %1262 = vadd.xlane.f32.xlu0 %v1261
      %v1263 = vpop.xlane.xlu0 %1262
      %v1264 = vsel %vm1178, %v1260, 0.0
      %1265 = vadd.xlane.f32.xlu0 %v1264
      %v1266 = vpop.xlane.xlu0 %1265
      %v1267 = vrcp.pop %v1263
      %v1268 = vrcp.pop %v1266
      %v1269 = vmul.f32 %v1258, %v1267
      %v1270 = vmul.f32 %v1260, %v1268
      %v1271 = vpack.c.bf16 %v1270, %v1269
      %v1272 = vmul.bf16 %v1103, %v1117
      %v1274 = vsel %vm1178, %v1271, 0
      %1276 = vmatprep.subr.bf16.mxu0 0
      %1277 = vmatpush1.bf16.msra.mxu0 %v1272
      %1278 = vmatprep.subr.bf16.mxu0 0
      %1279 = vmatpush1.bf16.msra.mxu0 0
      %1280 = vmatprep.subr.bf16.mxu0 0
      %1281 = vmatpush1.bf16.msra.mxu0 0
      %1282 = vmatprep.subr.bf16.mxu0 0
      %1283 = vmatpush1.bf16.msra.mxu0 0
      %1284 = vmatprep.subr.bf16.mxu0 0
      %1285 = vmatpush1.bf16.msra.mxu0 0
      %1286 = vmatprep.subr.bf16.mxu0 0
      %1287 = vmatpush1.bf16.msra.mxu0 0
      %1288 = vmatprep.subr.bf16.mxu0 0
      %1289 = vmatpush1.bf16.msra.mxu0 0
      %1290 = vmatprep.subr.bf16.mxu0 0
      %1291 = vmatpush1.bf16.msra.mxu0 0
      %1292 = vmatprep.subr.bf16.mxu0 0
      %1293 = vmatpush1.bf16.msra.mxu0 0
      %1294 = vmatprep.subr.bf16.mxu0 0
      %1295 = vmatpush1.bf16.msra.mxu0 0
      %1296 = vmatprep.subr.bf16.mxu0 0
      %1297 = vmatpush1.bf16.msra.mxu0 0
      %1298 = vmatprep.subr.bf16.mxu0 0
      %1299 = vmatpush1.bf16.msra.mxu0 0
      %1300 = vmatprep.subr.bf16.mxu0 0
      %1301 = vmatpush1.bf16.msra.mxu0 0
      %1302 = vmatprep.subr.bf16.mxu0 0
      %1303 = vmatpush1.bf16.msra.mxu0 0
      %1304 = vmatprep.subr.bf16.mxu0 0
      %1305 = vmatpush1.bf16.msra.mxu0 0
      %1306 = vmatprep.subr.bf16.mxu0 0
      %1307 = vmatpush1.bf16.msra.mxu0 0
      %1308 = vmatprep.mubr.bf16.mxu0 0
      %1309 = vmatmul.mubr.bf16.gmra.mrb[0].mxu0 %v1274
      %v1310 = vpop.f32.mrb[0].mxu0
      %v1311 = vadd.f32 0.0, %v1310
      %v1312 = vpop.f32.mrb[0].mxu0
      %v1313 = vpop.f32.mrb[0].mxu0
      %v1314 = vadd.f32 0.0, %v1313
      %v1315 = vpop.f32.mrb[0].mxu0
      %1316 = vdwg.mxu0
      %v1318 = vsel %vm1178, %v1201, 0
      %1320 = vmatprep.subr.bf16.mxu0 0
      %1321 = vmatpush1.bf16.msra.mxu0 %v1202
      %1322 = vmatprep.subr.bf16.mxu0 0
      %1323 = vmatpush1.bf16.msra.mxu0 0
      %1324 = vmatprep.subr.bf16.mxu0 0
      %1325 = vmatpush1.bf16.msra.mxu0 0
      %1326 = vmatprep.subr.bf16.mxu0 0
      %1327 = vmatpush1.bf16.msra.mxu0 0
      %1328 = vmatprep.subr.bf16.mxu0 0
      %1329 = vmatpush1.bf16.msra.mxu0 0
      %1330 = vmatprep.subr.bf16.mxu0 0
      %1331 = vmatpush1.bf16.msra.mxu0 0
      %1332 = vmatprep.subr.bf16.mxu0 0
      %1333 = vmatpush1.bf16.msra.mxu0 0
      %1334 = vmatprep.subr.bf16.mxu0 0
      %1335 = vmatpush1.bf16.msra.mxu0 0
      %1336 = vmatprep.subr.bf16.mxu0 0
      %1337 = vmatpush1.bf16.msra.mxu0 0
      %1338 = vmatprep.subr.bf16.mxu0 0
      %1339 = vmatpush1.bf16.msra.mxu0 0
      %1340 = vmatprep.subr.bf16.mxu0 0
      %1341 = vmatpush1.bf16.msra.mxu0 0
      %1342 = vmatprep.subr.bf16.mxu0 0
      %1343 = vmatpush1.bf16.msra.mxu0 0
      %1344 = vmatprep.subr.bf16.mxu0 0
      %1345 = vmatpush1.bf16.msra.mxu0 0
      %1346 = vmatprep.subr.bf16.mxu0 0
      %1347 = vmatpush1.bf16.msra.mxu0 0
      %1348 = vmatprep.subr.bf16.mxu0 0
      %1349 = vmatpush1.bf16.msra.mxu0 0
      %1350 = vmatprep.subr.bf16.mxu0 0
      %1351 = vmatpush1.bf16.msra.mxu0 0
      %1352 = vmatprep.mubr.bf16.mxu0 0
      %1353 = vmatmul.mubr.bf16.gmra.mrb[0].mxu0 %v1318
      %v1354 = vpop.f32.mrb[0].mxu0
      %v1355 = vadd.f32 %v1311, %v1354
      %v1356 = vpop.f32.mrb[0].mxu0
      %v1357 = vpop.f32.mrb[0].mxu0
      %v1358 = vadd.f32 %v1314, %v1357
      %v1359 = vpop.f32.mrb[0].mxu0
      %1360 = vdwg.mxu0
      %v1361 = vmul.bf16 %v1102, %v1123
      %1362 = vmatprep.subr.bf16.mxu0 0
      %1363 = vmatpush1.bf16.xpose.msra.mxu0 %v1361
      %1364 = vmatprep.subr.bf16.mxu0 0
      %1365 = vmatpush1.bf16.xpose.msra.mxu0 0
      %1366 = vmatprep.subr.bf16.mxu0 0
      %1367 = vmatpush1.bf16.xpose.msra.mxu0 0
      %1368 = vmatprep.subr.bf16.mxu0 0
      %1369 = vmatpush1.bf16.xpose.msra.mxu0 0
      %1370 = vmatprep.subr.bf16.mxu0 0
      %1371 = vmatpush1.bf16.xpose.msra.mxu0 0
      %1372 = vmatprep.subr.bf16.mxu0 0
      %1373 = vmatpush1.bf16.xpose.msra.mxu0 0
      %1374 = vmatprep.subr.bf16.mxu0 0
      %1375 = vmatpush1.bf16.xpose.msra.mxu0 0
      %1376 = vmatprep.subr.bf16.mxu0 0
      %1377 = vmatpush1.bf16.xpose.msra.mxu0 0
      %1378 = vmatprep.subr.bf16.mxu0 0
      %1379 = vmatpush1.bf16.xpose.msra.mxu0 0
      %1380 = vmatprep.subr.bf16.mxu0 0
      %1381 = vmatpush1.bf16.xpose.msra.mxu0 0
      %1382 = vmatprep.subr.bf16.mxu0 0
      %1383 = vmatpush1.bf16.xpose.msra.mxu0 0
      %1384 = vmatprep.subr.bf16.mxu0 0
      %1385 = vmatpush1.bf16.xpose.msra.mxu0 0
      %1386 = vmatprep.subr.bf16.mxu0 0
      %1387 = vmatpush1.bf16.xpose.msra.mxu0 0
      %1388 = vmatprep.subr.bf16.mxu0 0
      %1389 = vmatpush1.bf16.xpose.msra.mxu0 0
      %1390 = vmatprep.subr.bf16.mxu0 0
      %1391 = vmatpush1.bf16.xpose.msra.mxu0 0
      %1392 = vmatprep.subr.bf16.mxu0 0
      %1393 = vmatpush1.bf16.xpose.msra.mxu0 0
      %1394 = vmatprep.mubr.bf16.mxu0 0
      %1395 = vmatmul.mubr.bf16.gmra.mrb[0].mxu0 %v1101
      %v1396 = vpop.f32.mrb[0].mxu0
      %v1397 = vadd.f32 0.0, %v1396
      %v1398 = vpop.f32.mrb[0].mxu0
      %v1399 = vpop.f32.mrb[0].mxu0
      %v1400 = vadd.f32 0.0, %v1399
      %v1401 = vpop.f32.mrb[0].mxu0
      %1402 = vdwg.mxu0
      %v1403 = vmul.f32 %v1397, 0.17677669
      %v1404 = vmul.f32 %v1400, 0.17677669
      %v1405 = vadd.f32 %v1403, %v1131
      %v1406 = vadd.f32 %v1404, %v1131
      %v1407 = vsel %vm1178, %v1405, -inf
      %1408 = vmax.xlane.f32.xlu0 %v1407
      %v1409 = vpop.xlane.xlu0 %1408
      %v1410 = vsel %vm1178, %v1406, -inf
      %1411 = vmax.xlane.f32.xlu0 %v1410
      %v1412 = vpop.xlane.xlu0 %1411
      %v1413 = vsub.f32 %v1405, %v1409
      %v1414 = vsub.f32 %v1406, %v1412
      %v1415 = vmul.f32 %v1413, 1.442695
      %v1416 = vpow.pop %v1415
      %v1417 = vmul.f32 %v1414, 1.442695
      %v1418 = vpow.pop %v1417
      %v1419 = vsel %vm1178, %v1416, 0.0
      %1420 = vadd.xlane.f32.xlu0 %v1419
      %v1421 = vpop.xlane.xlu0 %1420
      %v1422 = vsel %vm1178, %v1418, 0.0
      %1423 = vadd.xlane.f32.xlu0 %v1422
      %v1424 = vpop.xlane.xlu0 %1423
      %v1425 = vrcp.pop %v1421
      %v1426 = vrcp.pop %v1424
      %v1427 = vmul.f32 %v1416, %v1425
      %v1428 = vmul.f32 %v1418, %v1426
      %v1429 = vpack.c.bf16 %v1428, %v1427
      %v1430 = vmul.bf16 %v1103, %v1123
      %v1432 = vsel %vm1178, %v1429, 0
      %1434 = vmatprep.subr.bf16.mxu0 0
      %1435 = vmatpush1.bf16.msra.mxu0 %v1430
      %1436 = vmatprep.subr.bf16.mxu0 0
      %1437 = vmatpush1.bf16.msra.mxu0 0
      %1438 = vmatprep.subr.bf16.mxu0 0
      %1439 = vmatpush1.bf16.msra.mxu0 0
      %1440 = vmatprep.subr.bf16.mxu0 0
      %1441 = vmatpush1.bf16.msra.mxu0 0
      %1442 = vmatprep.subr.bf16.mxu0 0
      %1443 = vmatpush1.bf16.msra.mxu0 0
      %1444 = vmatprep.subr.bf16.mxu0 0
      %1445 = vmatpush1.bf16.msra.mxu0 0
      %1446 = vmatprep.subr.bf16.mxu0 0
      %1447 = vmatpush1.bf16.msra.mxu0 0
      %1448 = vmatprep.subr.bf16.mxu0 0
      %1449 = vmatpush1.bf16.msra.mxu0 0
      %1450 = vmatprep.subr.bf16.mxu0 0
      %1451 = vmatpush1.bf16.msra.mxu0 0
      %1452 = vmatprep.subr.bf16.mxu0 0
      %1453 = vmatpush1.bf16.msra.mxu0 0
      %1454 = vmatprep.subr.bf16.mxu0 0
      %1455 = vmatpush1.bf16.msra.mxu0 0
      %1456 = vmatprep.subr.bf16.mxu0 0
      %1457 = vmatpush1.bf16.msra.mxu0 0
      %1458 = vmatprep.subr.bf16.mxu0 0
      %1459 = vmatpush1.bf16.msra.mxu0 0
      %1460 = vmatprep.subr.bf16.mxu0 0
      %1461 = vmatpush1.bf16.msra.mxu0 0
      %1462 = vmatprep.subr.bf16.mxu0 0
      %1463 = vmatpush1.bf16.msra.mxu0 0
      %1464 = vmatprep.subr.bf16.mxu0 0
      %1465 = vmatpush1.bf16.msra.mxu0 0
      %1466 = vmatprep.mubr.bf16.mxu0 0
      %1467 = vmatmul.mubr.bf16.gmra.mrb[0].mxu0 %v1432
      %v1468 = vpop.f32.mrb[0].mxu0
      %v1469 = vadd.f32 0.0, %v1468
      %v1470 = vpop.f32.mrb[0].mxu0
      %v1471 = vpop.f32.mrb[0].mxu0
      %v1472 = vadd.f32 0.0, %v1471
      %v1473 = vpop.f32.mrb[0].mxu0
      %1474 = vdwg.mxu0
      %v1475 = vadd.f32 %v1355, %v1469
      %v1476 = vadd.f32 %v1358, %v1472
      %v1477 = vmul.bf16 %v1102, %v1129
      %1478 = vmatprep.subr.bf16.mxu0 0
      %1479 = vmatpush1.bf16.xpose.msra.mxu0 %v1477
      %1480 = vmatprep.subr.bf16.mxu0 0
      %1481 = vmatpush1.bf16.xpose.msra.mxu0 0
      %1482 = vmatprep.subr.bf16.mxu0 0
      %1483 = vmatpush1.bf16.xpose.msra.mxu0 0
      %1484 = vmatprep.subr.bf16.mxu0 0
      %1485 = vmatpush1.bf16.xpose.msra.mxu0 0
      %1486 = vmatprep.subr.bf16.mxu0 0
      %1487 = vmatpush1.bf16.xpose.msra.mxu0 0
      %1488 = vmatprep.subr.bf16.mxu0 0
      %1489 = vmatpush1.bf16.xpose.msra.mxu0 0
      %1490 = vmatprep.subr.bf16.mxu0 0
      %1491 = vmatpush1.bf16.xpose.msra.mxu0 0
      %1492 = vmatprep.subr.bf16.mxu0 0
      %1493 = vmatpush1.bf16.xpose.msra.mxu0 0
      %1494 = vmatprep.subr.bf16.mxu0 0
      %1495 = vmatpush1.bf16.xpose.msra.mxu0 0
      %1496 = vmatprep.subr.bf16.mxu0 0
      %1497 = vmatpush1.bf16.xpose.msra.mxu0 0
      %1498 = vmatprep.subr.bf16.mxu0 0
      %1499 = vmatpush1.bf16.xpose.msra.mxu0 0
      %1500 = vmatprep.subr.bf16.mxu0 0
      %1501 = vmatpush1.bf16.xpose.msra.mxu0 0
      %1502 = vmatprep.subr.bf16.mxu0 0
      %1503 = vmatpush1.bf16.xpose.msra.mxu0 0
      %1504 = vmatprep.subr.bf16.mxu0 0
      %1505 = vmatpush1.bf16.xpose.msra.mxu0 0
      %1506 = vmatprep.subr.bf16.mxu0 0
      %1507 = vmatpush1.bf16.xpose.msra.mxu0 0
      %1508 = vmatprep.subr.bf16.mxu0 0
      %1509 = vmatpush1.bf16.xpose.msra.mxu0 0
      %1510 = vmatprep.mubr.bf16.mxu0 0
      %1511 = vmatmul.mubr.bf16.gmra.mrb[0].mxu0 %v1101
      %v1512 = vpop.f32.mrb[0].mxu0
      %v1513 = vadd.f32 0.0, %v1512
      %v1514 = vpop.f32.mrb[0].mxu0
      %v1515 = vpop.f32.mrb[0].mxu0
      %v1516 = vadd.f32 0.0, %v1515
      %v1517 = vpop.f32.mrb[0].mxu0
      %1518 = vdwg.mxu0
      %v1519 = vmul.f32 %v1513, 0.17677669
      %v1520 = vmul.f32 %v1516, 0.17677669
      %v1521 = vadd.f32 %v1519, %v1131
      %v1522 = vadd.f32 %v1520, %v1131
      %v1523 = vsel %vm1178, %v1521, -inf
      %1524 = vmax.xlane.f32.xlu0 %v1523
      %v1525 = vpop.xlane.xlu0 %1524
      %v1526 = vsel %vm1178, %v1522, -inf
      %1527 = vmax.xlane.f32.xlu0 %v1526
      %v1528 = vpop.xlane.xlu0 %1527
      %v1529 = vsub.f32 %v1521, %v1525
      %v1530 = vsub.f32 %v1522, %v1528
      %v1531 = vmul.f32 %v1529, 1.442695
      %v1532 = vpow.pop %v1531
      %v1533 = vmul.f32 %v1530, 1.442695
      %v1534 = vpow.pop %v1533
      %v1535 = vsel %vm1178, %v1532, 0.0
      %1536 = vadd.xlane.f32.xlu0 %v1535
      %v1537 = vpop.xlane.xlu0 %1536
      %v1538 = vsel %vm1178, %v1534, 0.0
      %1539 = vadd.xlane.f32.xlu0 %v1538
      %v1540 = vpop.xlane.xlu0 %1539
      %v1541 = vrcp.pop %v1537
      %v1542 = vrcp.pop %v1540
      %v1543 = vmul.f32 %v1532, %v1541
      %v1544 = vmul.f32 %v1534, %v1542
      %v1545 = vpack.c.bf16 %v1544, %v1543
      %v1546 = vmul.bf16 %v1103, %v1129
      %v1548 = vsel %vm1178, %v1545, 0
      %1550 = vmatprep.subr.bf16.mxu0 0
      %1551 = vmatpush1.bf16.msra.mxu0 %v1546
      %1552 = vmatprep.subr.bf16.mxu0 0
      %1553 = vmatpush1.bf16.msra.mxu0 0
      %1554 = vmatprep.subr.bf16.mxu0 0
      %1555 = vmatpush1.bf16.msra.mxu0 0
      %1556 = vmatprep.subr.bf16.mxu0 0
      %1557 = vmatpush1.bf16.msra.mxu0 0
      %1558 = vmatprep.subr.bf16.mxu0 0
      %1559 = vmatpush1.bf16.msra.mxu0 0
      %1560 = vmatprep.subr.bf16.mxu0 0
      %1561 = vmatpush1.bf16.msra.mxu0 0
      %1562 = vmatprep.subr.bf16.mxu0 0
      %1563 = vmatpush1.bf16.msra.mxu0 0
      %1564 = vmatprep.subr.bf16.mxu0 0
      %1565 = vmatpush1.bf16.msra.mxu0 0
      %1566 = vmatprep.subr.bf16.mxu0 0
      %1567 = vmatpush1.bf16.msra.mxu0 0
      %1568 = vmatprep.subr.bf16.mxu0 0
      %1569 = vmatpush1.bf16.msra.mxu0 0
      %1570 = vmatprep.subr.bf16.mxu0 0
      %1571 = vmatpush1.bf16.msra.mxu0 0
      %1572 = vmatprep.subr.bf16.mxu0 0
      %1573 = vmatpush1.bf16.msra.mxu0 0
      %1574 = vmatprep.subr.bf16.mxu0 0
      %1575 = vmatpush1.bf16.msra.mxu0 0
      %1576 = vmatprep.subr.bf16.mxu0 0
      %1577 = vmatpush1.bf16.msra.mxu0 0
      %1578 = vmatprep.subr.bf16.mxu0 0
      %1579 = vmatpush1.bf16.msra.mxu0 0
      %1580 = vmatprep.subr.bf16.mxu0 0
      %1581 = vmatpush1.bf16.msra.mxu0 0
      %1582 = vmatprep.mubr.bf16.mxu0 0
      %1583 = vmatmul.mubr.bf16.gmra.mrb[0].mxu0 %v1548
      %v1584 = vpop.f32.mrb[0].mxu0
      %v1585 = vadd.f32 0.0, %v1584
      %v1586 = vpop.f32.mrb[0].mxu0
      %v1587 = vpop.f32.mrb[0].mxu0
      %v1588 = vadd.f32 0.0, %v1587
      %v1589 = vpop.f32.mrb[0].mxu0
      %1590 = vdwg.mxu0
      %v1591 = vadd.f32 %v1475, %v1585
      %v1592 = vadd.f32 %v1476, %v1588
      %v1593 = vpack.c.bf16 %v1592, %v1591
      %v1594 = vld [vmem:[%s749] sm:$0xf]
      %v1595 = vld [vmem:[%s749 + $0x4] sm:$0xf]
      %v1596 = vld [vmem:[%s749 + $0x8] sm:$0xf]
      %v1597 = vld [vmem:[%s749 + $0xc] sm:$0xf]
      %v1598 = vld [vmem:[%s749 + $0x10] sm:$0xf]
      %v1599 = vld [vmem:[%s749 + $0x14] sm:$0xf]
      %v1600 = vld [vmem:[%s749 + $0x18] sm:$0xf]
      %v1601 = vld [vmem:[%s749 + $0x1c] sm:$0xf]
      %v1602 = vld [vmem:[%s749 + $0x20] sm:$0xf]
      %v1603 = vld [vmem:[%s749 + $0x24] sm:$0xf]
      %v1604 = vld [vmem:[%s749 + $0x28] sm:$0xf]
      %v1605 = vld [vmem:[%s749 + $0x2c] sm:$0xf]
      %v1606 = vld [vmem:[%s749 + $0x30] sm:$0xf]
      %v1607 = vld [vmem:[%s749 + $0x34] sm:$0xf]
      %v1608 = vld [vmem:[%s749 + $0x38] sm:$0xf]
      %v1609 = vld [vmem:[%s749 + $0x3c] sm:$0xf]
      %v1610 = vld [vmem:[%s752] sm:$0x1]
      %v1612 = vlaneseq
      %v1613 = vshrl.u32 %v1612, 7
      %v1614 = vsub.s32 0, %v1613
      %v1615 = vrot.slane %v1610, %v1614
      %v1633 = vunpack.c.l.b16 %v1594
      %v1634 = vunpack.c.l.b16 %v1595
      %v1635 = vunpack.c.l.b16 %v1596
      %v1636 = vunpack.c.l.b16 %v1597
      %v1637 = vunpack.c.l.b16 %v1598
      %v1638 = vunpack.c.l.b16 %v1599
      %v1639 = vunpack.c.l.b16 %v1600
      %v1640 = vunpack.c.l.b16 %v1601
      %v1641 = vunpack.c.l.b16 %v1602
      %v1642 = vunpack.c.l.b16 %v1603
      %v1643 = vunpack.c.l.b16 %v1604
      %v1644 = vunpack.c.l.b16 %v1605
      %v1645 = vunpack.c.l.b16 %v1606
      %v1646 = vunpack.c.l.b16 %v1607
      %v1647 = vunpack.c.l.b16 %v1608
      %v1648 = vunpack.c.l.b16 %v1609
      %v1649 = vpack.c.b16 %v1634, %v1633
      %v1650 = vpack.c.b16 %v1636, %v1635
      %v1651 = vpack.c.b16 %v1638, %v1637
      %v1652 = vpack.c.b16 %v1640, %v1639
      %v1653 = vpack.c.b16 %v1642, %v1641
      %v1654 = vpack.c.b16 %v1644, %v1643
      %v1655 = vpack.c.b16 %v1646, %v1645
      %v1656 = vpack.c.b16 %v1648, %v1647
      %1665 = vmatprep.subr.bf16.mxu0 0
      %1666 = vmatpush1.bf16.msra.mxu0 %v1649
      %1667 = vmatprep.subr.bf16.mxu0 0
      %1668 = vmatpush1.bf16.msra.mxu0 %v1650
      %1669 = vmatprep.subr.bf16.mxu0 0
      %1670 = vmatpush1.bf16.msra.mxu0 %v1651
      %1671 = vmatprep.subr.bf16.mxu0 0
      %1672 = vmatpush1.bf16.msra.mxu0 %v1652
      %1673 = vmatprep.subr.bf16.mxu0 0
      %1674 = vmatpush1.bf16.msra.mxu0 %v1653
      %1675 = vmatprep.subr.bf16.mxu0 0
      %1676 = vmatpush1.bf16.msra.mxu0 %v1654
      %1677 = vmatprep.subr.bf16.mxu0 0
      %1678 = vmatpush1.bf16.msra.mxu0 %v1655
      %1679 = vmatprep.subr.bf16.mxu0 0
      %1680 = vmatpush1.bf16.msra.mxu0 %v1656
      %1681 = vmatprep.subr.bf16.mxu0 0
      %1682 = vmatpush1.bf16.msra.mxu0 0
      %1683 = vmatprep.subr.bf16.mxu0 0
      %1684 = vmatpush1.bf16.msra.mxu0 0
      %1685 = vmatprep.subr.bf16.mxu0 0
      %1686 = vmatpush1.bf16.msra.mxu0 0
      %1687 = vmatprep.subr.bf16.mxu0 0
      %1688 = vmatpush1.bf16.msra.mxu0 0
      %1689 = vmatprep.subr.bf16.mxu0 0
      %1690 = vmatpush1.bf16.msra.mxu0 0
      %1691 = vmatprep.subr.bf16.mxu0 0
      %1692 = vmatpush1.bf16.msra.mxu0 0
      %1693 = vmatprep.subr.bf16.mxu0 0
      %1694 = vmatpush1.bf16.msra.mxu0 0
      %1695 = vmatprep.subr.bf16.mxu0 0
      %1696 = vmatpush1.bf16.msra.mxu0 0
      %1697 = vmatprep.mubr.bf16.mxu0 0
      %1698 = vmatmul.mubr.bf16.gmra.mrb[0].mxu0 %v1593
      %v1699 = vpop.f32.mrb[0].mxu0
      %v1700 = vadd.f32 %v1615, %v1699
      %v1701 = vpop.f32.mrb[0].mxu0
      %v1702 = vpop.f32.mrb[0].mxu0
      %v1703 = vadd.f32 %v1615, %v1702
      %v1704 = vpop.f32.mrb[0].mxu0
      %1705 = vdwg.mxu0
      %v1706 = vld [vmem:[%s755] sm:$0x1]
      %v1708 = vlaneseq
      %v1709 = vshrl.u32 %v1708, 7
      %v1710 = vsub.s32 0, %v1709
      %v1711 = vrot.slane %v1706, %v1710
      %v1713 = vmul.f32 %v1700, %v1711
      %v1714 = vmul.f32 %v1703, %v1711
      %v1715 = vadd.f32 %v796, %v1713
      %v1716 = vadd.f32 %v797, %v1714
      %v1717 = vld [vmem:[%s758] sm:$0x1]
      %v1718 = vld [vmem:[%s761] sm:$0x1]
      %1719 = vadd.xlane.f32.xlu0 %v1715
      %v1720 = vpop.xlane.xlu0 %1719
      %1721 = vadd.xlane.f32.xlu0 %v1716
      %v1722 = vpop.xlane.xlu0 %1721
      %v1723 = vmul.f32 %v1720, %v804
      %v1724 = vmul.f32 %v1722, %v804
      %v1725 = vsub.f32 %v1715, %v1723
      %v1726 = vsub.f32 %v1716, %v1724
      %v1727 = vmul.f32 %v1725, %v1725
      %v1728 = vmul.f32 %v1726, %v1726
      %1729 = vadd.xlane.f32.xlu0 %v1727
      %v1730 = vpop.xlane.xlu0 %1729
      %1731 = vadd.xlane.f32.xlu0 %v1728
      %v1732 = vpop.xlane.xlu0 %1731
      %v1733 = vmul.f32 %v1730, %v804
      %v1734 = vmul.f32 %v1732, %v804
      %v1735 = vadd.f32 %v1733, 1e-06
      %v1736 = vadd.f32 %v1734, 1e-06
      %v1737 = vrsqrt.pop %v1735
      %v1738 = vrsqrt.pop %v1736
      %v1739 = vmul.f32 %v1725, %v1737
      %v1740 = vmul.f32 %v1726, %v1738
      %v1742 = vlaneseq
      %v1743 = vshrl.u32 %v1742, 7
      %v1744 = vsub.s32 0, %v1743
      %v1745 = vrot.slane %v1717, %v1744
      %v1747 = vmul.f32 %v1739, %v1745
      %v1748 = vmul.f32 %v1740, %v1745
      %v1750 = vlaneseq
      %v1751 = vshrl.u32 %v1750, 7
      %v1752 = vsub.s32 0, %v1751
      %v1753 = vrot.slane %v1718, %v1752
      %v1755 = vadd.f32 %v1747, %v1753
      %v1756 = vadd.f32 %v1748, %v1753
      %v1757 = vpack.c.bf16 %v1756, %v1755
      %v1758 = vld [vmem:[%s766] sm:$0xff]
      %v1759 = vld [vmem:[%s766 + $0x8] sm:$0xff]
      %v1760 = vld [vmem:[%s766 + $0x10] sm:$0xff]
      %v1761 = vld [vmem:[%s766 + $0x18] sm:$0xff]
      %v1762 = vld [vmem:[%s766 + $0x20] sm:$0xff]
      %v1763 = vld [vmem:[%s766 + $0x28] sm:$0xff]
      %v1764 = vld [vmem:[%s766 + $0x30] sm:$0xff]
      %v1765 = vld [vmem:[%s766 + $0x38] sm:$0xff]
      %v1766 = vld [vmem:[%s766 + $0x40] sm:$0xff]
      %v1767 = vld [vmem:[%s766 + $0x48] sm:$0xff]
      %v1768 = vld [vmem:[%s766 + $0x50] sm:$0xff]
      %v1769 = vld [vmem:[%s766 + $0x58] sm:$0xff]
      %v1770 = vld [vmem:[%s766 + $0x60] sm:$0xff]
      %v1771 = vld [vmem:[%s766 + $0x68] sm:$0xff]
      %v1772 = vld [vmem:[%s766 + $0x70] sm:$0xff]
      %v1773 = vld [vmem:[%s766 + $0x78] sm:$0xff]
      %v1774 = vld [vmem:[%s766 + $0x80] sm:$0xff]
      %v1775 = vld [vmem:[%s766 + $0x88] sm:$0xff]
      %v1776 = vld [vmem:[%s766 + $0x90] sm:$0xff]
      %v1777 = vld [vmem:[%s766 + $0x98] sm:$0xff]
      %v1778 = vld [vmem:[%s766 + $0xa0] sm:$0xff]
      %v1779 = vld [vmem:[%s766 + $0xa8] sm:$0xff]
      %v1780 = vld [vmem:[%s766 + $0xb0] sm:$0xff]
      %v1781 = vld [vmem:[%s766 + $0xb8] sm:$0xff]
      %v1782 = vld [vmem:[%s766 + $0xc0] sm:$0xff]
      %v1783 = vld [vmem:[%s766 + $0xc8] sm:$0xff]
      %v1784 = vld [vmem:[%s766 + $0xd0] sm:$0xff]
      %v1785 = vld [vmem:[%s766 + $0xd8] sm:$0xff]
      %v1786 = vld [vmem:[%s766 + $0xe0] sm:$0xff]
      %v1787 = vld [vmem:[%s766 + $0xe8] sm:$0xff]
      %v1788 = vld [vmem:[%s766 + $0xf0] sm:$0xff]
      %v1789 = vld [vmem:[%s766 + $0xf8] sm:$0xff]
      %v1790 = vld [vmem:[%s770] sm:$0xf]
      %v1792 = vlaneseq
      %v1793 = vshrl.u32 %v1792, 7
      %v1794 = vsub.s32 0, %v1793
      %v1795 = vrot.slane %v1790, %v1794
      %v1796 = vlaneseq
      %v1797 = vshrl.u32 %v1796, 7
      %v1798 = vsub.s32 1, %v1797
      %v1799 = vrot.slane %v1790, %v1798
      %v1800 = vlaneseq
      %v1801 = vshrl.u32 %v1800, 7
      %v1802 = vsub.s32 2, %v1801
      %v1803 = vrot.slane %v1790, %v1802
      %v1804 = vlaneseq
      %v1805 = vshrl.u32 %v1804, 7
      %v1806 = vsub.s32 3, %v1805
      %v1807 = vrot.slane %v1790, %v1806
      %v1844 = vunpack.c.l.b16 %v1758
      %v1845 = vunpack.c.h.b16 %v1758
      %v1846 = vunpack.c.l.b16 %v1759
      %v1847 = vunpack.c.h.b16 %v1759
      %v1848 = vunpack.c.l.b16 %v1760
      %v1849 = vunpack.c.h.b16 %v1760
      %v1850 = vunpack.c.l.b16 %v1761
      %v1851 = vunpack.c.h.b16 %v1761
      %v1852 = vunpack.c.l.b16 %v1762
      %v1853 = vunpack.c.h.b16 %v1762
      %v1854 = vunpack.c.l.b16 %v1763
      %v1855 = vunpack.c.h.b16 %v1763
      %v1856 = vunpack.c.l.b16 %v1764
      %v1857 = vunpack.c.h.b16 %v1764
      %v1858 = vunpack.c.l.b16 %v1765
      %v1859 = vunpack.c.h.b16 %v1765
      %v1860 = vunpack.c.l.b16 %v1766
      %v1861 = vunpack.c.h.b16 %v1766
      %v1862 = vunpack.c.l.b16 %v1767
      %v1863 = vunpack.c.h.b16 %v1767
      %v1864 = vunpack.c.l.b16 %v1768
      %v1865 = vunpack.c.h.b16 %v1768
      %v1866 = vunpack.c.l.b16 %v1769
      %v1867 = vunpack.c.h.b16 %v1769
      %v1868 = vunpack.c.l.b16 %v1770
      %v1869 = vunpack.c.h.b16 %v1770
      %v1870 = vunpack.c.l.b16 %v1771
      %v1871 = vunpack.c.h.b16 %v1771
      %v1872 = vunpack.c.l.b16 %v1772
      %v1873 = vunpack.c.h.b16 %v1772
      %v1874 = vunpack.c.l.b16 %v1773
      %v1875 = vunpack.c.h.b16 %v1773
      %v1876 = vunpack.c.l.b16 %v1774
      %v1877 = vunpack.c.h.b16 %v1774
      %v1878 = vunpack.c.l.b16 %v1775
      %v1879 = vunpack.c.h.b16 %v1775
      %v1880 = vunpack.c.l.b16 %v1776
      %v1881 = vunpack.c.h.b16 %v1776
      %v1882 = vunpack.c.l.b16 %v1777
      %v1883 = vunpack.c.h.b16 %v1777
      %v1884 = vunpack.c.l.b16 %v1778
      %v1885 = vunpack.c.h.b16 %v1778
      %v1886 = vunpack.c.l.b16 %v1779
      %v1887 = vunpack.c.h.b16 %v1779
      %v1888 = vunpack.c.l.b16 %v1780
      %v1889 = vunpack.c.h.b16 %v1780
      %v1890 = vunpack.c.l.b16 %v1781
      %v1891 = vunpack.c.h.b16 %v1781
      %v1892 = vunpack.c.l.b16 %v1782
      %v1893 = vunpack.c.h.b16 %v1782
      %v1894 = vunpack.c.l.b16 %v1783
      %v1895 = vunpack.c.h.b16 %v1783
      %v1896 = vunpack.c.l.b16 %v1784
      %v1897 = vunpack.c.h.b16 %v1784
      %v1898 = vunpack.c.l.b16 %v1785
      %v1899 = vunpack.c.h.b16 %v1785
      %v1900 = vunpack.c.l.b16 %v1786
      %v1901 = vunpack.c.h.b16 %v1786
      %v1902 = vunpack.c.l.b16 %v1787
      %v1903 = vunpack.c.h.b16 %v1787
      %v1904 = vunpack.c.l.b16 %v1788
      %v1905 = vunpack.c.h.b16 %v1788
      %v1906 = vunpack.c.l.b16 %v1789
      %v1907 = vunpack.c.h.b16 %v1789
      %v1908 = vpack.c.b16 %v1848, %v1844
      %v1909 = vpack.c.b16 %v1849, %v1845
      %v1910 = vpack.c.b16 %v1850, %v1846
      %v1911 = vpack.c.b16 %v1851, %v1847
      %v1912 = vpack.c.b16 %v1856, %v1852
      %v1913 = vpack.c.b16 %v1857, %v1853
      %v1914 = vpack.c.b16 %v1858, %v1854
      %v1915 = vpack.c.b16 %v1859, %v1855
      %v1916 = vpack.c.b16 %v1864, %v1860
      %v1917 = vpack.c.b16 %v1865, %v1861
      %v1918 = vpack.c.b16 %v1866, %v1862
      %v1919 = vpack.c.b16 %v1867, %v1863
      %v1920 = vpack.c.b16 %v1872, %v1868
      %v1921 = vpack.c.b16 %v1873, %v1869
      %v1922 = vpack.c.b16 %v1874, %v1870
      %v1923 = vpack.c.b16 %v1875, %v1871
      %v1924 = vpack.c.b16 %v1880, %v1876
      %v1925 = vpack.c.b16 %v1881, %v1877
      %v1926 = vpack.c.b16 %v1882, %v1878
      %v1927 = vpack.c.b16 %v1883, %v1879
      %v1928 = vpack.c.b16 %v1888, %v1884
      %v1929 = vpack.c.b16 %v1889, %v1885
      %v1930 = vpack.c.b16 %v1890, %v1886
      %v1931 = vpack.c.b16 %v1891, %v1887
      %v1932 = vpack.c.b16 %v1896, %v1892
      %v1933 = vpack.c.b16 %v1897, %v1893
      %v1934 = vpack.c.b16 %v1898, %v1894
      %v1935 = vpack.c.b16 %v1899, %v1895
      %v1936 = vpack.c.b16 %v1904, %v1900
      %v1937 = vpack.c.b16 %v1905, %v1901
      %v1938 = vpack.c.b16 %v1906, %v1902
      %v1939 = vpack.c.b16 %v1907, %v1903
      %1972 = vmatprep.subr.bf16.mxu0 %v1909
      %1973 = vmatpush1.bf16.msra.mxu0 %v1908
      %1974 = vmatprep.subr.bf16.mxu0 %v1913
      %1975 = vmatpush1.bf16.msra.mxu0 %v1912
      %1976 = vmatprep.subr.bf16.mxu0 %v1917
      %1977 = vmatpush1.bf16.msra.mxu0 %v1916
      %1978 = vmatprep.subr.bf16.mxu0 %v1921
      %1979 = vmatpush1.bf16.msra.mxu0 %v1920
      %1980 = vmatprep.subr.bf16.mxu0 %v1925
      %1981 = vmatpush1.bf16.msra.mxu0 %v1924
      %1982 = vmatprep.subr.bf16.mxu0 %v1929
      %1983 = vmatpush1.bf16.msra.mxu0 %v1928
      %1984 = vmatprep.subr.bf16.mxu0 %v1933
      %1985 = vmatpush1.bf16.msra.mxu0 %v1932
      %1986 = vmatprep.subr.bf16.mxu0 %v1937
      %1987 = vmatpush1.bf16.msra.mxu0 %v1936
      %1988 = vmatprep.subr.bf16.mxu0 0
      %1989 = vmatpush1.bf16.msra.mxu0 0
      %1990 = vmatprep.subr.bf16.mxu0 0
      %1991 = vmatpush1.bf16.msra.mxu0 0
      %1992 = vmatprep.subr.bf16.mxu0 0
      %1993 = vmatpush1.bf16.msra.mxu0 0
      %1994 = vmatprep.subr.bf16.mxu0 0
      %1995 = vmatpush1.bf16.msra.mxu0 0
      %1996 = vmatprep.subr.bf16.mxu0 0
      %1997 = vmatpush1.bf16.msra.mxu0 0
      %1998 = vmatprep.subr.bf16.mxu0 0
      %1999 = vmatpush1.bf16.msra.mxu0 0
      %2000 = vmatprep.subr.bf16.mxu0 0
      %2001 = vmatpush1.bf16.msra.mxu0 0
      %2002 = vmatprep.subr.bf16.mxu0 0
      %2003 = vmatpush1.bf16.msra.mxu0 0
      %2004 = vmatprep.mubr.bf16.mxu0 0
      %2005 = vmatmul.mubr.bf16.gmra.mrb[0].mxu0 %v1757
      %v2006 = vpop.f32.mrb[0].mxu0
      %v2007 = vadd.f32 %v1795, %v2006
      %v2008 = vpop.f32.mrb[0].mxu0
      %v2009 = vadd.f32 %v1799, %v2008
      %v2010 = vpop.f32.mrb[0].mxu0
      %v2011 = vadd.f32 %v1795, %v2010
      %v2012 = vpop.f32.mrb[0].mxu0
      %v2013 = vadd.f32 %v1799, %v2012
      %2014 = vdwg.mxu0
      %2015 = vmatprep.subr.bf16.mxu0 %v1911
      %2016 = vmatpush1.bf16.msra.mxu0 %v1910
      %2017 = vmatprep.subr.bf16.mxu0 %v1915
      %2018 = vmatpush1.bf16.msra.mxu0 %v1914
      %2019 = vmatprep.subr.bf16.mxu0 %v1919
      %2020 = vmatpush1.bf16.msra.mxu0 %v1918
      %2021 = vmatprep.subr.bf16.mxu0 %v1923
      %2022 = vmatpush1.bf16.msra.mxu0 %v1922
      %2023 = vmatprep.subr.bf16.mxu0 %v1927
      %2024 = vmatpush1.bf16.msra.mxu0 %v1926
      %2025 = vmatprep.subr.bf16.mxu0 %v1931
      %2026 = vmatpush1.bf16.msra.mxu0 %v1930
      %2027 = vmatprep.subr.bf16.mxu0 %v1935
      %2028 = vmatpush1.bf16.msra.mxu0 %v1934
      %2029 = vmatprep.subr.bf16.mxu0 %v1939
      %2030 = vmatpush1.bf16.msra.mxu0 %v1938
      %2031 = vmatprep.subr.bf16.mxu0 0
      %2032 = vmatpush1.bf16.msra.mxu0 0
      %2033 = vmatprep.subr.bf16.mxu0 0
      %2034 = vmatpush1.bf16.msra.mxu0 0
      %2035 = vmatprep.subr.bf16.mxu0 0
      %2036 = vmatpush1.bf16.msra.mxu0 0
      %2037 = vmatprep.subr.bf16.mxu0 0
      %2038 = vmatpush1.bf16.msra.mxu0 0
      %2039 = vmatprep.subr.bf16.mxu0 0
      %2040 = vmatpush1.bf16.msra.mxu0 0
      %2041 = vmatprep.subr.bf16.mxu0 0
      %2042 = vmatpush1.bf16.msra.mxu0 0
      %2043 = vmatprep.subr.bf16.mxu0 0
      %2044 = vmatpush1.bf16.msra.mxu0 0
      %2045 = vmatprep.subr.bf16.mxu0 0
      %2046 = vmatpush1.bf16.msra.mxu0 0
      %2047 = vmatprep.mubr.bf16.mxu0 0
      %2048 = vmatmul.mubr.bf16.gmra.mrb[0].mxu0 %v1757
      %v2049 = vpop.f32.mrb[0].mxu0
      %v2050 = vadd.f32 %v1803, %v2049
      %v2051 = vpop.f32.mrb[0].mxu0
      %v2052 = vadd.f32 %v1807, %v2051
      %v2053 = vpop.f32.mrb[0].mxu0
      %v2054 = vadd.f32 %v1803, %v2053
      %v2055 = vpop.f32.mrb[0].mxu0
      %v2056 = vadd.f32 %v1807, %v2055
      %2057 = vdwg.mxu0
      %v2058 = vmul.f32 %v2007, 0.5
      %v2059 = vmul.f32 %v2009, 0.5
      %v2060 = vmul.f32 %v2050, 0.5
      %v2061 = vmul.f32 %v2052, 0.5
      %v2062 = vmul.f32 %v2011, 0.5
      %v2063 = vmul.f32 %v2013, 0.5
      %v2064 = vmul.f32 %v2054, 0.5
      %v2065 = vmul.f32 %v2056, 0.5
      %v2066 = vmul.f32 %v2007, 0.70710677
      %v2067 = vmul.f32 %v2009, 0.70710677
      %v2068 = vmul.f32 %v2050, 0.70710677
      %v2069 = vmul.f32 %v2052, 0.70710677
      %v2070 = vmul.f32 %v2011, 0.70710677
      %v2071 = vmul.f32 %v2013, 0.70710677
      %v2072 = vmul.f32 %v2054, 0.70710677
      %v2073 = vmul.f32 %v2056, 0.70710677
      %v2074 = verf.f32.pop %v2066
      %v2075 = verf.f32.pop %v2067
      %v2076 = verf.f32.pop %v2068
      %v2077 = verf.f32.pop %v2069
      %v2078 = verf.f32.pop %v2070
      %v2079 = verf.f32.pop %v2071
      %v2080 = verf.f32.pop %v2072
      %v2081 = verf.f32.pop %v2073
      %v2082 = vadd.f32 %v2074, 1.0
      %v2083 = vadd.f32 %v2075, 1.0
      %v2084 = vadd.f32 %v2076, 1.0
      %v2085 = vadd.f32 %v2077, 1.0
      %v2086 = vadd.f32 %v2078, 1.0
      %v2087 = vadd.f32 %v2079, 1.0
      %v2088 = vadd.f32 %v2080, 1.0
      %v2089 = vadd.f32 %v2081, 1.0
      %v2090 = vmul.f32 %v2058, %v2082
      %v2091 = vmul.f32 %v2059, %v2083
      %v2092 = vmul.f32 %v2060, %v2084
      %v2093 = vmul.f32 %v2061, %v2085
      %v2094 = vmul.f32 %v2062, %v2086
      %v2095 = vmul.f32 %v2063, %v2087
      %v2096 = vmul.f32 %v2064, %v2088
      %v2097 = vmul.f32 %v2065, %v2089
      %v2098 = vpack.c.bf16 %v2094, %v2090
      %v2099 = vpack.c.bf16 %v2095, %v2091
      %v2100 = vpack.c.bf16 %v2096, %v2092
      %v2101 = vpack.c.bf16 %v2097, %v2093
      %v2102 = vld [vmem:[%s775] sm:$0xf]
      %v2103 = vld [vmem:[%s775 + $0x4] sm:$0xf]
      %v2104 = vld [vmem:[%s775 + $0x8] sm:$0xf]
      %v2105 = vld [vmem:[%s775 + $0xc] sm:$0xf]
      %v2106 = vld [vmem:[%s775 + $0x10] sm:$0xf]
      %v2107 = vld [vmem:[%s775 + $0x14] sm:$0xf]
      %v2108 = vld [vmem:[%s775 + $0x18] sm:$0xf]
      %v2109 = vld [vmem:[%s775 + $0x1c] sm:$0xf]
      %v2110 = vld [vmem:[%s775 + $0x20] sm:$0xf]
      %v2111 = vld [vmem:[%s775 + $0x24] sm:$0xf]
      %v2112 = vld [vmem:[%s775 + $0x28] sm:$0xf]
      %v2113 = vld [vmem:[%s775 + $0x2c] sm:$0xf]
      %v2114 = vld [vmem:[%s775 + $0x30] sm:$0xf]
      %v2115 = vld [vmem:[%s775 + $0x34] sm:$0xf]
      %v2116 = vld [vmem:[%s775 + $0x38] sm:$0xf]
      %v2117 = vld [vmem:[%s775 + $0x3c] sm:$0xf]
      %v2118 = vld [vmem:[%s775 + $0x40] sm:$0xf]
      %v2119 = vld [vmem:[%s775 + $0x44] sm:$0xf]
      %v2120 = vld [vmem:[%s775 + $0x48] sm:$0xf]
      %v2121 = vld [vmem:[%s775 + $0x4c] sm:$0xf]
      %v2122 = vld [vmem:[%s775 + $0x50] sm:$0xf]
      %v2123 = vld [vmem:[%s775 + $0x54] sm:$0xf]
      %v2124 = vld [vmem:[%s775 + $0x58] sm:$0xf]
      %v2125 = vld [vmem:[%s775 + $0x5c] sm:$0xf]
      %v2126 = vld [vmem:[%s775 + $0x60] sm:$0xf]
      %v2127 = vld [vmem:[%s775 + $0x64] sm:$0xf]
      %v2128 = vld [vmem:[%s775 + $0x68] sm:$0xf]
      %v2129 = vld [vmem:[%s775 + $0x6c] sm:$0xf]
      %v2130 = vld [vmem:[%s775 + $0x70] sm:$0xf]
      %v2131 = vld [vmem:[%s775 + $0x74] sm:$0xf]
      %v2132 = vld [vmem:[%s775 + $0x78] sm:$0xf]
      %v2133 = vld [vmem:[%s775 + $0x7c] sm:$0xf]
      %v2134 = vld [vmem:[%s775 + $0x80] sm:$0xf]
      %v2135 = vld [vmem:[%s775 + $0x84] sm:$0xf]
      %v2136 = vld [vmem:[%s775 + $0x88] sm:$0xf]
      %v2137 = vld [vmem:[%s775 + $0x8c] sm:$0xf]
      %v2138 = vld [vmem:[%s775 + $0x90] sm:$0xf]
      %v2139 = vld [vmem:[%s775 + $0x94] sm:$0xf]
      %v2140 = vld [vmem:[%s775 + $0x98] sm:$0xf]
      %v2141 = vld [vmem:[%s775 + $0x9c] sm:$0xf]
      %v2142 = vld [vmem:[%s775 + $0xa0] sm:$0xf]
      %v2143 = vld [vmem:[%s775 + $0xa4] sm:$0xf]
      %v2144 = vld [vmem:[%s775 + $0xa8] sm:$0xf]
      %v2145 = vld [vmem:[%s775 + $0xac] sm:$0xf]
      %v2146 = vld [vmem:[%s775 + $0xb0] sm:$0xf]
      %v2147 = vld [vmem:[%s775 + $0xb4] sm:$0xf]
      %v2148 = vld [vmem:[%s775 + $0xb8] sm:$0xf]
      %v2149 = vld [vmem:[%s775 + $0xbc] sm:$0xf]
      %v2150 = vld [vmem:[%s775 + $0xc0] sm:$0xf]
      %v2151 = vld [vmem:[%s775 + $0xc4] sm:$0xf]
      %v2152 = vld [vmem:[%s775 + $0xc8] sm:$0xf]
      %v2153 = vld [vmem:[%s775 + $0xcc] sm:$0xf]
      %v2154 = vld [vmem:[%s775 + $0xd0] sm:$0xf]
      %v2155 = vld [vmem:[%s775 + $0xd4] sm:$0xf]
      %v2156 = vld [vmem:[%s775 + $0xd8] sm:$0xf]
      %v2157 = vld [vmem:[%s775 + $0xdc] sm:$0xf]
      %v2158 = vld [vmem:[%s775 + $0xe0] sm:$0xf]
      %v2159 = vld [vmem:[%s775 + $0xe4] sm:$0xf]
      %v2160 = vld [vmem:[%s775 + $0xe8] sm:$0xf]
      %v2161 = vld [vmem:[%s775 + $0xec] sm:$0xf]
      %v2162 = vld [vmem:[%s775 + $0xf0] sm:$0xf]
      %v2163 = vld [vmem:[%s775 + $0xf4] sm:$0xf]
      %v2164 = vld [vmem:[%s775 + $0xf8] sm:$0xf]
      %v2165 = vld [vmem:[%s775 + $0xfc] sm:$0xf]
      %v2166 = vld [vmem:[%s778] sm:$0x1]
      %v2168 = vlaneseq
      %v2169 = vshrl.u32 %v2168, 7
      %v2170 = vsub.s32 0, %v2169
      %v2171 = vrot.slane %v2166, %v2170
      %v2237 = vunpack.c.l.b16 %v2102
      %v2238 = vunpack.c.l.b16 %v2103
      %v2239 = vunpack.c.l.b16 %v2104
      %v2240 = vunpack.c.l.b16 %v2105
      %v2241 = vunpack.c.l.b16 %v2106
      %v2242 = vunpack.c.l.b16 %v2107
      %v2243 = vunpack.c.l.b16 %v2108
      %v2244 = vunpack.c.l.b16 %v2109
      %v2245 = vunpack.c.l.b16 %v2110
      %v2246 = vunpack.c.l.b16 %v2111
      %v2247 = vunpack.c.l.b16 %v2112
      %v2248 = vunpack.c.l.b16 %v2113
      %v2249 = vunpack.c.l.b16 %v2114
      %v2250 = vunpack.c.l.b16 %v2115
      %v2251 = vunpack.c.l.b16 %v2116
      %v2252 = vunpack.c.l.b16 %v2117
      %v2253 = vunpack.c.l.b16 %v2118
      %v2254 = vunpack.c.l.b16 %v2119
      %v2255 = vunpack.c.l.b16 %v2120
      %v2256 = vunpack.c.l.b16 %v2121
      %v2257 = vunpack.c.l.b16 %v2122
      %v2258 = vunpack.c.l.b16 %v2123
      %v2259 = vunpack.c.l.b16 %v2124
      %v2260 = vunpack.c.l.b16 %v2125
      %v2261 = vunpack.c.l.b16 %v2126
      %v2262 = vunpack.c.l.b16 %v2127
      %v2263 = vunpack.c.l.b16 %v2128
      %v2264 = vunpack.c.l.b16 %v2129
      %v2265 = vunpack.c.l.b16 %v2130
      %v2266 = vunpack.c.l.b16 %v2131
      %v2267 = vunpack.c.l.b16 %v2132
      %v2268 = vunpack.c.l.b16 %v2133
      %v2269 = vunpack.c.l.b16 %v2134
      %v2270 = vunpack.c.l.b16 %v2135
      %v2271 = vunpack.c.l.b16 %v2136
      %v2272 = vunpack.c.l.b16 %v2137
      %v2273 = vunpack.c.l.b16 %v2138
      %v2274 = vunpack.c.l.b16 %v2139
      %v2275 = vunpack.c.l.b16 %v2140
      %v2276 = vunpack.c.l.b16 %v2141
      %v2277 = vunpack.c.l.b16 %v2142
      %v2278 = vunpack.c.l.b16 %v2143
      %v2279 = vunpack.c.l.b16 %v2144
      %v2280 = vunpack.c.l.b16 %v2145
      %v2281 = vunpack.c.l.b16 %v2146
      %v2282 = vunpack.c.l.b16 %v2147
      %v2283 = vunpack.c.l.b16 %v2148
      %v2284 = vunpack.c.l.b16 %v2149
      %v2285 = vunpack.c.l.b16 %v2150
      %v2286 = vunpack.c.l.b16 %v2151
      %v2287 = vunpack.c.l.b16 %v2152
      %v2288 = vunpack.c.l.b16 %v2153
      %v2289 = vunpack.c.l.b16 %v2154
      %v2290 = vunpack.c.l.b16 %v2155
      %v2291 = vunpack.c.l.b16 %v2156
      %v2292 = vunpack.c.l.b16 %v2157
      %v2293 = vunpack.c.l.b16 %v2158
      %v2294 = vunpack.c.l.b16 %v2159
      %v2295 = vunpack.c.l.b16 %v2160
      %v2296 = vunpack.c.l.b16 %v2161
      %v2297 = vunpack.c.l.b16 %v2162
      %v2298 = vunpack.c.l.b16 %v2163
      %v2299 = vunpack.c.l.b16 %v2164
      %v2300 = vunpack.c.l.b16 %v2165
      %v2301 = vpack.c.b16 %v2238, %v2237
      %v2302 = vpack.c.b16 %v2240, %v2239
      %v2303 = vpack.c.b16 %v2242, %v2241
      %v2304 = vpack.c.b16 %v2244, %v2243
      %v2305 = vpack.c.b16 %v2246, %v2245
      %v2306 = vpack.c.b16 %v2248, %v2247
      %v2307 = vpack.c.b16 %v2250, %v2249
      %v2308 = vpack.c.b16 %v2252, %v2251
      %v2309 = vpack.c.b16 %v2254, %v2253
      %v2310 = vpack.c.b16 %v2256, %v2255
      %v2311 = vpack.c.b16 %v2258, %v2257
      %v2312 = vpack.c.b16 %v2260, %v2259
      %v2313 = vpack.c.b16 %v2262, %v2261
      %v2314 = vpack.c.b16 %v2264, %v2263
      %v2315 = vpack.c.b16 %v2266, %v2265
      %v2316 = vpack.c.b16 %v2268, %v2267
      %v2317 = vpack.c.b16 %v2270, %v2269
      %v2318 = vpack.c.b16 %v2272, %v2271
      %v2319 = vpack.c.b16 %v2274, %v2273
      %v2320 = vpack.c.b16 %v2276, %v2275
      %v2321 = vpack.c.b16 %v2278, %v2277
      %v2322 = vpack.c.b16 %v2280, %v2279
      %v2323 = vpack.c.b16 %v2282, %v2281
      %v2324 = vpack.c.b16 %v2284, %v2283
      %v2325 = vpack.c.b16 %v2286, %v2285
      %v2326 = vpack.c.b16 %v2288, %v2287
      %v2327 = vpack.c.b16 %v2290, %v2289
      %v2328 = vpack.c.b16 %v2292, %v2291
      %v2329 = vpack.c.b16 %v2294, %v2293
      %v2330 = vpack.c.b16 %v2296, %v2295
      %v2331 = vpack.c.b16 %v2298, %v2297
      %v2332 = vpack.c.b16 %v2300, %v2299
      %2365 = vmatprep.subr.bf16.mxu0 0
      %2366 = vmatpush1.bf16.msra.mxu0 %v2301
      %2367 = vmatprep.subr.bf16.mxu0 0
      %2368 = vmatpush1.bf16.msra.mxu0 %v2302
      %2369 = vmatprep.subr.bf16.mxu0 0
      %2370 = vmatpush1.bf16.msra.mxu0 %v2303
      %2371 = vmatprep.subr.bf16.mxu0 0
      %2372 = vmatpush1.bf16.msra.mxu0 %v2304
      %2373 = vmatprep.subr.bf16.mxu0 0
      %2374 = vmatpush1.bf16.msra.mxu0 %v2305
      %2375 = vmatprep.subr.bf16.mxu0 0
      %2376 = vmatpush1.bf16.msra.mxu0 %v2306
      %2377 = vmatprep.subr.bf16.mxu0 0
      %2378 = vmatpush1.bf16.msra.mxu0 %v2307
      %2379 = vmatprep.subr.bf16.mxu0 0
      %2380 = vmatpush1.bf16.msra.mxu0 %v2308
      %2381 = vmatprep.subr.bf16.mxu0 0
      %2382 = vmatpush1.bf16.msra.mxu0 %v2309
      %2383 = vmatprep.subr.bf16.mxu0 0
      %2384 = vmatpush1.bf16.msra.mxu0 %v2310
      %2385 = vmatprep.subr.bf16.mxu0 0
      %2386 = vmatpush1.bf16.msra.mxu0 %v2311
      %2387 = vmatprep.subr.bf16.mxu0 0
      %2388 = vmatpush1.bf16.msra.mxu0 %v2312
      %2389 = vmatprep.subr.bf16.mxu0 0
      %2390 = vmatpush1.bf16.msra.mxu0 %v2313
      %2391 = vmatprep.subr.bf16.mxu0 0
      %2392 = vmatpush1.bf16.msra.mxu0 %v2314
      %2393 = vmatprep.subr.bf16.mxu0 0
      %2394 = vmatpush1.bf16.msra.mxu0 %v2315
      %2395 = vmatprep.subr.bf16.mxu0 0
      %2396 = vmatpush1.bf16.msra.mxu0 %v2316
      %2397 = vmatprep.mubr.bf16.mxu0 %v2099
      %2398 = vmatmul.mubr.bf16.gmra.mrb[0].mxu0 %v2098
      %v2399 = vpop.f32.mrb[0].mxu0
      %v2400 = vadd.f32 %v2171, %v2399
      %v2401 = vpop.f32.mrb[0].mxu0
      %v2402 = vpop.f32.mrb[0].mxu0
      %v2403 = vadd.f32 %v2171, %v2402
      %v2404 = vpop.f32.mrb[0].mxu0
      %2405 = vdwg.mxu0
      %2406 = vmatprep.subr.bf16.mxu0 0
      %2407 = vmatpush1.bf16.msra.mxu0 %v2317
      %2408 = vmatprep.subr.bf16.mxu0 0
      %2409 = vmatpush1.bf16.msra.mxu0 %v2318
      %2410 = vmatprep.subr.bf16.mxu0 0
      %2411 = vmatpush1.bf16.msra.mxu0 %v2319
      %2412 = vmatprep.subr.bf16.mxu0 0
      %2413 = vmatpush1.bf16.msra.mxu0 %v2320
      %2414 = vmatprep.subr.bf16.mxu0 0
      %2415 = vmatpush1.bf16.msra.mxu0 %v2321
      %2416 = vmatprep.subr.bf16.mxu0 0
      %2417 = vmatpush1.bf16.msra.mxu0 %v2322
      %2418 = vmatprep.subr.bf16.mxu0 0
      %2419 = vmatpush1.bf16.msra.mxu0 %v2323
      %2420 = vmatprep.subr.bf16.mxu0 0
      %2421 = vmatpush1.bf16.msra.mxu0 %v2324
      %2422 = vmatprep.subr.bf16.mxu0 0
      %2423 = vmatpush1.bf16.msra.mxu0 %v2325
      %2424 = vmatprep.subr.bf16.mxu0 0
      %2425 = vmatpush1.bf16.msra.mxu0 %v2326
      %2426 = vmatprep.subr.bf16.mxu0 0
      %2427 = vmatpush1.bf16.msra.mxu0 %v2327
      %2428 = vmatprep.subr.bf16.mxu0 0
      %2429 = vmatpush1.bf16.msra.mxu0 %v2328
      %2430 = vmatprep.subr.bf16.mxu0 0
      %2431 = vmatpush1.bf16.msra.mxu0 %v2329
      %2432 = vmatprep.subr.bf16.mxu0 0
      %2433 = vmatpush1.bf16.msra.mxu0 %v2330
      %2434 = vmatprep.subr.bf16.mxu0 0
      %2435 = vmatpush1.bf16.msra.mxu0 %v2331
      %2436 = vmatprep.subr.bf16.mxu0 0
      %2437 = vmatpush1.bf16.msra.mxu0 %v2332
      %2438 = vmatprep.mubr.bf16.mxu0 %v2101
      %2439 = vmatmul.mubr.bf16.gmra.mrb[0].mxu0 %v2100
      %v2440 = vpop.f32.mrb[0].mxu0
      %v2441 = vadd.f32 %v2400, %v2440
      %v2442 = vpop.f32.mrb[0].mxu0
      %v2443 = vpop.f32.mrb[0].mxu0
      %v2444 = vadd.f32 %v2403, %v2443
      %v2445 = vpop.f32.mrb[0].mxu0
      %2446 = vdwg.mxu0
      %v2447 = vld [vmem:[%s781] sm:$0x1]
      %v2449 = vlaneseq
      %v2450 = vshrl.u32 %v2449, 7
      %v2451 = vsub.s32 0, %v2450
      %v2452 = vrot.slane %v2447, %v2451
      %v2454 = vmul.f32 %v2441, %v2452
      %v2455 = vmul.f32 %v2444, %v2452
      %v2456 = vadd.f32 %v1715, %v2454
      %v2457 = vadd.f32 %v1716, %v2455
      %2458 = vst [vmem:[#allocation2] sm:$0xff] %v2456
      %2459 = vst [vmem:[#allocation2 + $0x8] sm:$0xff] %v2457
      %p2460 = scmp.eq.s32.totalorder %s33, 1
      // Predicated region
      $region93: #{_lambda_.3} parent=87 // pred_check
        %p2461 = pneg %p2460
      $region94: #{_lambda_.3} parent=87 // pred_check_branch
        %2463 = sbr.rel (%p2461) target = $region96
      $region95: #{_lambda_.3} parent=87 // pred_region
        %v2464 = vld [vmem:[%s15] sm:$0x1]
        %v2465 = vld [vmem:[%s16] sm:$0x1]
        %2466 = vadd.xlane.f32.xlu0 %v2456
        %v2467 = vpop.xlane.xlu0 %2466
        %2468 = vadd.xlane.f32.xlu0 %v2457
        %v2469 = vpop.xlane.xlu0 %2468
        %v2470 = vmul.f32 %v2467, %v804
        %v2471 = vmul.f32 %v2469, %v804
        %v2472 = vsub.f32 %v2456, %v2470
        %v2473 = vsub.f32 %v2457, %v2471
        %v2474 = vmul.f32 %v2472, %v2472
        %v2475 = vmul.f32 %v2473, %v2473
        %2476 = vadd.xlane.f32.xlu0 %v2474
        %v2477 = vpop.xlane.xlu0 %2476
        %2478 = vadd.xlane.f32.xlu0 %v2475
        %v2479 = vpop.xlane.xlu0 %2478
        %v2480 = vmul.f32 %v2477, %v804
        %v2481 = vmul.f32 %v2479, %v804
        %v2482 = vadd.f32 %v2480, 1e-06
        %v2483 = vadd.f32 %v2481, 1e-06
        %v2484 = vrsqrt.pop %v2482
        %v2485 = vrsqrt.pop %v2483
        %v2486 = vmul.f32 %v2472, %v2484
        %v2487 = vmul.f32 %v2473, %v2485
        %v2489 = vlaneseq
        %v2490 = vshrl.u32 %v2489, 7
        %v2491 = vsub.s32 0, %v2490
        %v2492 = vrot.slane %v2464, %v2491
        %v2494 = vmul.f32 %v2486, %v2492
        %v2495 = vmul.f32 %v2487, %v2492
        %v2497 = vlaneseq
        %v2498 = vshrl.u32 %v2497, 7
        %v2499 = vsub.s32 0, %v2498
        %v2500 = vrot.slane %v2465, %v2499
        %v2502 = vadd.f32 %v2494, %v2500
        %v2503 = vadd.f32 %v2495, %v2500
        %2504 = vst [vmem:[%s786] sm:$0xff] %v2502
        %2505 = vst [vmem:[%s786 + $0x8] sm:$0xff] %v2503
      $region96: #{_lambda_.3} parent=87 // pred_fallthru
        _
      %p2506 = scmp.lt.s32.totalorder %s32, 1
      %s2507 = scalar_select %p2506, %s32, 1
      %s2508 = smul.addr %s2507, 2
      %s2509 = smul.addr %s2508, 8
      %s2510 = scalar_lea.vmem %s17, %s2509
      // Predicated region
      $region97: #{_lambda_.3} parent=87 // pred_check
        %p2511 = pneg %p490
      $region98: #{_lambda_.3} parent=87 // pred_check_branch
        %2513 = sbr.rel (%p2511) target = $region100
      $region99: #{_lambda_.3} parent=87 // pred_region
        _
      $region100: #{_lambda_.3} parent=87 // pred_fallthru
        _
    $region88: #{_lambda_.3} parent=5 // pred_fallthru
      _
    %p2514 = scmp.le.s32.totalorder 2, %s23
    // Predicated region
    $region101: #{_lambda_.3} parent=5 // pred_check
      %p2515 = pneg %p2514
    $region102: #{_lambda_.3} parent=5 // pred_check_branch
      %2517 = sbr.rel (%p2515) target = $region104
    $region103: #{_lambda_.3} parent=5 // pred_region
      %s2518 = ssub.s32 %s23, 2
      // Predicated region
      $region105: #{_lambda_.3} parent=103 // pred_check
        %p2519 = pneg %p496
      $region106: #{_lambda_.3} parent=103 // pred_check_branch
        %2521 = sbr.rel (%p2519) target = $region108
      $region107: #{_lambda_.3} parent=103 // pred_region
        %p2522 = scmp.lt.s32.totalorder %s34, 1
        %s2523 = scalar_select %p2522, %s34, 1
        %s2524 = smul.addr %s2523, 2
        %s2525 = smul.addr %s2524, 8
        %s2526 = scalar_lea.vmem %s17, %s2525
      $region108: #{_lambda_.3} parent=103 // pred_fallthru
        _
    $region104: #{_lambda_.3} parent=5 // pred_fallthru
      _
  $region6: #{_lambda_.3} parent=0 // loop_footer
    %s27 = sadd.s32 1, %s23
  $region7: #{_lambda_.3} parent=0 // loop_footer_branch
    %22 = sbr.rel target = $region3
  $region8: #{_lambda_.3} parent=0 // loop_exit
    _

</llo_original>
